<compile_context>
chip_gen: v7x
topology: tpu7x:2x2x1
jax: 0.10.0
libtpu: 0.0.40
codegen_flags: <defaults>
</compile_context>

<pallas_src>
import jax
import jax.numpy as jnp
from jax.experimental import pallas as pl
from jax.experimental.pallas import tpu as pltpu


def _round_up(n, m):
    return -(-n // m) * m


def _tnetwork_kernel(sym_ref, len_ref, tab_ref, whh_ref, wout_ref, bout_ref,
                     probs_ref, h_ref):
    """RNN recurrence over symbol ids + dense head, column-major layout.

    Shapes (per batch tile TB, hidden padded to H_PAD=128):
      sym_ref : (L, TB)        int32 time-major symbol ids (0 == padding)
      len_ref : (1, TB)        int32 effective lengths
      tab_ref : (H_PAD, F_PAD) f32 input-projection table; col s = W_ih[:, s-1] + b_ih + b_hh
      whh_ref : (H_PAD, H_PAD) bf16 recurrent weights (column form: h_new = W_hh @ h)
      wout_ref: (O, H_PAD)     f32 output weights (column form)
      bout_ref: (O, 1)         f32
      probs_ref: (O, TB)       f32 softmax outputs (lane-dense)
      h_ref   : (H_PAD, TB)    f32 final hidden state (lane-dense)
    """
    L, TB = sym_ref.shape
    H_PAD = whh_ref.shape[0]
    F_PAD = tab_ref.shape[1]

    lens = len_ref[...]                                      # (1, TB), one vreg live

    def step(t, h):
        # Per-step symbol row, already lane-oriented (no relayout).
        sym = sym_ref[pl.ds(t, 1), :]                        # (1, TB) int32
        # Rebuild the one-hot and select the table column (bias folded in).
        oh = (jax.lax.broadcasted_iota(jnp.int32, (F_PAD, TB), 0) == sym
              ).astype(jnp.float32)                          # (F_PAD, TB)
        xp = jnp.dot(tab_ref[...], oh,
                     preferred_element_type=jnp.float32)     # (H_PAD, TB)
        # Recurrent matmul: bf16 operands, f32 accumulate (native MXU path).
        rec = jnp.dot(whh_ref[...], h.astype(jnp.bfloat16),
                      preferred_element_type=jnp.float32)    # (H_PAD, TB)
        new_h = jnp.tanh(xp + rec)
        # Freeze rows past their effective length; mask is a single (1, TB) vreg.
        return jnp.where(lens > t, new_h, h)

    h0 = jnp.zeros((H_PAD, TB), jnp.float32)
    h = jax.lax.fori_loop(0, L, step, h0, unroll=min(8, L))

    # Dense head: Linear + Softmax over the output axis (sublanes here).
    logits = jnp.dot(wout_ref[...], h,
                     preferred_element_type=jnp.float32) + bout_ref[...]   # (O, TB)
    m = jnp.max(logits, axis=0, keepdims=True)
    e = jnp.exp(logits - m)
    probs = e * pl.reciprocal(jnp.sum(e, axis=0, keepdims=True), approx=False)

    probs_ref[...] = probs
    h_ref[...] = h


def tnetwork_forward(x, params):
    """Pallas wrapper. x: (B, L, input_size) one-hot float (batch_first).

    Returns (probs, hidden) mirroring TNetwork.forward_bin:
      probs : (B, n_outputs) softmax outputs
      hidden: list with one array shaped (1, B, hidden) (single RNN layer).
    """
    B, L, F = x.shape
    H = params["w_hh"].shape[0]                   # 32
    O = params["w_out"].shape[0]
    H_PAD = _round_up(H, 128)
    F_PAD = _round_up(F, 8)

    # --- wrapper-side input compaction (plain XLA glue) ---
    # TODO(synk): this assumes one-hot inputs (as produced by one_hot_encode/pad);
    #             arbitrary dense float inputs would need the dense x @ W_ih path.
    syms = jnp.argmax(x, axis=-1).astype(jnp.int32)          # (B, L); ties-to-first
    t_idx = jnp.arange(L, dtype=jnp.int32)[None, :]
    lengths = jnp.min(jnp.where(syms == 0, t_idx, jnp.int32(L)), axis=1)   # (B,)

    # --- weight prep ---
    # Table column s (s >= 1) = W_ih[:, s-1] + (b_ih + b_hh); column 0 / padded
    # rows & cols are 0 (padded timesteps are masked, padded hidden stays 0).
    bias = (params["b_ih"] + params["b_hh"]).astype(jnp.float32)
    tab = jnp.zeros((H_PAD, F_PAD), jnp.float32)
    tab = tab.at[:H, 1:F].set(params["w_ih"].astype(jnp.float32) + bias[:, None])
    whh = (jnp.zeros((H_PAD, H_PAD), jnp.float32)
           .at[:H, :H].set(params["w_hh"].astype(jnp.float32))
           .astype(jnp.bfloat16))                                          # column form
    wout = jnp.zeros((O, H_PAD), jnp.float32).at[:, :H].set(
        params["w_out"].astype(jnp.float32))
    bout = params["b_out"].reshape(O, 1).astype(jnp.float32)

    # --- batch tiling: >= 2 grid steps for large B (v7x dual-TC), TB mult of 128 ---
    if B >= 512:
        TB = 256
    elif B >= 256:
        TB = 128
    else:
        TB = B                                    # single tile (block == full dims)
    num_tiles = -(-B // TB)
    B_pad = num_tiles * TB

    sym_tm = syms.T                               # (L, B) time-major
    if B_pad != B:
        sym_tm = jnp.pad(sym_tm, ((0, 0), (0, B_pad - B)))   # pad symbol 0
        lengths = jnp.pad(lengths, (0, B_pad - B))            # -> length 0
    len_row = lengths.reshape(1, B_pad).astype(jnp.int32)

    # --- VMEM budget (tiny now; cap at 48 MiB for v7x headroom) ---
    ln = lambda n: _round_up(n, 128)
    sb = lambda n: _round_up(n, 8)
    est = (2 * sb(L) * ln(TB) * 4                 # symbols (double-buffered)
           + 2 * 8 * ln(TB) * 4                   # lengths
           + 2 * H_PAD * ln(F_PAD) * 4            # table
           + 2 * H_PAD * H_PAD * 2                # W_hh (bf16)
           + 2 * sb(O) * H_PAD * 4                # W_out
           + 2 * sb(O) * 128 * 4                  # b_out
           + 2 * (sb(O) + H_PAD) * ln(TB) * 4)    # outputs
    vmem_limit = int(min(max(2 * est + (4 << 20), 16 << 20), 48 << 20))

    probs_col, h_col = pl.pallas_call(
        _tnetwork_kernel,
        out_shape=(
            jax.ShapeDtypeStruct((O, B_pad), jnp.float32),
            jax.ShapeDtypeStruct((H_PAD, B_pad), jnp.float32),
        ),
        grid=(num_tiles,),
        in_specs=[
            pl.BlockSpec((L, TB), lambda i: (0, i)),          # symbols (time-major)
            pl.BlockSpec((1, TB), lambda i: (0, i)),          # lengths
            pl.BlockSpec((H_PAD, F_PAD), lambda i: (0, 0)),   # projection table
            pl.BlockSpec((H_PAD, H_PAD), lambda i: (0, 0)),   # W_hh (bf16)
            pl.BlockSpec((O, H_PAD), lambda i: (0, 0)),       # W_out
            pl.BlockSpec((O, 1), lambda i: (0, 0)),           # b_out
        ],
        out_specs=(
            pl.BlockSpec((O, TB), lambda i: (0, i)),          # probs (lane-dense)
            pl.BlockSpec((H_PAD, TB), lambda i: (0, i)),      # final hidden (lane-dense)
        ),
        compiler_params=pltpu.CompilerParams(
            dimension_semantics=("parallel",),
            vmem_limit_bytes=vmem_limit),
    )(sym_tm, len_row, tab, whh, wout, bout)

    probs = probs_col[:, :B].T                    # (B, O)
    h_final = h_col[:H, :B].T                     # (B, H)
    hidden = [h_final[None, :, :]]                # (num_directions=1, B, H)
    return probs, hidden


def init_params(key, input_size, n_outputs, hidden=32):
    """Deterministic parameter init (PyTorch-style U(-1/sqrt(H), 1/sqrt(H)))."""
    k = jax.random.split(key, 6)
    s = 1.0 / jnp.sqrt(hidden)
    return {
        "w_ih": jax.random.uniform(k[0], (hidden, input_size - 1), jnp.float32, -s, s),
        "w_hh": jax.random.uniform(k[1], (hidden, hidden), jnp.float32, -s, s),
        "b_ih": jax.random.uniform(k[2], (hidden,), jnp.float32, -s, s),
        "b_hh": jax.random.uniform(k[3], (hidden,), jnp.float32, -s, s),
        "w_out": jax.random.uniform(k[4], (n_outputs, hidden), jnp.float32, -s, s),
        "b_out": jax.random.uniform(k[5], (n_outputs,), jnp.float32, -s, s),
    }


def reference_forward(x, params):
    """Pure-JAX f32 reference of forward_bin for correctness checking."""
    B, L, F = x.shape
    H = params["w_hh"].shape[0]
    pad_mask = x[..., 0] >= jnp.max(x, axis=-1)
    t_idx = jnp.arange(L)[None, :]
    lengths = jnp.min(jnp.where(pad_mask, t_idx, L), axis=1)

    def step(h, t):
        x_t = x[:, t, 1:]
        new_h = jnp.tanh(x_t @ params["w_ih"].T + params["b_ih"]
                         + h @ params["w_hh"].T + params["b_hh"])
        h = jnp.where((t < lengths)[:, None], new_h, h)
        return h, None

    h, _ = jax.lax.scan(step, jnp.zeros((B, H), jnp.float32), jnp.arange(L))
    logits = h @ params["w_out"].T + params["b_out"]
    return jax.nn.softmax(logits, axis=-1), h


if __name__ == "__main__":
    # Small shapes: batch=2, seq=8, input_size=5 (symbol 0 = padding), hidden=32.
    B, L, INPUT_SIZE, N_OUTPUTS, HIDDEN = 2, 8, 5, 2, 32

    key = jax.random.PRNGKey(0)
    k_sym, k_par = jax.random.split(key)

    # One-hot input: random symbols in [1, INPUT_SIZE-1]; pad tail of sequence 0.
    syms = jax.random.randint(k_sym, (B, L), 1, INPUT_SIZE)
    lengths = jnp.array([5, L], dtype=jnp.int32)
    t_idx = jnp.arange(L)[None, :]
    syms = jnp.where(t_idx < lengths[:, None], syms, 0)      # symbol 0 == pad
    x = jax.nn.one_hot(syms, INPUT_SIZE, dtype=jnp.float32)  # (B, L, F)

    params = init_params(k_par, INPUT_SIZE, N_OUTPUTS, HIDDEN)

    probs, hidden = tnetwork_forward(x, params)
    probs = jax.block_until_ready(probs)
    hidden = jax.block_until_ready(hidden)

    ref_probs, ref_h = reference_forward(x, params)
    assert probs.shape == (B, N_OUTPUTS)
    assert hidden[0].shape == (1, B, HIDDEN)
    # Tolerance relaxed vs. the f32 reference: the recurrent matmul runs with
    # bf16 operands on the MXU (f32 accumulation).
    assert jnp.allclose(probs, ref_probs, atol=2e-2, rtol=2e-2)
    assert jnp.allclose(hidden[0][0], ref_h, atol=2e-2, rtol=2e-2)

    print("KERNEL_OK")
</pallas_src>

<mosaic_0001>
module attributes {stable_mosaic.version = 11 : i64} {
  func.func @_tnetwork_kernel(%arg0: i32, %arg1: memref<8x2xi32, #tpu.memory_space<vmem>>, %arg2: memref<1x2xi32, #tpu.memory_space<vmem>>, %arg3: memref<128x8xf32, #tpu.memory_space<vmem>>, %arg4: memref<128x128xbf16, #tpu.memory_space<vmem>>, %arg5: memref<2x128xf32, #tpu.memory_space<vmem>>, %arg6: memref<2x1xf32, #tpu.memory_space<vmem>>, %arg7: memref<2x2xf32, #tpu.memory_space<vmem>>, %arg8: memref<128x2xf32, #tpu.memory_space<vmem>>) attributes {dimension_semantics = [#tpu.dimension_semantics<parallel>], iteration_bounds = array<i64: 1>, scalar_prefetch = 0 : i64, scratch_operands = 0 : i64, tpu.core_type = #tpu.core_type<tc>, window_params = [{transform_indices = @transform_0, window_bounds = array<i64: 8, 2>}, {transform_indices = @transform_1, window_bounds = array<i64: 1, 2>}, {pipeline_mode = #tpu.pipeline_mode<synchronous>, transform_indices = @transform_2, window_bounds = array<i64: 128, 8>}, {pipeline_mode = #tpu.pipeline_mode<synchronous>, transform_indices = @transform_3, window_bounds = array<i64: 128, 128>}, {pipeline_mode = #tpu.pipeline_mode<synchronous>, transform_indices = @transform_4, window_bounds = array<i64: 2, 128>}, {pipeline_mode = #tpu.pipeline_mode<synchronous>, transform_indices = @transform_5, window_bounds = array<i64: 2, 1>}, {transform_indices = @transform_6, window_bounds = array<i64: 2, 2>}, {transform_indices = @transform_7, window_bounds = array<i64: 128, 2>}]} {
    %c0 = arith.constant 0 : index
    %c0_0 = arith.constant 0 : index
    %0 = vector.load %arg2[%c0, %c0_0] : memref<1x2xi32, #tpu.memory_space<vmem>>, vector<1x2xi32>
    %cst = arith.constant 0.000000e+00 : f32
    %1 = vector.broadcast %cst : f32 to vector<128x2xf32>
    %c0_i32 = arith.constant 0 : i32
    %2 = arith.index_cast %c0_i32 : i32 to index
    %c0_1 = arith.constant 0 : index
    %3 = vector.load %arg1[%2, %c0_1] : memref<8x2xi32, #tpu.memory_space<vmem>>, vector<1x2xi32>
    %4 = tpu.iota {dimensions = array<i32: 0>} : vector<8x2xi32>
    %5 = vector.broadcast %3 : vector<1x2xi32> to vector<8x2xi32>
    %6 = arith.cmpi eq, %4, %5 : vector<8x2xi32>
    %7 = arith.extui %6 : vector<8x2xi1> to vector<8x2xi32>
    %8 = arith.sitofp %7 : vector<8x2xi32> to vector<8x2xf32>
    %c0_2 = arith.constant 0 : index
    %c0_3 = arith.constant 0 : index
    %9 = vector.load %arg3[%c0_2, %c0_3] : memref<128x8xf32, #tpu.memory_space<vmem>>, vector<128x8xf32>
    %cst_4 = arith.constant dense<0.000000e+00> : vector<128x2xf32>
    %10 = tpu.matmul %9, %8, %cst_4 {dimension_numbers = #tpu.dot_dimension_numbers<[1], [0], [0], [1], [0, 0, 1, 1], [], []>} : vector<128x8xf32>, vector<8x2xf32>, vector<128x2xf32> -> vector<128x2xf32>
    %c0_5 = arith.constant 0 : index
    %c0_6 = arith.constant 0 : index
    %11 = vector.load %arg4[%c0_5, %c0_6] : memref<128x128xbf16, #tpu.memory_space<vmem>>, vector<128x128xbf16>
    %12 = arith.truncf %1 : vector<128x2xf32> to vector<128x2xbf16>
    %cst_7 = arith.constant dense<0.000000e+00> : vector<128x2xf32>
    %13 = tpu.matmul %11, %12, %cst_7 {dimension_numbers = #tpu.dot_dimension_numbers<[1], [0], [0], [1], [0, 0, 1, 1], [], []>} : vector<128x128xbf16>, vector<128x2xbf16>, vector<128x2xf32> -> vector<128x2xf32>
    %14 = arith.addf %10, %13 : vector<128x2xf32>
    %15 = math.tanh %14 : vector<128x2xf32>
    %16 = vector.broadcast %c0_i32 : i32 to vector<1x2xi32>
    %17 = arith.cmpi sgt, %0, %16 : vector<1x2xi32>
    %18 = vector.shape_cast %17 : vector<1x2xi1> to vector<1x2xi1>
    %19 = vector.broadcast %18 : vector<1x2xi1> to vector<128x2xi1>
    %20 = arith.select %19, %15, %1 : vector<128x2xi1>, vector<128x2xf32>
    %c1_i32 = arith.constant 1 : i32
    %21 = arith.index_cast %c1_i32 : i32 to index
    %c0_8 = arith.constant 0 : index
    %22 = vector.load %arg1[%21, %c0_8] : memref<8x2xi32, #tpu.memory_space<vmem>>, vector<1x2xi32>
    %23 = tpu.iota {dimensions = array<i32: 0>} : vector<8x2xi32>
    %24 = vector.broadcast %22 : vector<1x2xi32> to vector<8x2xi32>
    %25 = arith.cmpi eq, %23, %24 : vector<8x2xi32>
    %26 = arith.extui %25 : vector<8x2xi1> to vector<8x2xi32>
    %27 = arith.sitofp %26 : vector<8x2xi32> to vector<8x2xf32>
    %c0_9 = arith.constant 0 : index
    %c0_10 = arith.constant 0 : index
    %28 = vector.load %arg3[%c0_9, %c0_10] : memref<128x8xf32, #tpu.memory_space<vmem>>, vector<128x8xf32>
    %cst_11 = arith.constant dense<0.000000e+00> : vector<128x2xf32>
    %29 = tpu.matmul %28, %27, %cst_11 {dimension_numbers = #tpu.dot_dimension_numbers<[1], [0], [0], [1], [0, 0, 1, 1], [], []>} : vector<128x8xf32>, vector<8x2xf32>, vector<128x2xf32> -> vector<128x2xf32>
    %c0_12 = arith.constant 0 : index
    %c0_13 = arith.constant 0 : index
    %30 = vector.load %arg4[%c0_12, %c0_13] : memref<128x128xbf16, #tpu.memory_space<vmem>>, vector<128x128xbf16>
    %31 = arith.truncf %20 : vector<128x2xf32> to vector<128x2xbf16>
    %cst_14 = arith.constant dense<0.000000e+00> : vector<128x2xf32>
    %32 = tpu.matmul %30, %31, %cst_14 {dimension_numbers = #tpu.dot_dimension_numbers<[1], [0], [0], [1], [0, 0, 1, 1], [], []>} : vector<128x128xbf16>, vector<128x2xbf16>, vector<128x2xf32> -> vector<128x2xf32>
    %33 = arith.addf %29, %32 : vector<128x2xf32>
    %34 = math.tanh %33 : vector<128x2xf32>
    %35 = vector.broadcast %c1_i32 : i32 to vector<1x2xi32>
    %36 = arith.cmpi sgt, %0, %35 : vector<1x2xi32>
    %37 = vector.shape_cast %36 : vector<1x2xi1> to vector<1x2xi1>
    %38 = vector.broadcast %37 : vector<1x2xi1> to vector<128x2xi1>
    %39 = arith.select %38, %34, %20 : vector<128x2xi1>, vector<128x2xf32>
    %c2_i32 = arith.constant 2 : i32
    %40 = arith.index_cast %c2_i32 : i32 to index
    %c0_15 = arith.constant 0 : index
    %41 = vector.load %arg1[%40, %c0_15] : memref<8x2xi32, #tpu.memory_space<vmem>>, vector<1x2xi32>
    %42 = tpu.iota {dimensions = array<i32: 0>} : vector<8x2xi32>
    %43 = vector.broadcast %41 : vector<1x2xi32> to vector<8x2xi32>
    %44 = arith.cmpi eq, %42, %43 : vector<8x2xi32>
    %45 = arith.extui %44 : vector<8x2xi1> to vector<8x2xi32>
    %46 = arith.sitofp %45 : vector<8x2xi32> to vector<8x2xf32>
    %c0_16 = arith.constant 0 : index
    %c0_17 = arith.constant 0 : index
    %47 = vector.load %arg3[%c0_16, %c0_17] : memref<128x8xf32, #tpu.memory_space<vmem>>, vector<128x8xf32>
    %cst_18 = arith.constant dense<0.000000e+00> : vector<128x2xf32>
    %48 = tpu.matmul %47, %46, %cst_18 {dimension_numbers = #tpu.dot_dimension_numbers<[1], [0], [0], [1], [0, 0, 1, 1], [], []>} : vector<128x8xf32>, vector<8x2xf32>, vector<128x2xf32> -> vector<128x2xf32>
    %c0_19 = arith.constant 0 : index
    %c0_20 = arith.constant 0 : index
    %49 = vector.load %arg4[%c0_19, %c0_20] : memref<128x128xbf16, #tpu.memory_space<vmem>>, vector<128x128xbf16>
    %50 = arith.truncf %39 : vector<128x2xf32> to vector<128x2xbf16>
    %cst_21 = arith.constant dense<0.000000e+00> : vector<128x2xf32>
    %51 = tpu.matmul %49, %50, %cst_21 {dimension_numbers = #tpu.dot_dimension_numbers<[1], [0], [0], [1], [0, 0, 1, 1], [], []>} : vector<128x128xbf16>, vector<128x2xbf16>, vector<128x2xf32> -> vector<128x2xf32>
    %52 = arith.addf %48, %51 : vector<128x2xf32>
    %53 = math.tanh %52 : vector<128x2xf32>
    %54 = vector.broadcast %c2_i32 : i32 to vector<1x2xi32>
    %55 = arith.cmpi sgt, %0, %54 : vector<1x2xi32>
    %56 = vector.shape_cast %55 : vector<1x2xi1> to vector<1x2xi1>
    %57 = vector.broadcast %56 : vector<1x2xi1> to vector<128x2xi1>
    %58 = arith.select %57, %53, %39 : vector<128x2xi1>, vector<128x2xf32>
    %c3_i32 = arith.constant 3 : i32
    %59 = arith.index_cast %c3_i32 : i32 to index
    %c0_22 = arith.constant 0 : index
    %60 = vector.load %arg1[%59, %c0_22] : memref<8x2xi32, #tpu.memory_space<vmem>>, vector<1x2xi32>
    %61 = tpu.iota {dimensions = array<i32: 0>} : vector<8x2xi32>
    %62 = vector.broadcast %60 : vector<1x2xi32> to vector<8x2xi32>
    %63 = arith.cmpi eq, %61, %62 : vector<8x2xi32>
    %64 = arith.extui %63 : vector<8x2xi1> to vector<8x2xi32>
    %65 = arith.sitofp %64 : vector<8x2xi32> to vector<8x2xf32>
    %c0_23 = arith.constant 0 : index
    %c0_24 = arith.constant 0 : index
    %66 = vector.load %arg3[%c0_23, %c0_24] : memref<128x8xf32, #tpu.memory_space<vmem>>, vector<128x8xf32>
    %cst_25 = arith.constant dense<0.000000e+00> : vector<128x2xf32>
    %67 = tpu.matmul %66, %65, %cst_25 {dimension_numbers = #tpu.dot_dimension_numbers<[1], [0], [0], [1], [0, 0, 1, 1], [], []>} : vector<128x8xf32>, vector<8x2xf32>, vector<128x2xf32> -> vector<128x2xf32>
    %c0_26 = arith.constant 0 : index
    %c0_27 = arith.constant 0 : index
    %68 = vector.load %arg4[%c0_26, %c0_27] : memref<128x128xbf16, #tpu.memory_space<vmem>>, vector<128x128xbf16>
    %69 = arith.truncf %58 : vector<128x2xf32> to vector<128x2xbf16>
    %cst_28 = arith.constant dense<0.000000e+00> : vector<128x2xf32>
    %70 = tpu.matmul %68, %69, %cst_28 {dimension_numbers = #tpu.dot_dimension_numbers<[1], [0], [0], [1], [0, 0, 1, 1], [], []>} : vector<128x128xbf16>, vector<128x2xbf16>, vector<128x2xf32> -> vector<128x2xf32>
    %71 = arith.addf %67, %70 : vector<128x2xf32>
    %72 = math.tanh %71 : vector<128x2xf32>
    %73 = vector.broadcast %c3_i32 : i32 to vector<1x2xi32>
    %74 = arith.cmpi sgt, %0, %73 : vector<1x2xi32>
    %75 = vector.shape_cast %74 : vector<1x2xi1> to vector<1x2xi1>
    %76 = vector.broadcast %75 : vector<1x2xi1> to vector<128x2xi1>
    %77 = arith.select %76, %72, %58 : vector<128x2xi1>, vector<128x2xf32>
    %c4_i32 = arith.constant 4 : i32
    %78 = arith.index_cast %c4_i32 : i32 to index
    %c0_29 = arith.constant 0 : index
    %79 = vector.load %arg1[%78, %c0_29] : memref<8x2xi32, #tpu.memory_space<vmem>>, vector<1x2xi32>
    %80 = tpu.iota {dimensions = array<i32: 0>} : vector<8x2xi32>
    %81 = vector.broadcast %79 : vector<1x2xi32> to vector<8x2xi32>
    %82 = arith.cmpi eq, %80, %81 : vector<8x2xi32>
    %83 = arith.extui %82 : vector<8x2xi1> to vector<8x2xi32>
    %84 = arith.sitofp %83 : vector<8x2xi32> to vector<8x2xf32>
    %c0_30 = arith.constant 0 : index
    %c0_31 = arith.constant 0 : index
    %85 = vector.load %arg3[%c0_30, %c0_31] : memref<128x8xf32, #tpu.memory_space<vmem>>, vector<128x8xf32>
    %cst_32 = arith.constant dense<0.000000e+00> : vector<128x2xf32>
    %86 = tpu.matmul %85, %84, %cst_32 {dimension_numbers = #tpu.dot_dimension_numbers<[1], [0], [0], [1], [0, 0, 1, 1], [], []>} : vector<128x8xf32>, vector<8x2xf32>, vector<128x2xf32> -> vector<128x2xf32>
    %c0_33 = arith.constant 0 : index
    %c0_34 = arith.constant 0 : index
    %87 = vector.load %arg4[%c0_33, %c0_34] : memref<128x128xbf16, #tpu.memory_space<vmem>>, vector<128x128xbf16>
    %88 = arith.truncf %77 : vector<128x2xf32> to vector<128x2xbf16>
    %cst_35 = arith.constant dense<0.000000e+00> : vector<128x2xf32>
    %89 = tpu.matmul %87, %88, %cst_35 {dimension_numbers = #tpu.dot_dimension_numbers<[1], [0], [0], [1], [0, 0, 1, 1], [], []>} : vector<128x128xbf16>, vector<128x2xbf16>, vector<128x2xf32> -> vector<128x2xf32>
    %90 = arith.addf %86, %89 : vector<128x2xf32>
    %91 = math.tanh %90 : vector<128x2xf32>
    %92 = vector.broadcast %c4_i32 : i32 to vector<1x2xi32>
    %93 = arith.cmpi sgt, %0, %92 : vector<1x2xi32>
    %94 = vector.shape_cast %93 : vector<1x2xi1> to vector<1x2xi1>
    %95 = vector.broadcast %94 : vector<1x2xi1> to vector<128x2xi1>
    %96 = arith.select %95, %91, %77 : vector<128x2xi1>, vector<128x2xf32>
    %c5_i32 = arith.constant 5 : i32
    %97 = arith.index_cast %c5_i32 : i32 to index
    %c0_36 = arith.constant 0 : index
    %98 = vector.load %arg1[%97, %c0_36] : memref<8x2xi32, #tpu.memory_space<vmem>>, vector<1x2xi32>
    %99 = tpu.iota {dimensions = array<i32: 0>} : vector<8x2xi32>
    %100 = vector.broadcast %98 : vector<1x2xi32> to vector<8x2xi32>
    %101 = arith.cmpi eq, %99, %100 : vector<8x2xi32>
    %102 = arith.extui %101 : vector<8x2xi1> to vector<8x2xi32>
    %103 = arith.sitofp %102 : vector<8x2xi32> to vector<8x2xf32>
    %c0_37 = arith.constant 0 : index
    %c0_38 = arith.constant 0 : index
    %104 = vector.load %arg3[%c0_37, %c0_38] : memref<128x8xf32, #tpu.memory_space<vmem>>, vector<128x8xf32>
    %cst_39 = arith.constant dense<0.000000e+00> : vector<128x2xf32>
    %105 = tpu.matmul %104, %103, %cst_39 {dimension_numbers = #tpu.dot_dimension_numbers<[1], [0], [0], [1], [0, 0, 1, 1], [], []>} : vector<128x8xf32>, vector<8x2xf32>, vector<128x2xf32> -> vector<128x2xf32>
    %c0_40 = arith.constant 0 : index
    %c0_41 = arith.constant 0 : index
    %106 = vector.load %arg4[%c0_40, %c0_41] : memref<128x128xbf16, #tpu.memory_space<vmem>>, vector<128x128xbf16>
    %107 = arith.truncf %96 : vector<128x2xf32> to vector<128x2xbf16>
    %cst_42 = arith.constant dense<0.000000e+00> : vector<128x2xf32>
    %108 = tpu.matmul %106, %107, %cst_42 {dimension_numbers = #tpu.dot_dimension_numbers<[1], [0], [0], [1], [0, 0, 1, 1], [], []>} : vector<128x128xbf16>, vector<128x2xbf16>, vector<128x2xf32> -> vector<128x2xf32>
    %109 = arith.addf %105, %108 : vector<128x2xf32>
    %110 = math.tanh %109 : vector<128x2xf32>
    %111 = vector.broadcast %c5_i32 : i32 to vector<1x2xi32>
    %112 = arith.cmpi sgt, %0, %111 : vector<1x2xi32>
    %113 = vector.shape_cast %112 : vector<1x2xi1> to vector<1x2xi1>
    %114 = vector.broadcast %113 : vector<1x2xi1> to vector<128x2xi1>
    %115 = arith.select %114, %110, %96 : vector<128x2xi1>, vector<128x2xf32>
    %c6_i32 = arith.constant 6 : i32
    %116 = arith.index_cast %c6_i32 : i32 to index
    %c0_43 = arith.constant 0 : index
    %117 = vector.load %arg1[%116, %c0_43] : memref<8x2xi32, #tpu.memory_space<vmem>>, vector<1x2xi32>
    %118 = tpu.iota {dimensions = array<i32: 0>} : vector<8x2xi32>
    %119 = vector.broadcast %117 : vector<1x2xi32> to vector<8x2xi32>
    %120 = arith.cmpi eq, %118, %119 : vector<8x2xi32>
    %121 = arith.extui %120 : vector<8x2xi1> to vector<8x2xi32>
    %122 = arith.sitofp %121 : vector<8x2xi32> to vector<8x2xf32>
    %c0_44 = arith.constant 0 : index
    %c0_45 = arith.constant 0 : index
    %123 = vector.load %arg3[%c0_44, %c0_45] : memref<128x8xf32, #tpu.memory_space<vmem>>, vector<128x8xf32>
    %cst_46 = arith.constant dense<0.000000e+00> : vector<128x2xf32>
    %124 = tpu.matmul %123, %122, %cst_46 {dimension_numbers = #tpu.dot_dimension_numbers<[1], [0], [0], [1], [0, 0, 1, 1], [], []>} : vector<128x8xf32>, vector<8x2xf32>, vector<128x2xf32> -> vector<128x2xf32>
    %c0_47 = arith.constant 0 : index
    %c0_48 = arith.constant 0 : index
    %125 = vector.load %arg4[%c0_47, %c0_48] : memref<128x128xbf16, #tpu.memory_space<vmem>>, vector<128x128xbf16>
    %126 = arith.truncf %115 : vector<128x2xf32> to vector<128x2xbf16>
    %cst_49 = arith.constant dense<0.000000e+00> : vector<128x2xf32>
    %127 = tpu.matmul %125, %126, %cst_49 {dimension_numbers = #tpu.dot_dimension_numbers<[1], [0], [0], [1], [0, 0, 1, 1], [], []>} : vector<128x128xbf16>, vector<128x2xbf16>, vector<128x2xf32> -> vector<128x2xf32>
    %128 = arith.addf %124, %127 : vector<128x2xf32>
    %129 = math.tanh %128 : vector<128x2xf32>
    %130 = vector.broadcast %c6_i32 : i32 to vector<1x2xi32>
    %131 = arith.cmpi sgt, %0, %130 : vector<1x2xi32>
    %132 = vector.shape_cast %131 : vector<1x2xi1> to vector<1x2xi1>
    %133 = vector.broadcast %132 : vector<1x2xi1> to vector<128x2xi1>
    %134 = arith.select %133, %129, %115 : vector<128x2xi1>, vector<128x2xf32>
    %c7_i32 = arith.constant 7 : i32
    %135 = arith.index_cast %c7_i32 : i32 to index
    %c0_50 = arith.constant 0 : index
    %136 = vector.load %arg1[%135, %c0_50] : memref<8x2xi32, #tpu.memory_space<vmem>>, vector<1x2xi32>
    %137 = tpu.iota {dimensions = array<i32: 0>} : vector<8x2xi32>
    %138 = vector.broadcast %136 : vector<1x2xi32> to vector<8x2xi32>
    %139 = arith.cmpi eq, %137, %138 : vector<8x2xi32>
    %140 = arith.extui %139 : vector<8x2xi1> to vector<8x2xi32>
    %141 = arith.sitofp %140 : vector<8x2xi32> to vector<8x2xf32>
    %c0_51 = arith.constant 0 : index
    %c0_52 = arith.constant 0 : index
    %142 = vector.load %arg3[%c0_51, %c0_52] : memref<128x8xf32, #tpu.memory_space<vmem>>, vector<128x8xf32>
    %cst_53 = arith.constant dense<0.000000e+00> : vector<128x2xf32>
    %143 = tpu.matmul %142, %141, %cst_53 {dimension_numbers = #tpu.dot_dimension_numbers<[1], [0], [0], [1], [0, 0, 1, 1], [], []>} : vector<128x8xf32>, vector<8x2xf32>, vector<128x2xf32> -> vector<128x2xf32>
    %c0_54 = arith.constant 0 : index
    %c0_55 = arith.constant 0 : index
    %144 = vector.load %arg4[%c0_54, %c0_55] : memref<128x128xbf16, #tpu.memory_space<vmem>>, vector<128x128xbf16>
    %145 = arith.truncf %134 : vector<128x2xf32> to vector<128x2xbf16>
    %cst_56 = arith.constant dense<0.000000e+00> : vector<128x2xf32>
    %146 = tpu.matmul %144, %145, %cst_56 {dimension_numbers = #tpu.dot_dimension_numbers<[1], [0], [0], [1], [0, 0, 1, 1], [], []>} : vector<128x128xbf16>, vector<128x2xbf16>, vector<128x2xf32> -> vector<128x2xf32>
    %147 = arith.addf %143, %146 : vector<128x2xf32>
    %148 = math.tanh %147 : vector<128x2xf32>
    %149 = vector.broadcast %c7_i32 : i32 to vector<1x2xi32>
    %150 = arith.cmpi sgt, %0, %149 : vector<1x2xi32>
    %151 = vector.shape_cast %150 : vector<1x2xi1> to vector<1x2xi1>
    %152 = vector.broadcast %151 : vector<1x2xi1> to vector<128x2xi1>
    %153 = arith.select %152, %148, %134 : vector<128x2xi1>, vector<128x2xf32>
    %c8_i32 = arith.constant 8 : i32
    %c0_57 = arith.constant 0 : index
    %c0_58 = arith.constant 0 : index
    %154 = vector.load %arg5[%c0_57, %c0_58] : memref<2x128xf32, #tpu.memory_space<vmem>>, vector<2x128xf32>
    %cst_59 = arith.constant dense<0.000000e+00> : vector<2x2xf32>
    %155 = tpu.matmul %154, %153, %cst_59 {dimension_numbers = #tpu.dot_dimension_numbers<[1], [0], [0], [1], [0, 0, 1, 1], [], []>} : vector<2x128xf32>, vector<128x2xf32>, vector<2x2xf32> -> vector<2x2xf32>
    %c0_60 = arith.constant 0 : index
    %c0_61 = arith.constant 0 : index
    %156 = vector.load %arg6[%c0_60, %c0_61] : memref<2x1xf32, #tpu.memory_space<vmem>>, vector<2x1xf32>
    %157 = vector.broadcast %156 : vector<2x1xf32> to vector<2x2xf32>
    %158 = arith.addf %155, %157 : vector<2x2xf32>
    %cst_62 = arith.constant dense<0xFF800000> : vector<2xf32>
    %159 = vector.multi_reduction <maximumf>, %158, %cst_62 [0] : vector<2x2xf32> to vector<2xf32>
    %160 = vector.shape_cast %159 : vector<2xf32> to vector<1x2xf32>
    %161 = vector.broadcast %160 : vector<1x2xf32> to vector<2x2xf32>
    %162 = arith.subf %158, %161 : vector<2x2xf32>
    %163 = math.exp %162 : vector<2x2xf32>
    %cst_63 = arith.constant dense<0.000000e+00> : vector<2xf32>
    %164 = vector.multi_reduction <add>, %163, %cst_63 [0] : vector<2x2xf32> to vector<2xf32>
    %165 = vector.shape_cast %164 : vector<2xf32> to vector<1x2xf32>
    %166 = tpu.reciprocal %165 : vector<1x2xf32> -> vector<1x2xf32>
    %167 = vector.broadcast %166 : vector<1x2xf32> to vector<2x2xf32>
    %168 = arith.mulf %163, %167 : vector<2x2xf32>
    %c0_64 = arith.constant 0 : index
    %c0_65 = arith.constant 0 : index
    %169 = vector.load %arg7[%c0_64, %c0_65] : memref<2x2xf32, #tpu.memory_space<vmem>>, vector<2x2xf32>
    tpu.vector_store %arg7[%c0_64, %c0_65], %168 {strides = array<i32>} : memref<2x2xf32, #tpu.memory_space<vmem>>, vector<2x2xf32>,
    %c0_66 = arith.constant 0 : index
    %c0_67 = arith.constant 0 : index
    %170 = vector.load %arg8[%c0_66, %c0_67] : memref<128x2xf32, #tpu.memory_space<vmem>>, vector<128x2xf32>
    tpu.vector_store %arg8[%c0_66, %c0_67], %153 {strides = array<i32>} : memref<128x2xf32, #tpu.memory_space<vmem>>, vector<128x2xf32>,
    return
  }
  func.func @transform_0(%arg0: i32) -> (i32, i32) {
    %c0_i32 = arith.constant 0 : i32
    %c0_i32_0 = arith.constant 0 : i32
    return %c0_i32, %arg0 : i32, i32
  }
  func.func @transform_1(%arg0: i32) -> (i32, i32) {
    %c0_i32 = arith.constant 0 : i32
    %c0_i32_0 = arith.constant 0 : i32
    return %c0_i32, %arg0 : i32, i32
  }
  func.func @transform_2(%arg0: i32) -> (i32, i32) {
    %c0_i32 = arith.constant 0 : i32
    %c0_i32_0 = arith.constant 0 : i32
    %c0_i32_1 = arith.constant 0 : i32
    return %c0_i32, %c0_i32_0 : i32, i32
  }
  func.func @transform_3(%arg0: i32) -> (i32, i32) {
    %c0_i32 = arith.constant 0 : i32
    %c0_i32_0 = arith.constant 0 : i32
    %c0_i32_1 = arith.constant 0 : i32
    return %c0_i32, %c0_i32_0 : i32, i32
  }
  func.func @transform_4(%arg0: i32) -> (i32, i32) {
    %c0_i32 = arith.constant 0 : i32
    %c0_i32_0 = arith.constant 0 : i32
    %c0_i32_1 = arith.constant 0 : i32
    return %c0_i32, %c0_i32_0 : i32, i32
  }
  func.func @transform_5(%arg0: i32) -> (i32, i32) {
    %c0_i32 = arith.constant 0 : i32
    %c0_i32_0 = arith.constant 0 : i32
    %c0_i32_1 = arith.constant 0 : i32
    return %c0_i32, %c0_i32_0 : i32, i32
  }
  func.func @transform_6(%arg0: i32) -> (i32, i32) {
    %c0_i32 = arith.constant 0 : i32
    %c0_i32_0 = arith.constant 0 : i32
    return %c0_i32, %arg0 : i32, i32
  }
  func.func @transform_7(%arg0: i32) -> (i32, i32) {
    %c0_i32 = arith.constant 0 : i32
    %c0_i32_0 = arith.constant 0 : i32
    return %c0_i32, %arg0 : i32, i32
  }
}

</mosaic_0001>

<llo_original>
// kernel: tpu_custom_call.1
$region0: #{tpu_custom_call.1}
  #allocation0 [shape = 'u32[]', space=smem, size = 0x4, offset = 0x4, fixed_abs, tag = 'smem constant byte address 0x4 - core index']
  #allocation1 [shape = 'u32[144,128]{1,0:T(1,128)}', space=vmem, size = 0x12000, scoped, tag = 'internal scratch']
  %s0 = inlined_call_operand.vmem [shape: s32[8,2], index: 0, kind: input, shape index: {}]
  %s1 = inlined_call_operand.vmem [shape: s32[1,2], index: 1, kind: input, shape index: {}]
  %s2 = inlined_call_operand.vmem [shape: f32[128,8], index: 2, kind: input, shape index: {}]
  %s3 = inlined_call_operand.vmem [shape: bf16[128,128], index: 3, kind: input, shape index: {}]
  %s4 = inlined_call_operand.vmem [shape: f32[2,128], index: 4, kind: input, shape index: {}]
  %s5 = inlined_call_operand.vmem [shape: f32[2,1], index: 5, kind: input, shape index: {}]
  %s6 = inlined_call_operand.hbm [shape: f32[2,2], index: 6, kind: output, shape index: {0}]
  %s7 = inlined_call_operand.vmem [shape: f32[128,2], index: 7, kind: output, shape index: {1}]
  %8 = xla_tuple %s6, %s7
  %s9 = sld [smem:[#allocation0]]
  $region42: #{tpu_custom_call.1} parent=0
    _
  %s11 = ssub.s32 1, %s9
  %s12 = scalar_select 0, %s11, %s9
  $region1: #{tpu_custom_call.1} parent=0
    #allocation2 [shape = 'u8[1024]{0}', space=vmem, size = 0x400, scoped, tag = 'output window, operand 0, single buffered']
    #allocation3 [shape = 's32[1]{0}', space=sflag, size = 0x4, scoped, tag = 'scoped memory for tpu_custom_call.1']
    %13 = vsyncpa [#allocation3], 0
    // Predicated region
    $region2: #{tpu_custom_call.1} parent=1 // pred_check
      _
    $region3: #{tpu_custom_call.1} parent=1 // pred_check_branch
      %15 = sbr.rel (0) target = $region5
    $region4: #{tpu_custom_call.1} parent=1 // pred_region
      _
    $region5: #{tpu_custom_call.1} parent=1 // pred_fallthru
      _
    // Predicated region
    $region6: #{tpu_custom_call.1} parent=1 // pred_check
      _
    $region7: #{tpu_custom_call.1} parent=1 // pred_check_branch
      %17 = sbr.rel (0) target = $region9
    $region8: #{tpu_custom_call.1} parent=1 // pred_region
      _
    $region9: #{tpu_custom_call.1} parent=1 // pred_fallthru
      _
    // Predicated region
    $region10: #{tpu_custom_call.1} parent=1 // pred_check
      _
    $region11: #{tpu_custom_call.1} parent=1 // pred_check_branch
      %19 = sbr.rel (0) target = $region13
    $region12: #{tpu_custom_call.1} parent=1 // pred_region
      _
    $region13: #{tpu_custom_call.1} parent=1 // pred_fallthru
      _
    // Predicated region
    $region14: #{tpu_custom_call.1} parent=1 // pred_check
      _
    $region15: #{tpu_custom_call.1} parent=1 // pred_check_branch
      %21 = sbr.rel (0) target = $region17
    $region16: #{tpu_custom_call.1} parent=1 // pred_region
      _
    $region17: #{tpu_custom_call.1} parent=1 // pred_fallthru
      _
    // Predicated region
    $region18: #{tpu_custom_call.1} parent=1 // pred_check
      _
    $region19: #{tpu_custom_call.1} parent=1 // pred_check_branch
      %23 = sbr.rel (0) target = $region21
    $region20: #{tpu_custom_call.1} parent=1 // pred_region
      _
    $region21: #{tpu_custom_call.1} parent=1 // pred_fallthru
      _
    // Predicated region
    $region22: #{tpu_custom_call.1} parent=1 // pred_check
      _
    $region23: #{tpu_custom_call.1} parent=1 // pred_check_branch
      %25 = sbr.rel (0) target = $region25
    $region24: #{tpu_custom_call.1} parent=1 // pred_region
      _
    $region25: #{tpu_custom_call.1} parent=1 // pred_fallthru
      _
    %v27 = vld [vmem:[%s1] sm:$0x1]
    %v28 = vld [vmem:[%s0] sm:$0x1]
    %v29 = vlaneseq
    %v30 = vshrl.u32 %v29, 7
    %v31 = vlaneseq
    %v32 = vshrl.u32 %v31, 7
    %v33 = vsub.s32 0, %v32
    %v34 = vrot.slane %v28, %v33
    %vm35 = vcmp.eq.s32.totalorder %v30, %v34
    %v36 = vsel %vm35, 1, 0
    %v37 = vcvt.s32.f32 %v36
    %v38 = vld [vmem:[%s2] sm:$0xff]
    %v39 = vld [vmem:[%s2 + $0x8] sm:$0xff]
    %v40 = vld [vmem:[%s2 + $0x10] sm:$0xff]
    %v41 = vld [vmem:[%s2 + $0x18] sm:$0xff]
    %v42 = vld [vmem:[%s2 + $0x20] sm:$0xff]
    %v43 = vld [vmem:[%s2 + $0x28] sm:$0xff]
    %v44 = vld [vmem:[%s2 + $0x30] sm:$0xff]
    %v45 = vld [vmem:[%s2 + $0x38] sm:$0xff]
    %v46 = vld [vmem:[%s2 + $0x40] sm:$0xff]
    %v47 = vld [vmem:[%s2 + $0x48] sm:$0xff]
    %v48 = vld [vmem:[%s2 + $0x50] sm:$0xff]
    %v49 = vld [vmem:[%s2 + $0x58] sm:$0xff]
    %v50 = vld [vmem:[%s2 + $0x60] sm:$0xff]
    %v51 = vld [vmem:[%s2 + $0x68] sm:$0xff]
    %v52 = vld [vmem:[%s2 + $0x70] sm:$0xff]
    %v53 = vld [vmem:[%s2 + $0x78] sm:$0xff]
    %v54 = vld [vmem:[%s3] sm:$0xf]
    %v55 = vld [vmem:[%s3 + $0x4] sm:$0xf]
    %v56 = vld [vmem:[%s3 + $0x8] sm:$0xf]
    %v57 = vld [vmem:[%s3 + $0xc] sm:$0xf]
    %v58 = vld [vmem:[%s3 + $0x10] sm:$0xf]
    %v59 = vld [vmem:[%s3 + $0x14] sm:$0xf]
    %v60 = vld [vmem:[%s3 + $0x18] sm:$0xf]
    %v61 = vld [vmem:[%s3 + $0x1c] sm:$0xf]
    %v62 = vld [vmem:[%s3 + $0x20] sm:$0xf]
    %v63 = vld [vmem:[%s3 + $0x24] sm:$0xf]
    %v64 = vld [vmem:[%s3 + $0x28] sm:$0xf]
    %v65 = vld [vmem:[%s3 + $0x2c] sm:$0xf]
    %v66 = vld [vmem:[%s3 + $0x30] sm:$0xf]
    %v67 = vld [vmem:[%s3 + $0x34] sm:$0xf]
    %v68 = vld [vmem:[%s3 + $0x38] sm:$0xf]
    %v69 = vld [vmem:[%s3 + $0x3c] sm:$0xf]
    %v86 = vunpack.c.l.b16 %v54
    %v87 = vunpack.c.l.b16 %v55
    %v88 = vunpack.c.l.b16 %v56
    %v89 = vunpack.c.l.b16 %v57
    %v90 = vunpack.c.l.b16 %v58
    %v91 = vunpack.c.l.b16 %v59
    %v92 = vunpack.c.l.b16 %v60
    %v93 = vunpack.c.l.b16 %v61
    %v94 = vunpack.c.l.b16 %v62
    %v95 = vunpack.c.l.b16 %v63
    %v96 = vunpack.c.l.b16 %v64
    %v97 = vunpack.c.l.b16 %v65
    %v98 = vunpack.c.l.b16 %v66
    %v99 = vunpack.c.l.b16 %v67
    %v100 = vunpack.c.l.b16 %v68
    %v101 = vunpack.c.l.b16 %v69
    %v102 = vpack.c.b16 %v87, %v86
    %v103 = vpack.c.b16 %v89, %v88
    %v104 = vpack.c.b16 %v91, %v90
    %v105 = vpack.c.b16 %v93, %v92
    %v106 = vpack.c.b16 %v95, %v94
    %v107 = vpack.c.b16 %v97, %v96
    %v108 = vpack.c.b16 %v99, %v98
    %v109 = vpack.c.b16 %v101, %v100
    %118 = vmatprep.subr.bf16.mxu0 0
    %119 = vmatpush1.bf16.msra.mxu0 0
    %120 = vmatprep.subr.bf16.mxu0 0
    %121 = vmatpush1.bf16.msra.mxu0 0
    %122 = vmatprep.subr.bf16.mxu0 0
    %123 = vmatpush1.bf16.msra.mxu0 0
    %124 = vmatprep.subr.bf16.mxu0 0
    %125 = vmatpush1.bf16.msra.mxu0 0
    %126 = vmatprep.subr.bf16.mxu0 0
    %127 = vmatpush1.bf16.msra.mxu0 0
    %128 = vmatprep.subr.bf16.mxu0 0
    %129 = vmatpush1.bf16.msra.mxu0 0
    %130 = vmatprep.subr.bf16.mxu0 0
    %131 = vmatpush1.bf16.msra.mxu0 0
    %132 = vmatprep.subr.bf16.mxu0 0
    %133 = vmatpush1.bf16.msra.mxu0 0
    %134 = vmatprep.subr.bf16.mxu0 0
    %135 = vmatpush1.bf16.msra.mxu0 0
    %136 = vmatprep.subr.bf16.mxu0 0
    %137 = vmatpush1.bf16.msra.mxu0 0
    %138 = vmatprep.subr.bf16.mxu0 0
    %139 = vmatpush1.bf16.msra.mxu0 0
    %140 = vmatprep.subr.bf16.mxu0 0
    %141 = vmatpush1.bf16.msra.mxu0 0
    %142 = vmatprep.subr.bf16.mxu0 0
    %143 = vmatpush1.bf16.msra.mxu0 0
    %144 = vmatprep.subr.bf16.mxu0 0
    %145 = vmatpush1.bf16.msra.mxu0 0
    %146 = vmatprep.subr.bf16.mxu0 0
    %147 = vmatpush1.bf16.msra.mxu0 0
    %148 = vmatprep.subr.bf16.mxu0 0
    %149 = vmatpush1.bf16.msra.mxu0 0
    %150 = vmatprep.mubr.bf16.mxu0 0
    %151 = vmatmul.mubr.bf16.gmra.mrb[0].mxu0 %v102
    %v152 = vpop.f32.mrb[0].mxu0
    %v153 = vadd.f32 0.0, %v152
    %v154 = vpop.f32.mrb[0].mxu0
    %v155 = vpop.f32.mrb[0].mxu0
    %v156 = vadd.f32 0.0, %v155
    %v157 = vpop.f32.mrb[0].mxu0
    %158 = vmatprep.mubr.bf16.mxu0 0
    %159 = vmatmul.mubr.bf16.gmra.mrb[0].mxu0 %v103
    %v160 = vpop.f32.mrb[0].mxu0
    %v161 = vadd.f32 0.0, %v160
    %v162 = vpop.f32.mrb[0].mxu0
    %v163 = vpop.f32.mrb[0].mxu0
    %v164 = vadd.f32 0.0, %v163
    %v165 = vpop.f32.mrb[0].mxu0
    %166 = vmatprep.mubr.bf16.mxu0 0
    %167 = vmatmul.mubr.bf16.gmra.mrb[0].mxu0 %v104
    %v168 = vpop.f32.mrb[0].mxu0
    %v169 = vadd.f32 0.0, %v168
    %v170 = vpop.f32.mrb[0].mxu0
    %v171 = vpop.f32.mrb[0].mxu0
    %v172 = vadd.f32 0.0, %v171
    %v173 = vpop.f32.mrb[0].mxu0
    %174 = vmatprep.mubr.bf16.mxu0 0
    %175 = vmatmul.mubr.bf16.gmra.mrb[0].mxu0 %v105
    %v176 = vpop.f32.mrb[0].mxu0
    %v177 = vadd.f32 0.0, %v176
    %v178 = vpop.f32.mrb[0].mxu0
    %v179 = vpop.f32.mrb[0].mxu0
    %v180 = vadd.f32 0.0, %v179
    %v181 = vpop.f32.mrb[0].mxu0
    %182 = vmatprep.mubr.bf16.mxu0 0
    %183 = vmatmul.mubr.bf16.gmra.mrb[0].mxu0 %v106
    %v184 = vpop.f32.mrb[0].mxu0
    %v185 = vadd.f32 0.0, %v184
    %v186 = vpop.f32.mrb[0].mxu0
    %v187 = vpop.f32.mrb[0].mxu0
    %v188 = vadd.f32 0.0, %v187
    %v189 = vpop.f32.mrb[0].mxu0
    %190 = vmatprep.mubr.bf16.mxu0 0
    %191 = vmatmul.mubr.bf16.gmra.mrb[0].mxu0 %v107
    %v192 = vpop.f32.mrb[0].mxu0
    %v193 = vadd.f32 0.0, %v192
    %v194 = vpop.f32.mrb[0].mxu0
    %v195 = vpop.f32.mrb[0].mxu0
    %v196 = vadd.f32 0.0, %v195
    %v197 = vpop.f32.mrb[0].mxu0
    %198 = vmatprep.mubr.bf16.mxu0 0
    %199 = vmatmul.mubr.bf16.gmra.mrb[0].mxu0 %v108
    %v200 = vpop.f32.mrb[0].mxu0
    %v201 = vadd.f32 0.0, %v200
    %v202 = vpop.f32.mrb[0].mxu0
    %v203 = vpop.f32.mrb[0].mxu0
    %v204 = vadd.f32 0.0, %v203
    %v205 = vpop.f32.mrb[0].mxu0
    %206 = vmatprep.mubr.bf16.mxu0 0
    %207 = vmatmul.mubr.bf16.gmra.mrb[0].mxu0 %v109
    %v208 = vpop.f32.mrb[0].mxu0
    %v209 = vadd.f32 0.0, %v208
    %v210 = vpop.f32.mrb[0].mxu0
    %v211 = vpop.f32.mrb[0].mxu0
    %v212 = vadd.f32 0.0, %v211
    %v213 = vpop.f32.mrb[0].mxu0
    %214 = vdwg.mxu0
    %vm215 = vcmask 64512
    %v217 = vsel %vm215, %v38, 0
    %v220 = vsel %vm215, %v39, 0
    %v223 = vsel %vm215, %v40, 0
    %v226 = vsel %vm215, %v41, 0
    %v229 = vsel %vm215, %v42, 0
    %v232 = vsel %vm215, %v43, 0
    %v235 = vsel %vm215, %v44, 0
    %v238 = vsel %vm215, %v45, 0
    %v241 = vsel %vm215, %v46, 0
    %v244 = vsel %vm215, %v47, 0
    %v247 = vsel %vm215, %v48, 0
    %v250 = vsel %vm215, %v49, 0
    %v253 = vsel %vm215, %v50, 0
    %v256 = vsel %vm215, %v51, 0
    %v259 = vsel %vm215, %v52, 0
    %v262 = vsel %vm215, %v53, 0
    %264 = vmatprep.subr.mxu0 0.0
    %265 = vmatpush1.msra.mxu0 %v37
    %266 = vmatprep.subr.mxu0 0.0
    %267 = vmatpush1.msra.mxu0 0.0
    %268 = vmatprep.subr.mxu0 0.0
    %269 = vmatpush1.msra.mxu0 0.0
    %270 = vmatprep.subr.mxu0 0.0
    %271 = vmatpush1.msra.mxu0 0.0
    %272 = vmatprep.subr.mxu0 0.0
    %273 = vmatpush1.msra.mxu0 0.0
    %274 = vmatprep.subr.mxu0 0.0
    %275 = vmatpush1.msra.mxu0 0.0
    %276 = vmatprep.subr.mxu0 0.0
    %277 = vmatpush1.msra.mxu0 0.0
    %278 = vmatprep.subr.mxu0 0.0
    %279 = vmatpush1.msra.mxu0 0.0
    %280 = vmatprep.subr.mxu0 0.0
    %281 = vmatpush1.msra.mxu0 0.0
    %282 = vmatprep.subr.mxu0 0.0
    %283 = vmatpush1.msra.mxu0 0.0
    %284 = vmatprep.subr.mxu0 0.0
    %285 = vmatpush1.msra.mxu0 0.0
    %286 = vmatprep.subr.mxu0 0.0
    %287 = vmatpush1.msra.mxu0 0.0
    %288 = vmatprep.subr.mxu0 0.0
    %289 = vmatpush1.msra.mxu0 0.0
    %290 = vmatprep.subr.mxu0 0.0
    %291 = vmatpush1.msra.mxu0 0.0
    %292 = vmatprep.subr.mxu0 0.0
    %293 = vmatpush1.msra.mxu0 0.0
    %294 = vmatprep.subr.mxu0 0.0
    %295 = vmatpush1.msra.mxu0 0.0
    %296 = vmatprep.subr.mxu0 0.0
    %297 = vmatpush1.msra.mxu0 0.0
    %298 = vmatprep.subr.mxu0 0.0
    %299 = vmatpush1.msra.mxu0 0.0
    %300 = vmatprep.subr.mxu0 0.0
    %301 = vmatpush1.msra.mxu0 0.0
    %302 = vmatprep.subr.mxu0 0.0
    %303 = vmatpush1.msra.mxu0 0.0
    %304 = vmatprep.subr.mxu0 0.0
    %305 = vmatpush1.msra.mxu0 0.0
    %306 = vmatprep.subr.mxu0 0.0
    %307 = vmatpush1.msra.mxu0 0.0
    %308 = vmatprep.subr.mxu0 0.0
    %309 = vmatpush1.msra.mxu0 0.0
    %310 = vmatprep.subr.mxu0 0.0
    %311 = vmatpush1.msra.mxu0 0.0
    %312 = vmatprep.subr.mxu0 0.0
    %313 = vmatpush1.msra.mxu0 0.0
    %314 = vmatprep.subr.mxu0 0.0
    %315 = vmatpush1.msra.mxu0 0.0
    %316 = vmatprep.subr.mxu0 0.0
    %317 = vmatpush1.msra.mxu0 0.0
    %318 = vmatprep.subr.mxu0 0.0
    %319 = vmatpush1.msra.mxu0 0.0
    %320 = vmatprep.subr.mxu0 0.0
    %321 = vmatpush1.msra.mxu0 0.0
    %322 = vmatprep.subr.mxu0 0.0
    %323 = vmatpush1.msra.mxu0 0.0
    %324 = vmatprep.subr.mxu0 0.0
    %325 = vmatpush1.msra.mxu0 0.0
    %326 = vmatprep.subr.mxu0 0.0
    %327 = vmatpush1.msra.mxu0 0.0
    %328 = vmatprep.mubr.f32.mxu0 0.0
    %329 = vmatmul.mubr.f32.gmra.mrb[0].mxu0 %v217
    %v330 = vpop.f32.mrb[0].mxu0
    %v331 = vadd.f32 %v153, %v330
    %v332 = vpop.f32.mrb[0].mxu0
    %333 = vmatprep.mubr.f32.mxu0 0.0
    %334 = vmatmul.mubr.f32.gmra.mrb[0].mxu0 %v220
    %v335 = vpop.f32.mrb[0].mxu0
    %v336 = vadd.f32 %v156, %v335
    %v337 = vpop.f32.mrb[0].mxu0
    %338 = vmatprep.mubr.f32.mxu0 0.0
    %339 = vmatmul.mubr.f32.gmra.mrb[0].mxu0 %v223
    %v340 = vpop.f32.mrb[0].mxu0
    %v341 = vadd.f32 %v161, %v340
    %v342 = vpop.f32.mrb[0].mxu0
    %343 = vmatprep.mubr.f32.mxu0 0.0
    %344 = vmatmul.mubr.f32.gmra.mrb[0].mxu0 %v226
    %v345 = vpop.f32.mrb[0].mxu0
    %v346 = vadd.f32 %v164, %v345
    %v347 = vpop.f32.mrb[0].mxu0
    %348 = vmatprep.mubr.f32.mxu0 0.0
    %349 = vmatmul.mubr.f32.gmra.mrb[0].mxu0 %v229
    %v350 = vpop.f32.mrb[0].mxu0
    %v351 = vadd.f32 %v169, %v350
    %v352 = vpop.f32.mrb[0].mxu0
    %353 = vmatprep.mubr.f32.mxu0 0.0
    %354 = vmatmul.mubr.f32.gmra.mrb[0].mxu0 %v232
    %v355 = vpop.f32.mrb[0].mxu0
    %v356 = vadd.f32 %v172, %v355
    %v357 = vpop.f32.mrb[0].mxu0
    %358 = vmatprep.mubr.f32.mxu0 0.0
    %359 = vmatmul.mubr.f32.gmra.mrb[0].mxu0 %v235
    %v360 = vpop.f32.mrb[0].mxu0
    %v361 = vadd.f32 %v177, %v360
    %v362 = vpop.f32.mrb[0].mxu0
    %363 = vmatprep.mubr.f32.mxu0 0.0
    %364 = vmatmul.mubr.f32.gmra.mrb[0].mxu0 %v238
    %v365 = vpop.f32.mrb[0].mxu0
    %v366 = vadd.f32 %v180, %v365
    %v367 = vpop.f32.mrb[0].mxu0
    %368 = vmatprep.mubr.f32.mxu0 0.0
    %369 = vmatmul.mubr.f32.gmra.mrb[0].mxu0 %v241
    %v370 = vpop.f32.mrb[0].mxu0
    %v371 = vadd.f32 %v185, %v370
    %v372 = vpop.f32.mrb[0].mxu0
    %373 = vmatprep.mubr.f32.mxu0 0.0
    %374 = vmatmul.mubr.f32.gmra.mrb[0].mxu0 %v244
    %v375 = vpop.f32.mrb[0].mxu0
    %v376 = vadd.f32 %v188, %v375
    %v377 = vpop.f32.mrb[0].mxu0
    %378 = vmatprep.mubr.f32.mxu0 0.0
    %379 = vmatmul.mubr.f32.gmra.mrb[0].mxu0 %v247
    %v380 = vpop.f32.mrb[0].mxu0
    %v381 = vadd.f32 %v193, %v380
    %v382 = vpop.f32.mrb[0].mxu0
    %383 = vmatprep.mubr.f32.mxu0 0.0
    %384 = vmatmul.mubr.f32.gmra.mrb[0].mxu0 %v250
    %v385 = vpop.f32.mrb[0].mxu0
    %v386 = vadd.f32 %v196, %v385
    %v387 = vpop.f32.mrb[0].mxu0
    %388 = vmatprep.mubr.f32.mxu0 0.0
    %389 = vmatmul.mubr.f32.gmra.mrb[0].mxu0 %v253
    %v390 = vpop.f32.mrb[0].mxu0
    %v391 = vadd.f32 %v201, %v390
    %v392 = vpop.f32.mrb[0].mxu0
    %393 = vmatprep.mubr.f32.mxu0 0.0
    %394 = vmatmul.mubr.f32.gmra.mrb[0].mxu0 %v256
    %v395 = vpop.f32.mrb[0].mxu0
    %v396 = vadd.f32 %v204, %v395
    %v397 = vpop.f32.mrb[0].mxu0
    %398 = vmatprep.mubr.f32.mxu0 0.0
    %399 = vmatmul.mubr.f32.gmra.mrb[0].mxu0 %v259
    %v400 = vpop.f32.mrb[0].mxu0
    %v401 = vadd.f32 %v209, %v400
    %v402 = vpop.f32.mrb[0].mxu0
    %403 = vmatprep.mubr.f32.mxu0 0.0
    %404 = vmatmul.mubr.f32.gmra.mrb[0].mxu0 %v262
    %v405 = vpop.f32.mrb[0].mxu0
    %v406 = vadd.f32 %v212, %v405
    %v407 = vpop.f32.mrb[0].mxu0
    %408 = vdwg.mxu0
    %v409 = vtanh.pop %v331
    %v410 = vtanh.pop %v336
    %v411 = vtanh.pop %v341
    %v412 = vtanh.pop %v346
    %v413 = vtanh.pop %v351
    %v414 = vtanh.pop %v356
    %v415 = vtanh.pop %v361
    %v416 = vtanh.pop %v366
    %v417 = vtanh.pop %v371
    %v418 = vtanh.pop %v376
    %v419 = vtanh.pop %v381
    %v420 = vtanh.pop %v386
    %v421 = vtanh.pop %v391
    %v422 = vtanh.pop %v396
    %v423 = vtanh.pop %v401
    %v424 = vtanh.pop %v406
    %vm425 = vcmp.gt.s32.totalorder %v27, 0
    %v426 = vsel %vm425, 1, 0
    %v427 = vlaneseq
    %v428 = vshrl.u32 %v427, 7
    %v429 = vsub.s32 0, %v428
    %v430 = vrot.slane %v426, %v429
    %vm431 = vcmp.eq.s32.totalorder %v430, 1
    %v432 = vsel %vm431, %v409, 0.0
    %v433 = vsel %vm431, %v410, 0.0
    %v434 = vsel %vm431, %v411, 0.0
    %v435 = vsel %vm431, %v412, 0.0
    %v436 = vsel %vm431, %v413, 0.0
    %v437 = vsel %vm431, %v414, 0.0
    %v438 = vsel %vm431, %v415, 0.0
    %v439 = vsel %vm431, %v416, 0.0
    %v440 = vsel %vm431, %v417, 0.0
    %v441 = vsel %vm431, %v418, 0.0
    %v442 = vsel %vm431, %v419, 0.0
    %v443 = vsel %vm431, %v420, 0.0
    %v444 = vsel %vm431, %v421, 0.0
    %v445 = vsel %vm431, %v422, 0.0
    %v446 = vsel %vm431, %v423, 0.0
    %v447 = vsel %vm431, %v424, 0.0
    %v448 = vld [vmem:[%s0 + $0x1] sm:$0x1]
    %v449 = vlaneseq
    %v450 = vshrl.u32 %v449, 7
    %v451 = vsub.s32 0, %v450
    %v452 = vrot.slane %v448, %v451
    %vm453 = vcmp.eq.s32.totalorder %v30, %v452
    %v454 = vsel %vm453, 1, 0
    %v455 = vcvt.s32.f32 %v454
    %v456 = vpack.c.bf16 %v433, %v432
    %v457 = vpack.c.bf16 %v435, %v434
    %v458 = vpack.c.bf16 %v437, %v436
    %v459 = vpack.c.bf16 %v439, %v438
    %v460 = vpack.c.bf16 %v441, %v440
    %v461 = vpack.c.bf16 %v443, %v442
    %v462 = vpack.c.bf16 %v445, %v444
    %v463 = vpack.c.bf16 %v447, %v446
    %464 = vmatprep.subr.bf16.mxu0 0
    %465 = vmatpush1.bf16.msra.mxu0 %v456
    %466 = vmatprep.subr.bf16.mxu0 0
    %467 = vmatpush1.bf16.msra.mxu0 %v457
    %468 = vmatprep.subr.bf16.mxu0 0
    %469 = vmatpush1.bf16.msra.mxu0 %v458
    %470 = vmatprep.subr.bf16.mxu0 0
    %471 = vmatpush1.bf16.msra.mxu0 %v459
    %472 = vmatprep.subr.bf16.mxu0 0
    %473 = vmatpush1.bf16.msra.mxu0 %v460
    %474 = vmatprep.subr.bf16.mxu0 0
    %475 = vmatpush1.bf16.msra.mxu0 %v461
    %476 = vmatprep.subr.bf16.mxu0 0
    %477 = vmatpush1.bf16.msra.mxu0 %v462
    %478 = vmatprep.subr.bf16.mxu0 0
    %479 = vmatpush1.bf16.msra.mxu0 %v463
    %480 = vmatprep.subr.bf16.mxu0 0
    %481 = vmatpush1.bf16.msra.mxu0 0
    %482 = vmatprep.subr.bf16.mxu0 0
    %483 = vmatpush1.bf16.msra.mxu0 0
    %484 = vmatprep.subr.bf16.mxu0 0
    %485 = vmatpush1.bf16.msra.mxu0 0
    %486 = vmatprep.subr.bf16.mxu0 0
    %487 = vmatpush1.bf16.msra.mxu0 0
    %488 = vmatprep.subr.bf16.mxu0 0
    %489 = vmatpush1.bf16.msra.mxu0 0
    %490 = vmatprep.subr.bf16.mxu0 0
    %491 = vmatpush1.bf16.msra.mxu0 0
    %492 = vmatprep.subr.bf16.mxu0 0
    %493 = vmatpush1.bf16.msra.mxu0 0
    %494 = vmatprep.subr.bf16.mxu0 0
    %495 = vmatpush1.bf16.msra.mxu0 0
    %496 = vmatprep.mubr.bf16.mxu0 0
    %497 = vmatmul.mubr.bf16.gmra.mrb[0].mxu0 %v102
    %v498 = vpop.f32.mrb[0].mxu0
    %v499 = vadd.f32 0.0, %v498
    %v500 = vpop.f32.mrb[0].mxu0
    %v501 = vpop.f32.mrb[0].mxu0
    %v502 = vadd.f32 0.0, %v501
    %v503 = vpop.f32.mrb[0].mxu0
    %504 = vmatprep.mubr.bf16.mxu0 0
    %505 = vmatmul.mubr.bf16.gmra.mrb[0].mxu0 %v103
    %v506 = vpop.f32.mrb[0].mxu0
    %v507 = vadd.f32 0.0, %v506
    %v508 = vpop.f32.mrb[0].mxu0
    %v509 = vpop.f32.mrb[0].mxu0
    %v510 = vadd.f32 0.0, %v509
    %v511 = vpop.f32.mrb[0].mxu0
    %512 = vmatprep.mubr.bf16.mxu0 0
    %513 = vmatmul.mubr.bf16.gmra.mrb[0].mxu0 %v104
    %v514 = vpop.f32.mrb[0].mxu0
    %v515 = vadd.f32 0.0, %v514
    %v516 = vpop.f32.mrb[0].mxu0
    %v517 = vpop.f32.mrb[0].mxu0
    %v518 = vadd.f32 0.0, %v517
    %v519 = vpop.f32.mrb[0].mxu0
    %520 = vmatprep.mubr.bf16.mxu0 0
    %521 = vmatmul.mubr.bf16.gmra.mrb[0].mxu0 %v105
    %v522 = vpop.f32.mrb[0].mxu0
    %v523 = vadd.f32 0.0, %v522
    %v524 = vpop.f32.mrb[0].mxu0
    %v525 = vpop.f32.mrb[0].mxu0
    %v526 = vadd.f32 0.0, %v525
    %v527 = vpop.f32.mrb[0].mxu0
    %528 = vmatprep.mubr.bf16.mxu0 0
    %529 = vmatmul.mubr.bf16.gmra.mrb[0].mxu0 %v106
    %v530 = vpop.f32.mrb[0].mxu0
    %v531 = vadd.f32 0.0, %v530
    %v532 = vpop.f32.mrb[0].mxu0
    %v533 = vpop.f32.mrb[0].mxu0
    %v534 = vadd.f32 0.0, %v533
    %v535 = vpop.f32.mrb[0].mxu0
    %536 = vmatprep.mubr.bf16.mxu0 0
    %537 = vmatmul.mubr.bf16.gmra.mrb[0].mxu0 %v107
    %v538 = vpop.f32.mrb[0].mxu0
    %v539 = vadd.f32 0.0, %v538
    %v540 = vpop.f32.mrb[0].mxu0
    %v541 = vpop.f32.mrb[0].mxu0
    %v542 = vadd.f32 0.0, %v541
    %v543 = vpop.f32.mrb[0].mxu0
    %544 = vmatprep.mubr.bf16.mxu0 0
    %545 = vmatmul.mubr.bf16.gmra.mrb[0].mxu0 %v108
    %v546 = vpop.f32.mrb[0].mxu0
    %v547 = vadd.f32 0.0, %v546
    %v548 = vpop.f32.mrb[0].mxu0
    %v549 = vpop.f32.mrb[0].mxu0
    %v550 = vadd.f32 0.0, %v549
    %v551 = vpop.f32.mrb[0].mxu0
    %552 = vmatprep.mubr.bf16.mxu0 0
    %553 = vmatmul.mubr.bf16.gmra.mrb[0].mxu0 %v109
    %v554 = vpop.f32.mrb[0].mxu0
    %v555 = vadd.f32 0.0, %v554
    %v556 = vpop.f32.mrb[0].mxu0
    %v557 = vpop.f32.mrb[0].mxu0
    %v558 = vadd.f32 0.0, %v557
    %v559 = vpop.f32.mrb[0].mxu0
    %560 = vdwg.mxu0
    %561 = vmatprep.subr.mxu0 0.0
    %562 = vmatpush1.msra.mxu0 %v455
    %563 = vmatprep.subr.mxu0 0.0
    %564 = vmatpush1.msra.mxu0 0.0
    %565 = vmatprep.subr.mxu0 0.0
    %566 = vmatpush1.msra.mxu0 0.0
    %567 = vmatprep.subr.mxu0 0.0
    %568 = vmatpush1.msra.mxu0 0.0
    %569 = vmatprep.subr.mxu0 0.0
    %570 = vmatpush1.msra.mxu0 0.0
    %571 = vmatprep.subr.mxu0 0.0
    %572 = vmatpush1.msra.mxu0 0.0
    %573 = vmatprep.subr.mxu0 0.0
    %574 = vmatpush1.msra.mxu0 0.0
    %575 = vmatprep.subr.mxu0 0.0
    %576 = vmatpush1.msra.mxu0 0.0
    %577 = vmatprep.subr.mxu0 0.0
    %578 = vmatpush1.msra.mxu0 0.0
    %579 = vmatprep.subr.mxu0 0.0
    %580 = vmatpush1.msra.mxu0 0.0
    %581 = vmatprep.subr.mxu0 0.0
    %582 = vmatpush1.msra.mxu0 0.0
    %583 = vmatprep.subr.mxu0 0.0
    %584 = vmatpush1.msra.mxu0 0.0
    %585 = vmatprep.subr.mxu0 0.0
    %586 = vmatpush1.msra.mxu0 0.0
    %587 = vmatprep.subr.mxu0 0.0
    %588 = vmatpush1.msra.mxu0 0.0
    %589 = vmatprep.subr.mxu0 0.0
    %590 = vmatpush1.msra.mxu0 0.0
    %591 = vmatprep.subr.mxu0 0.0
    %592 = vmatpush1.msra.mxu0 0.0
    %593 = vmatprep.subr.mxu0 0.0
    %594 = vmatpush1.msra.mxu0 0.0
    %595 = vmatprep.subr.mxu0 0.0
    %596 = vmatpush1.msra.mxu0 0.0
    %597 = vmatprep.subr.mxu0 0.0
    %598 = vmatpush1.msra.mxu0 0.0
    %599 = vmatprep.subr.mxu0 0.0
    %600 = vmatpush1.msra.mxu0 0.0
    %601 = vmatprep.subr.mxu0 0.0
    %602 = vmatpush1.msra.mxu0 0.0
    %603 = vmatprep.subr.mxu0 0.0
    %604 = vmatpush1.msra.mxu0 0.0
    %605 = vmatprep.subr.mxu0 0.0
    %606 = vmatpush1.msra.mxu0 0.0
    %607 = vmatprep.subr.mxu0 0.0
    %608 = vmatpush1.msra.mxu0 0.0
    %609 = vmatprep.subr.mxu0 0.0
    %610 = vmatpush1.msra.mxu0 0.0
    %611 = vmatprep.subr.mxu0 0.0
    %612 = vmatpush1.msra.mxu0 0.0
    %613 = vmatprep.subr.mxu0 0.0
    %614 = vmatpush1.msra.mxu0 0.0
    %615 = vmatprep.subr.mxu0 0.0
    %616 = vmatpush1.msra.mxu0 0.0
    %617 = vmatprep.subr.mxu0 0.0
    %618 = vmatpush1.msra.mxu0 0.0
    %619 = vmatprep.subr.mxu0 0.0
    %620 = vmatpush1.msra.mxu0 0.0
    %621 = vmatprep.subr.mxu0 0.0
    %622 = vmatpush1.msra.mxu0 0.0
    %623 = vmatprep.subr.mxu0 0.0
    %624 = vmatpush1.msra.mxu0 0.0
    %625 = vmatprep.mubr.f32.mxu0 0.0
    %626 = vmatmul.mubr.f32.gmra.mrb[0].mxu0 %v217
    %v627 = vpop.f32.mrb[0].mxu0
    %v628 = vadd.f32 %v499, %v627
    %v629 = vpop.f32.mrb[0].mxu0
    %630 = vmatprep.mubr.f32.mxu0 0.0
    %631 = vmatmul.mubr.f32.gmra.mrb[0].mxu0 %v220
    %v632 = vpop.f32.mrb[0].mxu0
    %v633 = vadd.f32 %v502, %v632
    %v634 = vpop.f32.mrb[0].mxu0
    %635 = vmatprep.mubr.f32.mxu0 0.0
    %636 = vmatmul.mubr.f32.gmra.mrb[0].mxu0 %v223
    %v637 = vpop.f32.mrb[0].mxu0
    %v638 = vadd.f32 %v507, %v637
    %v639 = vpop.f32.mrb[0].mxu0
    %640 = vmatprep.mubr.f32.mxu0 0.0
    %641 = vmatmul.mubr.f32.gmra.mrb[0].mxu0 %v226
    %v642 = vpop.f32.mrb[0].mxu0
    %v643 = vadd.f32 %v510, %v642
    %v644 = vpop.f32.mrb[0].mxu0
    %645 = vmatprep.mubr.f32.mxu0 0.0
    %646 = vmatmul.mubr.f32.gmra.mrb[0].mxu0 %v229
    %v647 = vpop.f32.mrb[0].mxu0
    %v648 = vadd.f32 %v515, %v647
    %v649 = vpop.f32.mrb[0].mxu0
    %650 = vmatprep.mubr.f32.mxu0 0.0
    %651 = vmatmul.mubr.f32.gmra.mrb[0].mxu0 %v232
    %v652 = vpop.f32.mrb[0].mxu0
    %v653 = vadd.f32 %v518, %v652
    %v654 = vpop.f32.mrb[0].mxu0
    %655 = vmatprep.mubr.f32.mxu0 0.0
    %656 = vmatmul.mubr.f32.gmra.mrb[0].mxu0 %v235
    %v657 = vpop.f32.mrb[0].mxu0
    %v658 = vadd.f32 %v523, %v657
    %v659 = vpop.f32.mrb[0].mxu0
    %660 = vmatprep.mubr.f32.mxu0 0.0
    %661 = vmatmul.mubr.f32.gmra.mrb[0].mxu0 %v238
    %v662 = vpop.f32.mrb[0].mxu0
    %v663 = vadd.f32 %v526, %v662
    %v664 = vpop.f32.mrb[0].mxu0
    %665 = vmatprep.mubr.f32.mxu0 0.0
    %666 = vmatmul.mubr.f32.gmra.mrb[0].mxu0 %v241
    %v667 = vpop.f32.mrb[0].mxu0
    %v668 = vadd.f32 %v531, %v667
    %v669 = vpop.f32.mrb[0].mxu0
    %670 = vmatprep.mubr.f32.mxu0 0.0
    %671 = vmatmul.mubr.f32.gmra.mrb[0].mxu0 %v244
    %v672 = vpop.f32.mrb[0].mxu0
    %v673 = vadd.f32 %v534, %v672
    %v674 = vpop.f32.mrb[0].mxu0
    %675 = vmatprep.mubr.f32.mxu0 0.0
    %676 = vmatmul.mubr.f32.gmra.mrb[0].mxu0 %v247
    %v677 = vpop.f32.mrb[0].mxu0
    %v678 = vadd.f32 %v539, %v677
    %v679 = vpop.f32.mrb[0].mxu0
    %680 = vmatprep.mubr.f32.mxu0 0.0
    %681 = vmatmul.mubr.f32.gmra.mrb[0].mxu0 %v250
    %v682 = vpop.f32.mrb[0].mxu0
    %v683 = vadd.f32 %v542, %v682
    %v684 = vpop.f32.mrb[0].mxu0
    %685 = vmatprep.mubr.f32.mxu0 0.0
    %686 = vmatmul.mubr.f32.gmra.mrb[0].mxu0 %v253
    %v687 = vpop.f32.mrb[0].mxu0
    %v688 = vadd.f32 %v547, %v687
    %v689 = vpop.f32.mrb[0].mxu0
    %690 = vmatprep.mubr.f32.mxu0 0.0
    %691 = vmatmul.mubr.f32.gmra.mrb[0].mxu0 %v256
    %v692 = vpop.f32.mrb[0].mxu0
    %v693 = vadd.f32 %v550, %v692
    %v694 = vpop.f32.mrb[0].mxu0
    %695 = vmatprep.mubr.f32.mxu0 0.0
    %696 = vmatmul.mubr.f32.gmra.mrb[0].mxu0 %v259
    %v697 = vpop.f32.mrb[0].mxu0
    %v698 = vadd.f32 %v555, %v697
    %v699 = vpop.f32.mrb[0].mxu0
    %700 = vmatprep.mubr.f32.mxu0 0.0
    %701 = vmatmul.mubr.f32.gmra.mrb[0].mxu0 %v262
    %v702 = vpop.f32.mrb[0].mxu0
    %v703 = vadd.f32 %v558, %v702
    %v704 = vpop.f32.mrb[0].mxu0
    %705 = vdwg.mxu0
    %v706 = vtanh.pop %v628
    %v707 = vtanh.pop %v633
    %v708 = vtanh.pop %v638
    %v709 = vtanh.pop %v643
    %v710 = vtanh.pop %v648
    %v711 = vtanh.pop %v653
    %v712 = vtanh.pop %v658
    %v713 = vtanh.pop %v663
    %v714 = vtanh.pop %v668
    %v715 = vtanh.pop %v673
    %v716 = vtanh.pop %v678
    %v717 = vtanh.pop %v683
    %v718 = vtanh.pop %v688
    %v719 = vtanh.pop %v693
    %v720 = vtanh.pop %v698
    %v721 = vtanh.pop %v703
    %vm722 = vcmp.gt.s32.totalorder %v27, 1
    %v723 = vsel %vm722, 1, 0
    %v724 = vlaneseq
    %v725 = vshrl.u32 %v724, 7
    %v726 = vsub.s32 0, %v725
    %v727 = vrot.slane %v723, %v726
    %vm728 = vcmp.eq.s32.totalorder %v727, 1
    %v729 = vsel %vm728, %v706, %v432
    %v730 = vsel %vm728, %v707, %v433
    %v731 = vsel %vm728, %v708, %v434
    %v732 = vsel %vm728, %v709, %v435
    %v733 = vsel %vm728, %v710, %v436
    %v734 = vsel %vm728, %v711, %v437
    %v735 = vsel %vm728, %v712, %v438
    %v736 = vsel %vm728, %v713, %v439
    %v737 = vsel %vm728, %v714, %v440
    %v738 = vsel %vm728, %v715, %v441
    %v739 = vsel %vm728, %v716, %v442
    %v740 = vsel %vm728, %v717, %v443
    %v741 = vsel %vm728, %v718, %v444
    %v742 = vsel %vm728, %v719, %v445
    %v743 = vsel %vm728, %v720, %v446
    %v744 = vsel %vm728, %v721, %v447
    %v745 = vld [vmem:[%s0 + $0x2] sm:$0x1]
    %v746 = vlaneseq
    %v747 = vshrl.u32 %v746, 7
    %v748 = vsub.s32 0, %v747
    %v749 = vrot.slane %v745, %v748
    %vm750 = vcmp.eq.s32.totalorder %v30, %v749
    %v751 = vsel %vm750, 1, 0
    %v752 = vcvt.s32.f32 %v751
    %v753 = vpack.c.bf16 %v730, %v729
    %v754 = vpack.c.bf16 %v732, %v731
    %v755 = vpack.c.bf16 %v734, %v733
    %v756 = vpack.c.bf16 %v736, %v735
    %v757 = vpack.c.bf16 %v738, %v737
    %v758 = vpack.c.bf16 %v740, %v739
    %v759 = vpack.c.bf16 %v742, %v741
    %v760 = vpack.c.bf16 %v744, %v743
    %761 = vmatprep.subr.bf16.mxu0 0
    %762 = vmatpush1.bf16.msra.mxu0 %v753
    %763 = vmatprep.subr.bf16.mxu0 0
    %764 = vmatpush1.bf16.msra.mxu0 %v754
    %765 = vmatprep.subr.bf16.mxu0 0
    %766 = vmatpush1.bf16.msra.mxu0 %v755
    %767 = vmatprep.subr.bf16.mxu0 0
    %768 = vmatpush1.bf16.msra.mxu0 %v756
    %769 = vmatprep.subr.bf16.mxu0 0
    %770 = vmatpush1.bf16.msra.mxu0 %v757
    %771 = vmatprep.subr.bf16.mxu0 0
    %772 = vmatpush1.bf16.msra.mxu0 %v758
    %773 = vmatprep.subr.bf16.mxu0 0
    %774 = vmatpush1.bf16.msra.mxu0 %v759
    %775 = vmatprep.subr.bf16.mxu0 0
    %776 = vmatpush1.bf16.msra.mxu0 %v760
    %777 = vmatprep.subr.bf16.mxu0 0
    %778 = vmatpush1.bf16.msra.mxu0 0
    %779 = vmatprep.subr.bf16.mxu0 0
    %780 = vmatpush1.bf16.msra.mxu0 0
    %781 = vmatprep.subr.bf16.mxu0 0
    %782 = vmatpush1.bf16.msra.mxu0 0
    %783 = vmatprep.subr.bf16.mxu0 0
    %784 = vmatpush1.bf16.msra.mxu0 0
    %785 = vmatprep.subr.bf16.mxu0 0
    %786 = vmatpush1.bf16.msra.mxu0 0
    %787 = vmatprep.subr.bf16.mxu0 0
    %788 = vmatpush1.bf16.msra.mxu0 0
    %789 = vmatprep.subr.bf16.mxu0 0
    %790 = vmatpush1.bf16.msra.mxu0 0
    %791 = vmatprep.subr.bf16.mxu0 0
    %792 = vmatpush1.bf16.msra.mxu0 0
    %793 = vmatprep.mubr.bf16.mxu0 0
    %794 = vmatmul.mubr.bf16.gmra.mrb[0].mxu0 %v102
    %v795 = vpop.f32.mrb[0].mxu0
    %v796 = vadd.f32 0.0, %v795
    %v797 = vpop.f32.mrb[0].mxu0
    %v798 = vpop.f32.mrb[0].mxu0
    %v799 = vadd.f32 0.0, %v798
    %v800 = vpop.f32.mrb[0].mxu0
    %801 = vmatprep.mubr.bf16.mxu0 0
    %802 = vmatmul.mubr.bf16.gmra.mrb[0].mxu0 %v103
    %v803 = vpop.f32.mrb[0].mxu0
    %v804 = vadd.f32 0.0, %v803
    %v805 = vpop.f32.mrb[0].mxu0
    %v806 = vpop.f32.mrb[0].mxu0
    %v807 = vadd.f32 0.0, %v806
    %v808 = vpop.f32.mrb[0].mxu0
    %809 = vmatprep.mubr.bf16.mxu0 0
    %810 = vmatmul.mubr.bf16.gmra.mrb[0].mxu0 %v104
    %v811 = vpop.f32.mrb[0].mxu0
    %v812 = vadd.f32 0.0, %v811
    %v813 = vpop.f32.mrb[0].mxu0
    %v814 = vpop.f32.mrb[0].mxu0
    %v815 = vadd.f32 0.0, %v814
    %v816 = vpop.f32.mrb[0].mxu0
    %817 = vmatprep.mubr.bf16.mxu0 0
    %818 = vmatmul.mubr.bf16.gmra.mrb[0].mxu0 %v105
    %v819 = vpop.f32.mrb[0].mxu0
    %v820 = vadd.f32 0.0, %v819
    %v821 = vpop.f32.mrb[0].mxu0
    %v822 = vpop.f32.mrb[0].mxu0
    %v823 = vadd.f32 0.0, %v822
    %v824 = vpop.f32.mrb[0].mxu0
    %825 = vmatprep.mubr.bf16.mxu0 0
    %826 = vmatmul.mubr.bf16.gmra.mrb[0].mxu0 %v106
    %v827 = vpop.f32.mrb[0].mxu0
    %v828 = vadd.f32 0.0, %v827
    %v829 = vpop.f32.mrb[0].mxu0
    %v830 = vpop.f32.mrb[0].mxu0
    %v831 = vadd.f32 0.0, %v830
    %v832 = vpop.f32.mrb[0].mxu0
    %833 = vmatprep.mubr.bf16.mxu0 0
    %834 = vmatmul.mubr.bf16.gmra.mrb[0].mxu0 %v107
    %v835 = vpop.f32.mrb[0].mxu0
    %v836 = vadd.f32 0.0, %v835
    %v837 = vpop.f32.mrb[0].mxu0
    %v838 = vpop.f32.mrb[0].mxu0
    %v839 = vadd.f32 0.0, %v838
    %v840 = vpop.f32.mrb[0].mxu0
    %841 = vmatprep.mubr.bf16.mxu0 0
    %842 = vmatmul.mubr.bf16.gmra.mrb[0].mxu0 %v108
    %v843 = vpop.f32.mrb[0].mxu0
    %v844 = vadd.f32 0.0, %v843
    %v845 = vpop.f32.mrb[0].mxu0
    %v846 = vpop.f32.mrb[0].mxu0
    %v847 = vadd.f32 0.0, %v846
    %v848 = vpop.f32.mrb[0].mxu0
    %849 = vmatprep.mubr.bf16.mxu0 0
    %850 = vmatmul.mubr.bf16.gmra.mrb[0].mxu0 %v109
    %v851 = vpop.f32.mrb[0].mxu0
    %v852 = vadd.f32 0.0, %v851
    %v853 = vpop.f32.mrb[0].mxu0
    %v854 = vpop.f32.mrb[0].mxu0
    %v855 = vadd.f32 0.0, %v854
    %v856 = vpop.f32.mrb[0].mxu0
    %857 = vdwg.mxu0
    %858 = vmatprep.subr.mxu0 0.0
    %859 = vmatpush1.msra.mxu0 %v752
    %860 = vmatprep.subr.mxu0 0.0
    %861 = vmatpush1.msra.mxu0 0.0
    %862 = vmatprep.subr.mxu0 0.0
    %863 = vmatpush1.msra.mxu0 0.0
    %864 = vmatprep.subr.mxu0 0.0
    %865 = vmatpush1.msra.mxu0 0.0
    %866 = vmatprep.subr.mxu0 0.0
    %867 = vmatpush1.msra.mxu0 0.0
    %868 = vmatprep.subr.mxu0 0.0
    %869 = vmatpush1.msra.mxu0 0.0
    %870 = vmatprep.subr.mxu0 0.0
    %871 = vmatpush1.msra.mxu0 0.0
    %872 = vmatprep.subr.mxu0 0.0
    %873 = vmatpush1.msra.mxu0 0.0
    %874 = vmatprep.subr.mxu0 0.0
    %875 = vmatpush1.msra.mxu0 0.0
    %876 = vmatprep.subr.mxu0 0.0
    %877 = vmatpush1.msra.mxu0 0.0
    %878 = vmatprep.subr.mxu0 0.0
    %879 = vmatpush1.msra.mxu0 0.0
    %880 = vmatprep.subr.mxu0 0.0
    %881 = vmatpush1.msra.mxu0 0.0
    %882 = vmatprep.subr.mxu0 0.0
    %883 = vmatpush1.msra.mxu0 0.0
    %884 = vmatprep.subr.mxu0 0.0
    %885 = vmatpush1.msra.mxu0 0.0
    %886 = vmatprep.subr.mxu0 0.0
    %887 = vmatpush1.msra.mxu0 0.0
    %888 = vmatprep.subr.mxu0 0.0
    %889 = vmatpush1.msra.mxu0 0.0
    %890 = vmatprep.subr.mxu0 0.0
    %891 = vmatpush1.msra.mxu0 0.0
    %892 = vmatprep.subr.mxu0 0.0
    %893 = vmatpush1.msra.mxu0 0.0
    %894 = vmatprep.subr.mxu0 0.0
    %895 = vmatpush1.msra.mxu0 0.0
    %896 = vmatprep.subr.mxu0 0.0
    %897 = vmatpush1.msra.mxu0 0.0
    %898 = vmatprep.subr.mxu0 0.0
    %899 = vmatpush1.msra.mxu0 0.0
    %900 = vmatprep.subr.mxu0 0.0
    %901 = vmatpush1.msra.mxu0 0.0
    %902 = vmatprep.subr.mxu0 0.0
    %903 = vmatpush1.msra.mxu0 0.0
    %904 = vmatprep.subr.mxu0 0.0
    %905 = vmatpush1.msra.mxu0 0.0
    %906 = vmatprep.subr.mxu0 0.0
    %907 = vmatpush1.msra.mxu0 0.0
    %908 = vmatprep.subr.mxu0 0.0
    %909 = vmatpush1.msra.mxu0 0.0
    %910 = vmatprep.subr.mxu0 0.0
    %911 = vmatpush1.msra.mxu0 0.0
    %912 = vmatprep.subr.mxu0 0.0
    %913 = vmatpush1.msra.mxu0 0.0
    %914 = vmatprep.subr.mxu0 0.0
    %915 = vmatpush1.msra.mxu0 0.0
    %916 = vmatprep.subr.mxu0 0.0
    %917 = vmatpush1.msra.mxu0 0.0
    %918 = vmatprep.subr.mxu0 0.0
    %919 = vmatpush1.msra.mxu0 0.0
    %920 = vmatprep.subr.mxu0 0.0
    %921 = vmatpush1.msra.mxu0 0.0
    %922 = vmatprep.mubr.f32.mxu0 0.0
    %923 = vmatmul.mubr.f32.gmra.mrb[0].mxu0 %v217
    %v924 = vpop.f32.mrb[0].mxu0
    %v925 = vadd.f32 %v796, %v924
    %v926 = vpop.f32.mrb[0].mxu0
    %927 = vmatprep.mubr.f32.mxu0 0.0
    %928 = vmatmul.mubr.f32.gmra.mrb[0].mxu0 %v220
    %v929 = vpop.f32.mrb[0].mxu0
    %v930 = vadd.f32 %v799, %v929
    %v931 = vpop.f32.mrb[0].mxu0
    %932 = vmatprep.mubr.f32.mxu0 0.0
    %933 = vmatmul.mubr.f32.gmra.mrb[0].mxu0 %v223
    %v934 = vpop.f32.mrb[0].mxu0
    %v935 = vadd.f32 %v804, %v934
    %v936 = vpop.f32.mrb[0].mxu0
    %937 = vmatprep.mubr.f32.mxu0 0.0
    %938 = vmatmul.mubr.f32.gmra.mrb[0].mxu0 %v226
    %v939 = vpop.f32.mrb[0].mxu0
    %v940 = vadd.f32 %v807, %v939
    %v941 = vpop.f32.mrb[0].mxu0
    %942 = vmatprep.mubr.f32.mxu0 0.0
    %943 = vmatmul.mubr.f32.gmra.mrb[0].mxu0 %v229
    %v944 = vpop.f32.mrb[0].mxu0
    %v945 = vadd.f32 %v812, %v944
    %v946 = vpop.f32.mrb[0].mxu0
    %947 = vmatprep.mubr.f32.mxu0 0.0
    %948 = vmatmul.mubr.f32.gmra.mrb[0].mxu0 %v232
    %v949 = vpop.f32.mrb[0].mxu0
    %v950 = vadd.f32 %v815, %v949
    %v951 = vpop.f32.mrb[0].mxu0
    %952 = vmatprep.mubr.f32.mxu0 0.0
    %953 = vmatmul.mubr.f32.gmra.mrb[0].mxu0 %v235
    %v954 = vpop.f32.mrb[0].mxu0
    %v955 = vadd.f32 %v820, %v954
    %v956 = vpop.f32.mrb[0].mxu0
    %957 = vmatprep.mubr.f32.mxu0 0.0
    %958 = vmatmul.mubr.f32.gmra.mrb[0].mxu0 %v238
    %v959 = vpop.f32.mrb[0].mxu0
    %v960 = vadd.f32 %v823, %v959
    %v961 = vpop.f32.mrb[0].mxu0
    %962 = vmatprep.mubr.f32.mxu0 0.0
    %963 = vmatmul.mubr.f32.gmra.mrb[0].mxu0 %v241
    %v964 = vpop.f32.mrb[0].mxu0
    %v965 = vadd.f32 %v828, %v964
    %v966 = vpop.f32.mrb[0].mxu0
    %967 = vmatprep.mubr.f32.mxu0 0.0
    %968 = vmatmul.mubr.f32.gmra.mrb[0].mxu0 %v244
    %v969 = vpop.f32.mrb[0].mxu0
    %v970 = vadd.f32 %v831, %v969
    %v971 = vpop.f32.mrb[0].mxu0
    %972 = vmatprep.mubr.f32.mxu0 0.0
    %973 = vmatmul.mubr.f32.gmra.mrb[0].mxu0 %v247
    %v974 = vpop.f32.mrb[0].mxu0
    %v975 = vadd.f32 %v836, %v974
    %v976 = vpop.f32.mrb[0].mxu0
    %977 = vmatprep.mubr.f32.mxu0 0.0
    %978 = vmatmul.mubr.f32.gmra.mrb[0].mxu0 %v250
    %v979 = vpop.f32.mrb[0].mxu0
    %v980 = vadd.f32 %v839, %v979
    %v981 = vpop.f32.mrb[0].mxu0
    %982 = vmatprep.mubr.f32.mxu0 0.0
    %983 = vmatmul.mubr.f32.gmra.mrb[0].mxu0 %v253
    %v984 = vpop.f32.mrb[0].mxu0
    %v985 = vadd.f32 %v844, %v984
    %v986 = vpop.f32.mrb[0].mxu0
    %987 = vmatprep.mubr.f32.mxu0 0.0
    %988 = vmatmul.mubr.f32.gmra.mrb[0].mxu0 %v256
    %v989 = vpop.f32.mrb[0].mxu0
    %v990 = vadd.f32 %v847, %v989
    %v991 = vpop.f32.mrb[0].mxu0
    %992 = vmatprep.mubr.f32.mxu0 0.0
    %993 = vmatmul.mubr.f32.gmra.mrb[0].mxu0 %v259
    %v994 = vpop.f32.mrb[0].mxu0
    %v995 = vadd.f32 %v852, %v994
    %v996 = vpop.f32.mrb[0].mxu0
    %997 = vmatprep.mubr.f32.mxu0 0.0
    %998 = vmatmul.mubr.f32.gmra.mrb[0].mxu0 %v262
    %v999 = vpop.f32.mrb[0].mxu0
    %v1000 = vadd.f32 %v855, %v999
    %v1001 = vpop.f32.mrb[0].mxu0
    %1002 = vdwg.mxu0
    %v1003 = vtanh.pop %v925
    %v1004 = vtanh.pop %v930
    %v1005 = vtanh.pop %v935
    %v1006 = vtanh.pop %v940
    %v1007 = vtanh.pop %v945
    %v1008 = vtanh.pop %v950
    %v1009 = vtanh.pop %v955
    %v1010 = vtanh.pop %v960
    %v1011 = vtanh.pop %v965
    %v1012 = vtanh.pop %v970
    %v1013 = vtanh.pop %v975
    %v1014 = vtanh.pop %v980
    %v1015 = vtanh.pop %v985
    %v1016 = vtanh.pop %v990
    %v1017 = vtanh.pop %v995
    %v1018 = vtanh.pop %v1000
    %vm1019 = vcmp.gt.s32.totalorder %v27, 2
    %v1020 = vsel %vm1019, 1, 0
    %v1021 = vlaneseq
    %v1022 = vshrl.u32 %v1021, 7
    %v1023 = vsub.s32 0, %v1022
    %v1024 = vrot.slane %v1020, %v1023
    %vm1025 = vcmp.eq.s32.totalorder %v1024, 1
    %v1026 = vsel %vm1025, %v1003, %v729
    %v1027 = vsel %vm1025, %v1004, %v730
    %v1028 = vsel %vm1025, %v1005, %v731
    %v1029 = vsel %vm1025, %v1006, %v732
    %v1030 = vsel %vm1025, %v1007, %v733
    %v1031 = vsel %vm1025, %v1008, %v734
    %v1032 = vsel %vm1025, %v1009, %v735
    %v1033 = vsel %vm1025, %v1010, %v736
    %v1034 = vsel %vm1025, %v1011, %v737
    %v1035 = vsel %vm1025, %v1012, %v738
    %v1036 = vsel %vm1025, %v1013, %v739
    %v1037 = vsel %vm1025, %v1014, %v740
    %v1038 = vsel %vm1025, %v1015, %v741
    %v1039 = vsel %vm1025, %v1016, %v742
    %v1040 = vsel %vm1025, %v1017, %v743
    %v1041 = vsel %vm1025, %v1018, %v744
    %v1042 = vld [vmem:[%s0 + $0x3] sm:$0x1]
    %v1043 = vlaneseq
    %v1044 = vshrl.u32 %v1043, 7
    %v1045 = vsub.s32 0, %v1044
    %v1046 = vrot.slane %v1042, %v1045
    %vm1047 = vcmp.eq.s32.totalorder %v30, %v1046
    %v1048 = vsel %vm1047, 1, 0
    %v1049 = vcvt.s32.f32 %v1048
    %v1050 = vpack.c.bf16 %v1027, %v1026
    %v1051 = vpack.c.bf16 %v1029, %v1028
    %v1052 = vpack.c.bf16 %v1031, %v1030
    %v1053 = vpack.c.bf16 %v1033, %v1032
    %v1054 = vpack.c.bf16 %v1035, %v1034
    %v1055 = vpack.c.bf16 %v1037, %v1036
    %v1056 = vpack.c.bf16 %v1039, %v1038
    %v1057 = vpack.c.bf16 %v1041, %v1040
    %1058 = vmatprep.subr.bf16.mxu0 0
    %1059 = vmatpush1.bf16.msra.mxu0 %v1050
    %1060 = vmatprep.subr.bf16.mxu0 0
    %1061 = vmatpush1.bf16.msra.mxu0 %v1051
    %1062 = vmatprep.subr.bf16.mxu0 0
    %1063 = vmatpush1.bf16.msra.mxu0 %v1052
    %1064 = vmatprep.subr.bf16.mxu0 0
    %1065 = vmatpush1.bf16.msra.mxu0 %v1053
    %1066 = vmatprep.subr.bf16.mxu0 0
    %1067 = vmatpush1.bf16.msra.mxu0 %v1054
    %1068 = vmatprep.subr.bf16.mxu0 0
    %1069 = vmatpush1.bf16.msra.mxu0 %v1055
    %1070 = vmatprep.subr.bf16.mxu0 0
    %1071 = vmatpush1.bf16.msra.mxu0 %v1056
    %1072 = vmatprep.subr.bf16.mxu0 0
    %1073 = vmatpush1.bf16.msra.mxu0 %v1057
    %1074 = vmatprep.subr.bf16.mxu0 0
    %1075 = vmatpush1.bf16.msra.mxu0 0
    %1076 = vmatprep.subr.bf16.mxu0 0
    %1077 = vmatpush1.bf16.msra.mxu0 0
    %1078 = vmatprep.subr.bf16.mxu0 0
    %1079 = vmatpush1.bf16.msra.mxu0 0
    %1080 = vmatprep.subr.bf16.mxu0 0
    %1081 = vmatpush1.bf16.msra.mxu0 0
    %1082 = vmatprep.subr.bf16.mxu0 0
    %1083 = vmatpush1.bf16.msra.mxu0 0
    %1084 = vmatprep.subr.bf16.mxu0 0
    %1085 = vmatpush1.bf16.msra.mxu0 0
    %1086 = vmatprep.subr.bf16.mxu0 0
    %1087 = vmatpush1.bf16.msra.mxu0 0
    %1088 = vmatprep.subr.bf16.mxu0 0
    %1089 = vmatpush1.bf16.msra.mxu0 0
    %1090 = vmatprep.mubr.bf16.mxu0 0
    %1091 = vmatmul.mubr.bf16.gmra.mrb[0].mxu0 %v102
    %v1092 = vpop.f32.mrb[0].mxu0
    %v1093 = vadd.f32 0.0, %v1092
    %v1094 = vpop.f32.mrb[0].mxu0
    %v1095 = vpop.f32.mrb[0].mxu0
    %v1096 = vadd.f32 0.0, %v1095
    %v1097 = vpop.f32.mrb[0].mxu0
    %1098 = vmatprep.mubr.bf16.mxu0 0
    %1099 = vmatmul.mubr.bf16.gmra.mrb[0].mxu0 %v103
    %v1100 = vpop.f32.mrb[0].mxu0
    %v1101 = vadd.f32 0.0, %v1100
    %v1102 = vpop.f32.mrb[0].mxu0
    %v1103 = vpop.f32.mrb[0].mxu0
    %v1104 = vadd.f32 0.0, %v1103
    %v1105 = vpop.f32.mrb[0].mxu0
    %1106 = vmatprep.mubr.bf16.mxu0 0
    %1107 = vmatmul.mubr.bf16.gmra.mrb[0].mxu0 %v104
    %v1108 = vpop.f32.mrb[0].mxu0
    %v1109 = vadd.f32 0.0, %v1108
    %v1110 = vpop.f32.mrb[0].mxu0
    %v1111 = vpop.f32.mrb[0].mxu0
    %v1112 = vadd.f32 0.0, %v1111
    %v1113 = vpop.f32.mrb[0].mxu0
    %1114 = vmatprep.mubr.bf16.mxu0 0
    %1115 = vmatmul.mubr.bf16.gmra.mrb[0].mxu0 %v105
    %v1116 = vpop.f32.mrb[0].mxu0
    %v1117 = vadd.f32 0.0, %v1116
    %v1118 = vpop.f32.mrb[0].mxu0
    %v1119 = vpop.f32.mrb[0].mxu0
    %v1120 = vadd.f32 0.0, %v1119
    %v1121 = vpop.f32.mrb[0].mxu0
    %1122 = vmatprep.mubr.bf16.mxu0 0
    %1123 = vmatmul.mubr.bf16.gmra.mrb[0].mxu0 %v106
    %v1124 = vpop.f32.mrb[0].mxu0
    %v1125 = vadd.f32 0.0, %v1124
    %v1126 = vpop.f32.mrb[0].mxu0
    %v1127 = vpop.f32.mrb[0].mxu0
    %v1128 = vadd.f32 0.0, %v1127
    %v1129 = vpop.f32.mrb[0].mxu0
    %1130 = vmatprep.mubr.bf16.mxu0 0
    %1131 = vmatmul.mubr.bf16.gmra.mrb[0].mxu0 %v107
    %v1132 = vpop.f32.mrb[0].mxu0
    %v1133 = vadd.f32 0.0, %v1132
    %v1134 = vpop.f32.mrb[0].mxu0
    %v1135 = vpop.f32.mrb[0].mxu0
    %v1136 = vadd.f32 0.0, %v1135
    %v1137 = vpop.f32.mrb[0].mxu0
    %1138 = vmatprep.mubr.bf16.mxu0 0
    %1139 = vmatmul.mubr.bf16.gmra.mrb[0].mxu0 %v108
    %v1140 = vpop.f32.mrb[0].mxu0
    %v1141 = vadd.f32 0.0, %v1140
    %v1142 = vpop.f32.mrb[0].mxu0
    %v1143 = vpop.f32.mrb[0].mxu0
    %v1144 = vadd.f32 0.0, %v1143
    %v1145 = vpop.f32.mrb[0].mxu0
    %1146 = vmatprep.mubr.bf16.mxu0 0
    %1147 = vmatmul.mubr.bf16.gmra.mrb[0].mxu0 %v109
    %v1148 = vpop.f32.mrb[0].mxu0
    %v1149 = vadd.f32 0.0, %v1148
    %v1150 = vpop.f32.mrb[0].mxu0
    %v1151 = vpop.f32.mrb[0].mxu0
    %v1152 = vadd.f32 0.0, %v1151
    %v1153 = vpop.f32.mrb[0].mxu0
    %1154 = vdwg.mxu0
    %1155 = vmatprep.subr.mxu0 0.0
    %1156 = vmatpush1.msra.mxu0 %v1049
    %1157 = vmatprep.subr.mxu0 0.0
    %1158 = vmatpush1.msra.mxu0 0.0
    %1159 = vmatprep.subr.mxu0 0.0
    %1160 = vmatpush1.msra.mxu0 0.0
    %1161 = vmatprep.subr.mxu0 0.0
    %1162 = vmatpush1.msra.mxu0 0.0
    %1163 = vmatprep.subr.mxu0 0.0
    %1164 = vmatpush1.msra.mxu0 0.0
    %1165 = vmatprep.subr.mxu0 0.0
    %1166 = vmatpush1.msra.mxu0 0.0
    %1167 = vmatprep.subr.mxu0 0.0
    %1168 = vmatpush1.msra.mxu0 0.0
    %1169 = vmatprep.subr.mxu0 0.0
    %1170 = vmatpush1.msra.mxu0 0.0
    %1171 = vmatprep.subr.mxu0 0.0
    %1172 = vmatpush1.msra.mxu0 0.0
    %1173 = vmatprep.subr.mxu0 0.0
    %1174 = vmatpush1.msra.mxu0 0.0
    %1175 = vmatprep.subr.mxu0 0.0
    %1176 = vmatpush1.msra.mxu0 0.0
    %1177 = vmatprep.subr.mxu0 0.0
    %1178 = vmatpush1.msra.mxu0 0.0
    %1179 = vmatprep.subr.mxu0 0.0
    %1180 = vmatpush1.msra.mxu0 0.0
    %1181 = vmatprep.subr.mxu0 0.0
    %1182 = vmatpush1.msra.mxu0 0.0
    %1183 = vmatprep.subr.mxu0 0.0
    %1184 = vmatpush1.msra.mxu0 0.0
    %1185 = vmatprep.subr.mxu0 0.0
    %1186 = vmatpush1.msra.mxu0 0.0
    %1187 = vmatprep.subr.mxu0 0.0
    %1188 = vmatpush1.msra.mxu0 0.0
    %1189 = vmatprep.subr.mxu0 0.0
    %1190 = vmatpush1.msra.mxu0 0.0
    %1191 = vmatprep.subr.mxu0 0.0
    %1192 = vmatpush1.msra.mxu0 0.0
    %1193 = vmatprep.subr.mxu0 0.0
    %1194 = vmatpush1.msra.mxu0 0.0
    %1195 = vmatprep.subr.mxu0 0.0
    %1196 = vmatpush1.msra.mxu0 0.0
    %1197 = vmatprep.subr.mxu0 0.0
    %1198 = vmatpush1.msra.mxu0 0.0
    %1199 = vmatprep.subr.mxu0 0.0
    %1200 = vmatpush1.msra.mxu0 0.0
    %1201 = vmatprep.subr.mxu0 0.0
    %1202 = vmatpush1.msra.mxu0 0.0
    %1203 = vmatprep.subr.mxu0 0.0
    %1204 = vmatpush1.msra.mxu0 0.0
    %1205 = vmatprep.subr.mxu0 0.0
    %1206 = vmatpush1.msra.mxu0 0.0
    %1207 = vmatprep.subr.mxu0 0.0
    %1208 = vmatpush1.msra.mxu0 0.0
    %1209 = vmatprep.subr.mxu0 0.0
    %1210 = vmatpush1.msra.mxu0 0.0
    %1211 = vmatprep.subr.mxu0 0.0
    %1212 = vmatpush1.msra.mxu0 0.0
    %1213 = vmatprep.subr.mxu0 0.0
    %1214 = vmatpush1.msra.mxu0 0.0
    %1215 = vmatprep.subr.mxu0 0.0
    %1216 = vmatpush1.msra.mxu0 0.0
    %1217 = vmatprep.subr.mxu0 0.0
    %1218 = vmatpush1.msra.mxu0 0.0
    %1219 = vmatprep.mubr.f32.mxu0 0.0
    %1220 = vmatmul.mubr.f32.gmra.mrb[0].mxu0 %v217
    %v1221 = vpop.f32.mrb[0].mxu0
    %v1222 = vadd.f32 %v1093, %v1221
    %v1223 = vpop.f32.mrb[0].mxu0
    %1224 = vmatprep.mubr.f32.mxu0 0.0
    %1225 = vmatmul.mubr.f32.gmra.mrb[0].mxu0 %v220
    %v1226 = vpop.f32.mrb[0].mxu0
    %v1227 = vadd.f32 %v1096, %v1226
    %v1228 = vpop.f32.mrb[0].mxu0
    %1229 = vmatprep.mubr.f32.mxu0 0.0
    %1230 = vmatmul.mubr.f32.gmra.mrb[0].mxu0 %v223
    %v1231 = vpop.f32.mrb[0].mxu0
    %v1232 = vadd.f32 %v1101, %v1231
    %v1233 = vpop.f32.mrb[0].mxu0
    %1234 = vmatprep.mubr.f32.mxu0 0.0
    %1235 = vmatmul.mubr.f32.gmra.mrb[0].mxu0 %v226
    %v1236 = vpop.f32.mrb[0].mxu0
    %v1237 = vadd.f32 %v1104, %v1236
    %v1238 = vpop.f32.mrb[0].mxu0
    %1239 = vmatprep.mubr.f32.mxu0 0.0
    %1240 = vmatmul.mubr.f32.gmra.mrb[0].mxu0 %v229
    %v1241 = vpop.f32.mrb[0].mxu0
    %v1242 = vadd.f32 %v1109, %v1241
    %v1243 = vpop.f32.mrb[0].mxu0
    %1244 = vmatprep.mubr.f32.mxu0 0.0
    %1245 = vmatmul.mubr.f32.gmra.mrb[0].mxu0 %v232
    %v1246 = vpop.f32.mrb[0].mxu0
    %v1247 = vadd.f32 %v1112, %v1246
    %v1248 = vpop.f32.mrb[0].mxu0
    %1249 = vmatprep.mubr.f32.mxu0 0.0
    %1250 = vmatmul.mubr.f32.gmra.mrb[0].mxu0 %v235
    %v1251 = vpop.f32.mrb[0].mxu0
    %v1252 = vadd.f32 %v1117, %v1251
    %v1253 = vpop.f32.mrb[0].mxu0
    %1254 = vmatprep.mubr.f32.mxu0 0.0
    %1255 = vmatmul.mubr.f32.gmra.mrb[0].mxu0 %v238
    %v1256 = vpop.f32.mrb[0].mxu0
    %v1257 = vadd.f32 %v1120, %v1256
    %v1258 = vpop.f32.mrb[0].mxu0
    %1259 = vmatprep.mubr.f32.mxu0 0.0
    %1260 = vmatmul.mubr.f32.gmra.mrb[0].mxu0 %v241
    %v1261 = vpop.f32.mrb[0].mxu0
    %v1262 = vadd.f32 %v1125, %v1261
    %v1263 = vpop.f32.mrb[0].mxu0
    %1264 = vmatprep.mubr.f32.mxu0 0.0
    %1265 = vmatmul.mubr.f32.gmra.mrb[0].mxu0 %v244
    %v1266 = vpop.f32.mrb[0].mxu0
    %v1267 = vadd.f32 %v1128, %v1266
    %v1268 = vpop.f32.mrb[0].mxu0
    %1269 = vmatprep.mubr.f32.mxu0 0.0
    %1270 = vmatmul.mubr.f32.gmra.mrb[0].mxu0 %v247
    %v1271 = vpop.f32.mrb[0].mxu0
    %v1272 = vadd.f32 %v1133, %v1271
    %v1273 = vpop.f32.mrb[0].mxu0
    %1274 = vmatprep.mubr.f32.mxu0 0.0
    %1275 = vmatmul.mubr.f32.gmra.mrb[0].mxu0 %v250
    %v1276 = vpop.f32.mrb[0].mxu0
    %v1277 = vadd.f32 %v1136, %v1276
    %v1278 = vpop.f32.mrb[0].mxu0
    %1279 = vmatprep.mubr.f32.mxu0 0.0
    %1280 = vmatmul.mubr.f32.gmra.mrb[0].mxu0 %v253
    %v1281 = vpop.f32.mrb[0].mxu0
    %v1282 = vadd.f32 %v1141, %v1281
    %v1283 = vpop.f32.mrb[0].mxu0
    %1284 = vmatprep.mubr.f32.mxu0 0.0
    %1285 = vmatmul.mubr.f32.gmra.mrb[0].mxu0 %v256
    %v1286 = vpop.f32.mrb[0].mxu0
    %v1287 = vadd.f32 %v1144, %v1286
    %v1288 = vpop.f32.mrb[0].mxu0
    %1289 = vmatprep.mubr.f32.mxu0 0.0
    %1290 = vmatmul.mubr.f32.gmra.mrb[0].mxu0 %v259
    %v1291 = vpop.f32.mrb[0].mxu0
    %v1292 = vadd.f32 %v1149, %v1291
    %v1293 = vpop.f32.mrb[0].mxu0
    %1294 = vmatprep.mubr.f32.mxu0 0.0
    %1295 = vmatmul.mubr.f32.gmra.mrb[0].mxu0 %v262
    %v1296 = vpop.f32.mrb[0].mxu0
    %v1297 = vadd.f32 %v1152, %v1296
    %v1298 = vpop.f32.mrb[0].mxu0
    %1299 = vdwg.mxu0
    %v1300 = vtanh.pop %v1222
    %v1301 = vtanh.pop %v1227
    %v1302 = vtanh.pop %v1232
    %v1303 = vtanh.pop %v1237
    %v1304 = vtanh.pop %v1242
    %v1305 = vtanh.pop %v1247
    %v1306 = vtanh.pop %v1252
    %v1307 = vtanh.pop %v1257
    %v1308 = vtanh.pop %v1262
    %v1309 = vtanh.pop %v1267
    %v1310 = vtanh.pop %v1272
    %v1311 = vtanh.pop %v1277
    %v1312 = vtanh.pop %v1282
    %v1313 = vtanh.pop %v1287
    %v1314 = vtanh.pop %v1292
    %v1315 = vtanh.pop %v1297
    %vm1316 = vcmp.gt.s32.totalorder %v27, 3
    %v1317 = vsel %vm1316, 1, 0
    %v1318 = vlaneseq
    %v1319 = vshrl.u32 %v1318, 7
    %v1320 = vsub.s32 0, %v1319
    %v1321 = vrot.slane %v1317, %v1320
    %vm1322 = vcmp.eq.s32.totalorder %v1321, 1
    %v1323 = vsel %vm1322, %v1300, %v1026
    %v1324 = vsel %vm1322, %v1301, %v1027
    %v1325 = vsel %vm1322, %v1302, %v1028
    %v1326 = vsel %vm1322, %v1303, %v1029
    %v1327 = vsel %vm1322, %v1304, %v1030
    %v1328 = vsel %vm1322, %v1305, %v1031
    %v1329 = vsel %vm1322, %v1306, %v1032
    %v1330 = vsel %vm1322, %v1307, %v1033
    %v1331 = vsel %vm1322, %v1308, %v1034
    %v1332 = vsel %vm1322, %v1309, %v1035
    %v1333 = vsel %vm1322, %v1310, %v1036
    %v1334 = vsel %vm1322, %v1311, %v1037
    %v1335 = vsel %vm1322, %v1312, %v1038
    %v1336 = vsel %vm1322, %v1313, %v1039
    %v1337 = vsel %vm1322, %v1314, %v1040
    %v1338 = vsel %vm1322, %v1315, %v1041
    %v1339 = vld [vmem:[%s0 + $0x4] sm:$0x1]
    %v1340 = vlaneseq
    %v1341 = vshrl.u32 %v1340, 7
    %v1342 = vsub.s32 0, %v1341
    %v1343 = vrot.slane %v1339, %v1342
    %vm1344 = vcmp.eq.s32.totalorder %v30, %v1343
    %v1345 = vsel %vm1344, 1, 0
    %v1346 = vcvt.s32.f32 %v1345
    %v1347 = vpack.c.bf16 %v1324, %v1323
    %v1348 = vpack.c.bf16 %v1326, %v1325
    %v1349 = vpack.c.bf16 %v1328, %v1327
    %v1350 = vpack.c.bf16 %v1330, %v1329
    %v1351 = vpack.c.bf16 %v1332, %v1331
    %v1352 = vpack.c.bf16 %v1334, %v1333
    %v1353 = vpack.c.bf16 %v1336, %v1335
    %v1354 = vpack.c.bf16 %v1338, %v1337
    %1355 = vmatprep.subr.bf16.mxu0 0
    %1356 = vmatpush1.bf16.msra.mxu0 %v1347
    %1357 = vmatprep.subr.bf16.mxu0 0
    %1358 = vmatpush1.bf16.msra.mxu0 %v1348
    %1359 = vmatprep.subr.bf16.mxu0 0
    %1360 = vmatpush1.bf16.msra.mxu0 %v1349
    %1361 = vmatprep.subr.bf16.mxu0 0
    %1362 = vmatpush1.bf16.msra.mxu0 %v1350
    %1363 = vmatprep.subr.bf16.mxu0 0
    %1364 = vmatpush1.bf16.msra.mxu0 %v1351
    %1365 = vmatprep.subr.bf16.mxu0 0
    %1366 = vmatpush1.bf16.msra.mxu0 %v1352
    %1367 = vmatprep.subr.bf16.mxu0 0
    %1368 = vmatpush1.bf16.msra.mxu0 %v1353
    %1369 = vmatprep.subr.bf16.mxu0 0
    %1370 = vmatpush1.bf16.msra.mxu0 %v1354
    %1371 = vmatprep.subr.bf16.mxu0 0
    %1372 = vmatpush1.bf16.msra.mxu0 0
    %1373 = vmatprep.subr.bf16.mxu0 0
    %1374 = vmatpush1.bf16.msra.mxu0 0
    %1375 = vmatprep.subr.bf16.mxu0 0
    %1376 = vmatpush1.bf16.msra.mxu0 0
    %1377 = vmatprep.subr.bf16.mxu0 0
    %1378 = vmatpush1.bf16.msra.mxu0 0
    %1379 = vmatprep.subr.bf16.mxu0 0
    %1380 = vmatpush1.bf16.msra.mxu0 0
    %1381 = vmatprep.subr.bf16.mxu0 0
    %1382 = vmatpush1.bf16.msra.mxu0 0
    %1383 = vmatprep.subr.bf16.mxu0 0
    %1384 = vmatpush1.bf16.msra.mxu0 0
    %1385 = vmatprep.subr.bf16.mxu0 0
    %1386 = vmatpush1.bf16.msra.mxu0 0
    %1387 = vmatprep.mubr.bf16.mxu0 0
    %1388 = vmatmul.mubr.bf16.gmra.mrb[0].mxu0 %v102
    %v1389 = vpop.f32.mrb[0].mxu0
    %v1390 = vadd.f32 0.0, %v1389
    %v1391 = vpop.f32.mrb[0].mxu0
    %v1392 = vpop.f32.mrb[0].mxu0
    %v1393 = vadd.f32 0.0, %v1392
    %v1394 = vpop.f32.mrb[0].mxu0
    %1395 = vmatprep.mubr.bf16.mxu0 0
    %1396 = vmatmul.mubr.bf16.gmra.mrb[0].mxu0 %v103
    %v1397 = vpop.f32.mrb[0].mxu0
    %v1398 = vadd.f32 0.0, %v1397
    %v1399 = vpop.f32.mrb[0].mxu0
    %v1400 = vpop.f32.mrb[0].mxu0
    %v1401 = vadd.f32 0.0, %v1400
    %v1402 = vpop.f32.mrb[0].mxu0
    %1403 = vmatprep.mubr.bf16.mxu0 0
    %1404 = vmatmul.mubr.bf16.gmra.mrb[0].mxu0 %v104
    %v1405 = vpop.f32.mrb[0].mxu0
    %v1406 = vadd.f32 0.0, %v1405
    %v1407 = vpop.f32.mrb[0].mxu0
    %v1408 = vpop.f32.mrb[0].mxu0
    %v1409 = vadd.f32 0.0, %v1408
    %v1410 = vpop.f32.mrb[0].mxu0
    %1411 = vmatprep.mubr.bf16.mxu0 0
    %1412 = vmatmul.mubr.bf16.gmra.mrb[0].mxu0 %v105
    %v1413 = vpop.f32.mrb[0].mxu0
    %v1414 = vadd.f32 0.0, %v1413
    %v1415 = vpop.f32.mrb[0].mxu0
    %v1416 = vpop.f32.mrb[0].mxu0
    %v1417 = vadd.f32 0.0, %v1416
    %v1418 = vpop.f32.mrb[0].mxu0
    %1419 = vmatprep.mubr.bf16.mxu0 0
    %1420 = vmatmul.mubr.bf16.gmra.mrb[0].mxu0 %v106
    %v1421 = vpop.f32.mrb[0].mxu0
    %v1422 = vadd.f32 0.0, %v1421
    %v1423 = vpop.f32.mrb[0].mxu0
    %v1424 = vpop.f32.mrb[0].mxu0
    %v1425 = vadd.f32 0.0, %v1424
    %v1426 = vpop.f32.mrb[0].mxu0
    %1427 = vmatprep.mubr.bf16.mxu0 0
    %1428 = vmatmul.mubr.bf16.gmra.mrb[0].mxu0 %v107
    %v1429 = vpop.f32.mrb[0].mxu0
    %v1430 = vadd.f32 0.0, %v1429
    %v1431 = vpop.f32.mrb[0].mxu0
    %v1432 = vpop.f32.mrb[0].mxu0
    %v1433 = vadd.f32 0.0, %v1432
    %v1434 = vpop.f32.mrb[0].mxu0
    %1435 = vmatprep.mubr.bf16.mxu0 0
    %1436 = vmatmul.mubr.bf16.gmra.mrb[0].mxu0 %v108
    %v1437 = vpop.f32.mrb[0].mxu0
    %v1438 = vadd.f32 0.0, %v1437
    %v1439 = vpop.f32.mrb[0].mxu0
    %v1440 = vpop.f32.mrb[0].mxu0
    %v1441 = vadd.f32 0.0, %v1440
    %v1442 = vpop.f32.mrb[0].mxu0
    %1443 = vmatprep.mubr.bf16.mxu0 0
    %1444 = vmatmul.mubr.bf16.gmra.mrb[0].mxu0 %v109
    %v1445 = vpop.f32.mrb[0].mxu0
    %v1446 = vadd.f32 0.0, %v1445
    %v1447 = vpop.f32.mrb[0].mxu0
    %v1448 = vpop.f32.mrb[0].mxu0
    %v1449 = vadd.f32 0.0, %v1448
    %v1450 = vpop.f32.mrb[0].mxu0
    %1451 = vdwg.mxu0
    %1452 = vmatprep.subr.mxu0 0.0
    %1453 = vmatpush1.msra.mxu0 %v1346
    %1454 = vmatprep.subr.mxu0 0.0
    %1455 = vmatpush1.msra.mxu0 0.0
    %1456 = vmatprep.subr.mxu0 0.0
    %1457 = vmatpush1.msra.mxu0 0.0
    %1458 = vmatprep.subr.mxu0 0.0
    %1459 = vmatpush1.msra.mxu0 0.0
    %1460 = vmatprep.subr.mxu0 0.0
    %1461 = vmatpush1.msra.mxu0 0.0
    %1462 = vmatprep.subr.mxu0 0.0
    %1463 = vmatpush1.msra.mxu0 0.0
    %1464 = vmatprep.subr.mxu0 0.0
    %1465 = vmatpush1.msra.mxu0 0.0
    %1466 = vmatprep.subr.mxu0 0.0
    %1467 = vmatpush1.msra.mxu0 0.0
    %1468 = vmatprep.subr.mxu0 0.0
    %1469 = vmatpush1.msra.mxu0 0.0
    %1470 = vmatprep.subr.mxu0 0.0
    %1471 = vmatpush1.msra.mxu0 0.0
    %1472 = vmatprep.subr.mxu0 0.0
    %1473 = vmatpush1.msra.mxu0 0.0
    %1474 = vmatprep.subr.mxu0 0.0
    %1475 = vmatpush1.msra.mxu0 0.0
    %1476 = vmatprep.subr.mxu0 0.0
    %1477 = vmatpush1.msra.mxu0 0.0
    %1478 = vmatprep.subr.mxu0 0.0
    %1479 = vmatpush1.msra.mxu0 0.0
    %1480 = vmatprep.subr.mxu0 0.0
    %1481 = vmatpush1.msra.mxu0 0.0
    %1482 = vmatprep.subr.mxu0 0.0
    %1483 = vmatpush1.msra.mxu0 0.0
    %1484 = vmatprep.subr.mxu0 0.0
    %1485 = vmatpush1.msra.mxu0 0.0
    %1486 = vmatprep.subr.mxu0 0.0
    %1487 = vmatpush1.msra.mxu0 0.0
    %1488 = vmatprep.subr.mxu0 0.0
    %1489 = vmatpush1.msra.mxu0 0.0
    %1490 = vmatprep.subr.mxu0 0.0
    %1491 = vmatpush1.msra.mxu0 0.0
    %1492 = vmatprep.subr.mxu0 0.0
    %1493 = vmatpush1.msra.mxu0 0.0
    %1494 = vmatprep.subr.mxu0 0.0
    %1495 = vmatpush1.msra.mxu0 0.0
    %1496 = vmatprep.subr.mxu0 0.0
    %1497 = vmatpush1.msra.mxu0 0.0
    %1498 = vmatprep.subr.mxu0 0.0
    %1499 = vmatpush1.msra.mxu0 0.0
    %1500 = vmatprep.subr.mxu0 0.0
    %1501 = vmatpush1.msra.mxu0 0.0
    %1502 = vmatprep.subr.mxu0 0.0
    %1503 = vmatpush1.msra.mxu0 0.0
    %1504 = vmatprep.subr.mxu0 0.0
    %1505 = vmatpush1.msra.mxu0 0.0
    %1506 = vmatprep.subr.mxu0 0.0
    %1507 = vmatpush1.msra.mxu0 0.0
    %1508 = vmatprep.subr.mxu0 0.0
    %1509 = vmatpush1.msra.mxu0 0.0
    %1510 = vmatprep.subr.mxu0 0.0
    %1511 = vmatpush1.msra.mxu0 0.0
    %1512 = vmatprep.subr.mxu0 0.0
    %1513 = vmatpush1.msra.mxu0 0.0
    %1514 = vmatprep.subr.mxu0 0.0
    %1515 = vmatpush1.msra.mxu0 0.0
    %1516 = vmatprep.mubr.f32.mxu0 0.0
    %1517 = vmatmul.mubr.f32.gmra.mrb[0].mxu0 %v217
    %v1518 = vpop.f32.mrb[0].mxu0
    %v1519 = vadd.f32 %v1390, %v1518
    %v1520 = vpop.f32.mrb[0].mxu0
    %1521 = vmatprep.mubr.f32.mxu0 0.0
    %1522 = vmatmul.mubr.f32.gmra.mrb[0].mxu0 %v220
    %v1523 = vpop.f32.mrb[0].mxu0
    %v1524 = vadd.f32 %v1393, %v1523
    %v1525 = vpop.f32.mrb[0].mxu0
    %1526 = vmatprep.mubr.f32.mxu0 0.0
    %1527 = vmatmul.mubr.f32.gmra.mrb[0].mxu0 %v223
    %v1528 = vpop.f32.mrb[0].mxu0
    %v1529 = vadd.f32 %v1398, %v1528
    %v1530 = vpop.f32.mrb[0].mxu0
    %1531 = vmatprep.mubr.f32.mxu0 0.0
    %1532 = vmatmul.mubr.f32.gmra.mrb[0].mxu0 %v226
    %v1533 = vpop.f32.mrb[0].mxu0
    %v1534 = vadd.f32 %v1401, %v1533
    %v1535 = vpop.f32.mrb[0].mxu0
    %1536 = vmatprep.mubr.f32.mxu0 0.0
    %1537 = vmatmul.mubr.f32.gmra.mrb[0].mxu0 %v229
    %v1538 = vpop.f32.mrb[0].mxu0
    %v1539 = vadd.f32 %v1406, %v1538
    %v1540 = vpop.f32.mrb[0].mxu0
    %1541 = vmatprep.mubr.f32.mxu0 0.0
    %1542 = vmatmul.mubr.f32.gmra.mrb[0].mxu0 %v232
    %v1543 = vpop.f32.mrb[0].mxu0
    %v1544 = vadd.f32 %v1409, %v1543
    %v1545 = vpop.f32.mrb[0].mxu0
    %1546 = vmatprep.mubr.f32.mxu0 0.0
    %1547 = vmatmul.mubr.f32.gmra.mrb[0].mxu0 %v235
    %v1548 = vpop.f32.mrb[0].mxu0
    %v1549 = vadd.f32 %v1414, %v1548
    %v1550 = vpop.f32.mrb[0].mxu0
    %1551 = vmatprep.mubr.f32.mxu0 0.0
    %1552 = vmatmul.mubr.f32.gmra.mrb[0].mxu0 %v238
    %v1553 = vpop.f32.mrb[0].mxu0
    %v1554 = vadd.f32 %v1417, %v1553
    %v1555 = vpop.f32.mrb[0].mxu0
    %1556 = vmatprep.mubr.f32.mxu0 0.0
    %1557 = vmatmul.mubr.f32.gmra.mrb[0].mxu0 %v241
    %v1558 = vpop.f32.mrb[0].mxu0
    %v1559 = vadd.f32 %v1422, %v1558
    %v1560 = vpop.f32.mrb[0].mxu0
    %1561 = vmatprep.mubr.f32.mxu0 0.0
    %1562 = vmatmul.mubr.f32.gmra.mrb[0].mxu0 %v244
    %v1563 = vpop.f32.mrb[0].mxu0
    %v1564 = vadd.f32 %v1425, %v1563
    %v1565 = vpop.f32.mrb[0].mxu0
    %1566 = vmatprep.mubr.f32.mxu0 0.0
    %1567 = vmatmul.mubr.f32.gmra.mrb[0].mxu0 %v247
    %v1568 = vpop.f32.mrb[0].mxu0
    %v1569 = vadd.f32 %v1430, %v1568
    %v1570 = vpop.f32.mrb[0].mxu0
    %1571 = vmatprep.mubr.f32.mxu0 0.0
    %1572 = vmatmul.mubr.f32.gmra.mrb[0].mxu0 %v250
    %v1573 = vpop.f32.mrb[0].mxu0
    %v1574 = vadd.f32 %v1433, %v1573
    %v1575 = vpop.f32.mrb[0].mxu0
    %1576 = vmatprep.mubr.f32.mxu0 0.0
    %1577 = vmatmul.mubr.f32.gmra.mrb[0].mxu0 %v253
    %v1578 = vpop.f32.mrb[0].mxu0
    %v1579 = vadd.f32 %v1438, %v1578
    %v1580 = vpop.f32.mrb[0].mxu0
    %1581 = vmatprep.mubr.f32.mxu0 0.0
    %1582 = vmatmul.mubr.f32.gmra.mrb[0].mxu0 %v256
    %v1583 = vpop.f32.mrb[0].mxu0
    %v1584 = vadd.f32 %v1441, %v1583
    %v1585 = vpop.f32.mrb[0].mxu0
    %1586 = vmatprep.mubr.f32.mxu0 0.0
    %1587 = vmatmul.mubr.f32.gmra.mrb[0].mxu0 %v259
    %v1588 = vpop.f32.mrb[0].mxu0
    %v1589 = vadd.f32 %v1446, %v1588
    %v1590 = vpop.f32.mrb[0].mxu0
    %1591 = vmatprep.mubr.f32.mxu0 0.0
    %1592 = vmatmul.mubr.f32.gmra.mrb[0].mxu0 %v262
    %v1593 = vpop.f32.mrb[0].mxu0
    %v1594 = vadd.f32 %v1449, %v1593
    %v1595 = vpop.f32.mrb[0].mxu0
    %1596 = vdwg.mxu0
    %v1597 = vtanh.pop %v1519
    %v1598 = vtanh.pop %v1524
    %v1599 = vtanh.pop %v1529
    %v1600 = vtanh.pop %v1534
    %v1601 = vtanh.pop %v1539
    %v1602 = vtanh.pop %v1544
    %v1603 = vtanh.pop %v1549
    %v1604 = vtanh.pop %v1554
    %v1605 = vtanh.pop %v1559
    %v1606 = vtanh.pop %v1564
    %v1607 = vtanh.pop %v1569
    %v1608 = vtanh.pop %v1574
    %v1609 = vtanh.pop %v1579
    %v1610 = vtanh.pop %v1584
    %v1611 = vtanh.pop %v1589
    %v1612 = vtanh.pop %v1594
    %vm1613 = vcmp.gt.s32.totalorder %v27, 4
    %v1614 = vsel %vm1613, 1, 0
    %v1615 = vlaneseq
    %v1616 = vshrl.u32 %v1615, 7
    %v1617 = vsub.s32 0, %v1616
    %v1618 = vrot.slane %v1614, %v1617
    %vm1619 = vcmp.eq.s32.totalorder %v1618, 1
    %v1620 = vsel %vm1619, %v1597, %v1323
    %v1621 = vsel %vm1619, %v1598, %v1324
    %v1622 = vsel %vm1619, %v1599, %v1325
    %v1623 = vsel %vm1619, %v1600, %v1326
    %v1624 = vsel %vm1619, %v1601, %v1327
    %v1625 = vsel %vm1619, %v1602, %v1328
    %v1626 = vsel %vm1619, %v1603, %v1329
    %v1627 = vsel %vm1619, %v1604, %v1330
    %v1628 = vsel %vm1619, %v1605, %v1331
    %v1629 = vsel %vm1619, %v1606, %v1332
    %v1630 = vsel %vm1619, %v1607, %v1333
    %v1631 = vsel %vm1619, %v1608, %v1334
    %v1632 = vsel %vm1619, %v1609, %v1335
    %v1633 = vsel %vm1619, %v1610, %v1336
    %v1634 = vsel %vm1619, %v1611, %v1337
    %v1635 = vsel %vm1619, %v1612, %v1338
    %v1636 = vld [vmem:[%s0 + $0x5] sm:$0x1]
    %v1637 = vlaneseq
    %v1638 = vshrl.u32 %v1637, 7
    %v1639 = vsub.s32 0, %v1638
    %v1640 = vrot.slane %v1636, %v1639
    %vm1641 = vcmp.eq.s32.totalorder %v30, %v1640
    %v1642 = vsel %vm1641, 1, 0
    %v1643 = vcvt.s32.f32 %v1642
    %v1644 = vpack.c.bf16 %v1621, %v1620
    %v1645 = vpack.c.bf16 %v1623, %v1622
    %v1646 = vpack.c.bf16 %v1625, %v1624
    %v1647 = vpack.c.bf16 %v1627, %v1626
    %v1648 = vpack.c.bf16 %v1629, %v1628
    %v1649 = vpack.c.bf16 %v1631, %v1630
    %v1650 = vpack.c.bf16 %v1633, %v1632
    %v1651 = vpack.c.bf16 %v1635, %v1634
    %1652 = vmatprep.subr.bf16.mxu0 0
    %1653 = vmatpush1.bf16.msra.mxu0 %v1644
    %1654 = vmatprep.subr.bf16.mxu0 0
    %1655 = vmatpush1.bf16.msra.mxu0 %v1645
    %1656 = vmatprep.subr.bf16.mxu0 0
    %1657 = vmatpush1.bf16.msra.mxu0 %v1646
    %1658 = vmatprep.subr.bf16.mxu0 0
    %1659 = vmatpush1.bf16.msra.mxu0 %v1647
    %1660 = vmatprep.subr.bf16.mxu0 0
    %1661 = vmatpush1.bf16.msra.mxu0 %v1648
    %1662 = vmatprep.subr.bf16.mxu0 0
    %1663 = vmatpush1.bf16.msra.mxu0 %v1649
    %1664 = vmatprep.subr.bf16.mxu0 0
    %1665 = vmatpush1.bf16.msra.mxu0 %v1650
    %1666 = vmatprep.subr.bf16.mxu0 0
    %1667 = vmatpush1.bf16.msra.mxu0 %v1651
    %1668 = vmatprep.subr.bf16.mxu0 0
    %1669 = vmatpush1.bf16.msra.mxu0 0
    %1670 = vmatprep.subr.bf16.mxu0 0
    %1671 = vmatpush1.bf16.msra.mxu0 0
    %1672 = vmatprep.subr.bf16.mxu0 0
    %1673 = vmatpush1.bf16.msra.mxu0 0
    %1674 = vmatprep.subr.bf16.mxu0 0
    %1675 = vmatpush1.bf16.msra.mxu0 0
    %1676 = vmatprep.subr.bf16.mxu0 0
    %1677 = vmatpush1.bf16.msra.mxu0 0
    %1678 = vmatprep.subr.bf16.mxu0 0
    %1679 = vmatpush1.bf16.msra.mxu0 0
    %1680 = vmatprep.subr.bf16.mxu0 0
    %1681 = vmatpush1.bf16.msra.mxu0 0
    %1682 = vmatprep.subr.bf16.mxu0 0
    %1683 = vmatpush1.bf16.msra.mxu0 0
    %1684 = vmatprep.mubr.bf16.mxu0 0
    %1685 = vmatmul.mubr.bf16.gmra.mrb[0].mxu0 %v102
    %v1686 = vpop.f32.mrb[0].mxu0
    %v1687 = vadd.f32 0.0, %v1686
    %v1688 = vpop.f32.mrb[0].mxu0
    %v1689 = vpop.f32.mrb[0].mxu0
    %v1690 = vadd.f32 0.0, %v1689
    %v1691 = vpop.f32.mrb[0].mxu0
    %1692 = vmatprep.mubr.bf16.mxu0 0
    %1693 = vmatmul.mubr.bf16.gmra.mrb[0].mxu0 %v103
    %v1694 = vpop.f32.mrb[0].mxu0
    %v1695 = vadd.f32 0.0, %v1694
    %v1696 = vpop.f32.mrb[0].mxu0
    %v1697 = vpop.f32.mrb[0].mxu0
    %v1698 = vadd.f32 0.0, %v1697
    %v1699 = vpop.f32.mrb[0].mxu0
    %1700 = vmatprep.mubr.bf16.mxu0 0
    %1701 = vmatmul.mubr.bf16.gmra.mrb[0].mxu0 %v104
    %v1702 = vpop.f32.mrb[0].mxu0
    %v1703 = vadd.f32 0.0, %v1702
    %v1704 = vpop.f32.mrb[0].mxu0
    %v1705 = vpop.f32.mrb[0].mxu0
    %v1706 = vadd.f32 0.0, %v1705
    %v1707 = vpop.f32.mrb[0].mxu0
    %1708 = vmatprep.mubr.bf16.mxu0 0
    %1709 = vmatmul.mubr.bf16.gmra.mrb[0].mxu0 %v105
    %v1710 = vpop.f32.mrb[0].mxu0
    %v1711 = vadd.f32 0.0, %v1710
    %v1712 = vpop.f32.mrb[0].mxu0
    %v1713 = vpop.f32.mrb[0].mxu0
    %v1714 = vadd.f32 0.0, %v1713
    %v1715 = vpop.f32.mrb[0].mxu0
    %1716 = vmatprep.mubr.bf16.mxu0 0
    %1717 = vmatmul.mubr.bf16.gmra.mrb[0].mxu0 %v106
    %v1718 = vpop.f32.mrb[0].mxu0
    %v1719 = vadd.f32 0.0, %v1718
    %v1720 = vpop.f32.mrb[0].mxu0
    %v1721 = vpop.f32.mrb[0].mxu0
    %v1722 = vadd.f32 0.0, %v1721
    %v1723 = vpop.f32.mrb[0].mxu0
    %1724 = vmatprep.mubr.bf16.mxu0 0
    %1725 = vmatmul.mubr.bf16.gmra.mrb[0].mxu0 %v107
    %v1726 = vpop.f32.mrb[0].mxu0
    %v1727 = vadd.f32 0.0, %v1726
    %v1728 = vpop.f32.mrb[0].mxu0
    %v1729 = vpop.f32.mrb[0].mxu0
    %v1730 = vadd.f32 0.0, %v1729
    %v1731 = vpop.f32.mrb[0].mxu0
    %1732 = vmatprep.mubr.bf16.mxu0 0
    %1733 = vmatmul.mubr.bf16.gmra.mrb[0].mxu0 %v108
    %v1734 = vpop.f32.mrb[0].mxu0
    %v1735 = vadd.f32 0.0, %v1734
    %v1736 = vpop.f32.mrb[0].mxu0
    %v1737 = vpop.f32.mrb[0].mxu0
    %v1738 = vadd.f32 0.0, %v1737
    %v1739 = vpop.f32.mrb[0].mxu0
    %1740 = vmatprep.mubr.bf16.mxu0 0
    %1741 = vmatmul.mubr.bf16.gmra.mrb[0].mxu0 %v109
    %v1742 = vpop.f32.mrb[0].mxu0
    %v1743 = vadd.f32 0.0, %v1742
    %v1744 = vpop.f32.mrb[0].mxu0
    %v1745 = vpop.f32.mrb[0].mxu0
    %v1746 = vadd.f32 0.0, %v1745
    %v1747 = vpop.f32.mrb[0].mxu0
    %1748 = vdwg.mxu0
    %1749 = vmatprep.subr.mxu0 0.0
    %1750 = vmatpush1.msra.mxu0 %v1643
    %1751 = vmatprep.subr.mxu0 0.0
    %1752 = vmatpush1.msra.mxu0 0.0
    %1753 = vmatprep.subr.mxu0 0.0
    %1754 = vmatpush1.msra.mxu0 0.0
    %1755 = vmatprep.subr.mxu0 0.0
    %1756 = vmatpush1.msra.mxu0 0.0
    %1757 = vmatprep.subr.mxu0 0.0
    %1758 = vmatpush1.msra.mxu0 0.0
    %1759 = vmatprep.subr.mxu0 0.0
    %1760 = vmatpush1.msra.mxu0 0.0
    %1761 = vmatprep.subr.mxu0 0.0
    %1762 = vmatpush1.msra.mxu0 0.0
    %1763 = vmatprep.subr.mxu0 0.0
    %1764 = vmatpush1.msra.mxu0 0.0
    %1765 = vmatprep.subr.mxu0 0.0
    %1766 = vmatpush1.msra.mxu0 0.0
    %1767 = vmatprep.subr.mxu0 0.0
    %1768 = vmatpush1.msra.mxu0 0.0
    %1769 = vmatprep.subr.mxu0 0.0
    %1770 = vmatpush1.msra.mxu0 0.0
    %1771 = vmatprep.subr.mxu0 0.0
    %1772 = vmatpush1.msra.mxu0 0.0
    %1773 = vmatprep.subr.mxu0 0.0
    %1774 = vmatpush1.msra.mxu0 0.0
    %1775 = vmatprep.subr.mxu0 0.0
    %1776 = vmatpush1.msra.mxu0 0.0
    %1777 = vmatprep.subr.mxu0 0.0
    %1778 = vmatpush1.msra.mxu0 0.0
    %1779 = vmatprep.subr.mxu0 0.0
    %1780 = vmatpush1.msra.mxu0 0.0
    %1781 = vmatprep.subr.mxu0 0.0
    %1782 = vmatpush1.msra.mxu0 0.0
    %1783 = vmatprep.subr.mxu0 0.0
    %1784 = vmatpush1.msra.mxu0 0.0
    %1785 = vmatprep.subr.mxu0 0.0
    %1786 = vmatpush1.msra.mxu0 0.0
    %1787 = vmatprep.subr.mxu0 0.0
    %1788 = vmatpush1.msra.mxu0 0.0
    %1789 = vmatprep.subr.mxu0 0.0
    %1790 = vmatpush1.msra.mxu0 0.0
    %1791 = vmatprep.subr.mxu0 0.0
    %1792 = vmatpush1.msra.mxu0 0.0
    %1793 = vmatprep.subr.mxu0 0.0
    %1794 = vmatpush1.msra.mxu0 0.0
    %1795 = vmatprep.subr.mxu0 0.0
    %1796 = vmatpush1.msra.mxu0 0.0
    %1797 = vmatprep.subr.mxu0 0.0
    %1798 = vmatpush1.msra.mxu0 0.0
    %1799 = vmatprep.subr.mxu0 0.0
    %1800 = vmatpush1.msra.mxu0 0.0
    %1801 = vmatprep.subr.mxu0 0.0
    %1802 = vmatpush1.msra.mxu0 0.0
    %1803 = vmatprep.subr.mxu0 0.0
    %1804 = vmatpush1.msra.mxu0 0.0
    %1805 = vmatprep.subr.mxu0 0.0
    %1806 = vmatpush1.msra.mxu0 0.0
    %1807 = vmatprep.subr.mxu0 0.0
    %1808 = vmatpush1.msra.mxu0 0.0
    %1809 = vmatprep.subr.mxu0 0.0
    %1810 = vmatpush1.msra.mxu0 0.0
    %1811 = vmatprep.subr.mxu0 0.0
    %1812 = vmatpush1.msra.mxu0 0.0
    %1813 = vmatprep.mubr.f32.mxu0 0.0
    %1814 = vmatmul.mubr.f32.gmra.mrb[0].mxu0 %v217
    %v1815 = vpop.f32.mrb[0].mxu0
    %v1816 = vadd.f32 %v1687, %v1815
    %v1817 = vpop.f32.mrb[0].mxu0
    %1818 = vmatprep.mubr.f32.mxu0 0.0
    %1819 = vmatmul.mubr.f32.gmra.mrb[0].mxu0 %v220
    %v1820 = vpop.f32.mrb[0].mxu0
    %v1821 = vadd.f32 %v1690, %v1820
    %v1822 = vpop.f32.mrb[0].mxu0
    %1823 = vmatprep.mubr.f32.mxu0 0.0
    %1824 = vmatmul.mubr.f32.gmra.mrb[0].mxu0 %v223
    %v1825 = vpop.f32.mrb[0].mxu0
    %v1826 = vadd.f32 %v1695, %v1825
    %v1827 = vpop.f32.mrb[0].mxu0
    %1828 = vmatprep.mubr.f32.mxu0 0.0
    %1829 = vmatmul.mubr.f32.gmra.mrb[0].mxu0 %v226
    %v1830 = vpop.f32.mrb[0].mxu0
    %v1831 = vadd.f32 %v1698, %v1830
    %v1832 = vpop.f32.mrb[0].mxu0
    %1833 = vmatprep.mubr.f32.mxu0 0.0
    %1834 = vmatmul.mubr.f32.gmra.mrb[0].mxu0 %v229
    %v1835 = vpop.f32.mrb[0].mxu0
    %v1836 = vadd.f32 %v1703, %v1835
    %v1837 = vpop.f32.mrb[0].mxu0
    %1838 = vmatprep.mubr.f32.mxu0 0.0
    %1839 = vmatmul.mubr.f32.gmra.mrb[0].mxu0 %v232
    %v1840 = vpop.f32.mrb[0].mxu0
    %v1841 = vadd.f32 %v1706, %v1840
    %v1842 = vpop.f32.mrb[0].mxu0
    %1843 = vmatprep.mubr.f32.mxu0 0.0
    %1844 = vmatmul.mubr.f32.gmra.mrb[0].mxu0 %v235
    %v1845 = vpop.f32.mrb[0].mxu0
    %v1846 = vadd.f32 %v1711, %v1845
    %v1847 = vpop.f32.mrb[0].mxu0
    %1848 = vmatprep.mubr.f32.mxu0 0.0
    %1849 = vmatmul.mubr.f32.gmra.mrb[0].mxu0 %v238
    %v1850 = vpop.f32.mrb[0].mxu0
    %v1851 = vadd.f32 %v1714, %v1850
    %v1852 = vpop.f32.mrb[0].mxu0
    %1853 = vmatprep.mubr.f32.mxu0 0.0
    %1854 = vmatmul.mubr.f32.gmra.mrb[0].mxu0 %v241
    %v1855 = vpop.f32.mrb[0].mxu0
    %v1856 = vadd.f32 %v1719, %v1855
    %v1857 = vpop.f32.mrb[0].mxu0
    %1858 = vmatprep.mubr.f32.mxu0 0.0
    %1859 = vmatmul.mubr.f32.gmra.mrb[0].mxu0 %v244
    %v1860 = vpop.f32.mrb[0].mxu0
    %v1861 = vadd.f32 %v1722, %v1860
    %v1862 = vpop.f32.mrb[0].mxu0
    %1863 = vmatprep.mubr.f32.mxu0 0.0
    %1864 = vmatmul.mubr.f32.gmra.mrb[0].mxu0 %v247
    %v1865 = vpop.f32.mrb[0].mxu0
    %v1866 = vadd.f32 %v1727, %v1865
    %v1867 = vpop.f32.mrb[0].mxu0
    %1868 = vmatprep.mubr.f32.mxu0 0.0
    %1869 = vmatmul.mubr.f32.gmra.mrb[0].mxu0 %v250
    %v1870 = vpop.f32.mrb[0].mxu0
    %v1871 = vadd.f32 %v1730, %v1870
    %v1872 = vpop.f32.mrb[0].mxu0
    %1873 = vmatprep.mubr.f32.mxu0 0.0
    %1874 = vmatmul.mubr.f32.gmra.mrb[0].mxu0 %v253
    %v1875 = vpop.f32.mrb[0].mxu0
    %v1876 = vadd.f32 %v1735, %v1875
    %v1877 = vpop.f32.mrb[0].mxu0
    %1878 = vmatprep.mubr.f32.mxu0 0.0
    %1879 = vmatmul.mubr.f32.gmra.mrb[0].mxu0 %v256
    %v1880 = vpop.f32.mrb[0].mxu0
    %v1881 = vadd.f32 %v1738, %v1880
    %v1882 = vpop.f32.mrb[0].mxu0
    %1883 = vmatprep.mubr.f32.mxu0 0.0
    %1884 = vmatmul.mubr.f32.gmra.mrb[0].mxu0 %v259
    %v1885 = vpop.f32.mrb[0].mxu0
    %v1886 = vadd.f32 %v1743, %v1885
    %v1887 = vpop.f32.mrb[0].mxu0
    %1888 = vmatprep.mubr.f32.mxu0 0.0
    %1889 = vmatmul.mubr.f32.gmra.mrb[0].mxu0 %v262
    %v1890 = vpop.f32.mrb[0].mxu0
    %v1891 = vadd.f32 %v1746, %v1890
    %v1892 = vpop.f32.mrb[0].mxu0
    %1893 = vdwg.mxu0
    %v1894 = vtanh.pop %v1816
    %v1895 = vtanh.pop %v1821
    %v1896 = vtanh.pop %v1826
    %v1897 = vtanh.pop %v1831
    %v1898 = vtanh.pop %v1836
    %v1899 = vtanh.pop %v1841
    %v1900 = vtanh.pop %v1846
    %v1901 = vtanh.pop %v1851
    %v1902 = vtanh.pop %v1856
    %v1903 = vtanh.pop %v1861
    %v1904 = vtanh.pop %v1866
    %v1905 = vtanh.pop %v1871
    %v1906 = vtanh.pop %v1876
    %v1907 = vtanh.pop %v1881
    %v1908 = vtanh.pop %v1886
    %v1909 = vtanh.pop %v1891
    %vm1910 = vcmp.gt.s32.totalorder %v27, 5
    %v1911 = vsel %vm1910, 1, 0
    %v1912 = vlaneseq
    %v1913 = vshrl.u32 %v1912, 7
    %v1914 = vsub.s32 0, %v1913
    %v1915 = vrot.slane %v1911, %v1914
    %vm1916 = vcmp.eq.s32.totalorder %v1915, 1
    %v1917 = vsel %vm1916, %v1894, %v1620
    %v1918 = vsel %vm1916, %v1895, %v1621
    %v1919 = vsel %vm1916, %v1896, %v1622
    %v1920 = vsel %vm1916, %v1897, %v1623
    %v1921 = vsel %vm1916, %v1898, %v1624
    %v1922 = vsel %vm1916, %v1899, %v1625
    %v1923 = vsel %vm1916, %v1900, %v1626
    %v1924 = vsel %vm1916, %v1901, %v1627
    %v1925 = vsel %vm1916, %v1902, %v1628
    %v1926 = vsel %vm1916, %v1903, %v1629
    %v1927 = vsel %vm1916, %v1904, %v1630
    %v1928 = vsel %vm1916, %v1905, %v1631
    %v1929 = vsel %vm1916, %v1906, %v1632
    %v1930 = vsel %vm1916, %v1907, %v1633
    %v1931 = vsel %vm1916, %v1908, %v1634
    %v1932 = vsel %vm1916, %v1909, %v1635
    %v1933 = vld [vmem:[%s0 + $0x6] sm:$0x1]
    %v1934 = vlaneseq
    %v1935 = vshrl.u32 %v1934, 7
    %v1936 = vsub.s32 0, %v1935
    %v1937 = vrot.slane %v1933, %v1936
    %vm1938 = vcmp.eq.s32.totalorder %v30, %v1937
    %v1939 = vsel %vm1938, 1, 0
    %v1940 = vcvt.s32.f32 %v1939
    %v1941 = vpack.c.bf16 %v1918, %v1917
    %v1942 = vpack.c.bf16 %v1920, %v1919
    %v1943 = vpack.c.bf16 %v1922, %v1921
    %v1944 = vpack.c.bf16 %v1924, %v1923
    %v1945 = vpack.c.bf16 %v1926, %v1925
    %v1946 = vpack.c.bf16 %v1928, %v1927
    %v1947 = vpack.c.bf16 %v1930, %v1929
    %v1948 = vpack.c.bf16 %v1932, %v1931
    %1949 = vmatprep.subr.bf16.mxu0 0
    %1950 = vmatpush1.bf16.msra.mxu0 %v1941
    %1951 = vmatprep.subr.bf16.mxu0 0
    %1952 = vmatpush1.bf16.msra.mxu0 %v1942
    %1953 = vmatprep.subr.bf16.mxu0 0
    %1954 = vmatpush1.bf16.msra.mxu0 %v1943
    %1955 = vmatprep.subr.bf16.mxu0 0
    %1956 = vmatpush1.bf16.msra.mxu0 %v1944
    %1957 = vmatprep.subr.bf16.mxu0 0
    %1958 = vmatpush1.bf16.msra.mxu0 %v1945
    %1959 = vmatprep.subr.bf16.mxu0 0
    %1960 = vmatpush1.bf16.msra.mxu0 %v1946
    %1961 = vmatprep.subr.bf16.mxu0 0
    %1962 = vmatpush1.bf16.msra.mxu0 %v1947
    %1963 = vmatprep.subr.bf16.mxu0 0
    %1964 = vmatpush1.bf16.msra.mxu0 %v1948
    %1965 = vmatprep.subr.bf16.mxu0 0
    %1966 = vmatpush1.bf16.msra.mxu0 0
    %1967 = vmatprep.subr.bf16.mxu0 0
    %1968 = vmatpush1.bf16.msra.mxu0 0
    %1969 = vmatprep.subr.bf16.mxu0 0
    %1970 = vmatpush1.bf16.msra.mxu0 0
    %1971 = vmatprep.subr.bf16.mxu0 0
    %1972 = vmatpush1.bf16.msra.mxu0 0
    %1973 = vmatprep.subr.bf16.mxu0 0
    %1974 = vmatpush1.bf16.msra.mxu0 0
    %1975 = vmatprep.subr.bf16.mxu0 0
    %1976 = vmatpush1.bf16.msra.mxu0 0
    %1977 = vmatprep.subr.bf16.mxu0 0
    %1978 = vmatpush1.bf16.msra.mxu0 0
    %1979 = vmatprep.subr.bf16.mxu0 0
    %1980 = vmatpush1.bf16.msra.mxu0 0
    %1981 = vmatprep.mubr.bf16.mxu0 0
    %1982 = vmatmul.mubr.bf16.gmra.mrb[0].mxu0 %v102
    %v1983 = vpop.f32.mrb[0].mxu0
    %v1984 = vadd.f32 0.0, %v1983
    %v1985 = vpop.f32.mrb[0].mxu0
    %v1986 = vpop.f32.mrb[0].mxu0
    %v1987 = vadd.f32 0.0, %v1986
    %v1988 = vpop.f32.mrb[0].mxu0
    %1989 = vmatprep.mubr.bf16.mxu0 0
    %1990 = vmatmul.mubr.bf16.gmra.mrb[0].mxu0 %v103
    %v1991 = vpop.f32.mrb[0].mxu0
    %v1992 = vadd.f32 0.0, %v1991
    %v1993 = vpop.f32.mrb[0].mxu0
    %v1994 = vpop.f32.mrb[0].mxu0
    %v1995 = vadd.f32 0.0, %v1994
    %v1996 = vpop.f32.mrb[0].mxu0
    %1997 = vmatprep.mubr.bf16.mxu0 0
    %1998 = vmatmul.mubr.bf16.gmra.mrb[0].mxu0 %v104
    %v1999 = vpop.f32.mrb[0].mxu0
    %v2000 = vadd.f32 0.0, %v1999
    %v2001 = vpop.f32.mrb[0].mxu0
    %v2002 = vpop.f32.mrb[0].mxu0
    %v2003 = vadd.f32 0.0, %v2002
    %v2004 = vpop.f32.mrb[0].mxu0
    %2005 = vmatprep.mubr.bf16.mxu0 0
    %2006 = vmatmul.mubr.bf16.gmra.mrb[0].mxu0 %v105
    %v2007 = vpop.f32.mrb[0].mxu0
    %v2008 = vadd.f32 0.0, %v2007
    %v2009 = vpop.f32.mrb[0].mxu0
    %v2010 = vpop.f32.mrb[0].mxu0
    %v2011 = vadd.f32 0.0, %v2010
    %v2012 = vpop.f32.mrb[0].mxu0
    %2013 = vmatprep.mubr.bf16.mxu0 0
    %2014 = vmatmul.mubr.bf16.gmra.mrb[0].mxu0 %v106
    %v2015 = vpop.f32.mrb[0].mxu0
    %v2016 = vadd.f32 0.0, %v2015
    %v2017 = vpop.f32.mrb[0].mxu0
    %v2018 = vpop.f32.mrb[0].mxu0
    %v2019 = vadd.f32 0.0, %v2018
    %v2020 = vpop.f32.mrb[0].mxu0
    %2021 = vmatprep.mubr.bf16.mxu0 0
    %2022 = vmatmul.mubr.bf16.gmra.mrb[0].mxu0 %v107
    %v2023 = vpop.f32.mrb[0].mxu0
    %v2024 = vadd.f32 0.0, %v2023
    %v2025 = vpop.f32.mrb[0].mxu0
    %v2026 = vpop.f32.mrb[0].mxu0
    %v2027 = vadd.f32 0.0, %v2026
    %v2028 = vpop.f32.mrb[0].mxu0
    %2029 = vmatprep.mubr.bf16.mxu0 0
    %2030 = vmatmul.mubr.bf16.gmra.mrb[0].mxu0 %v108
    %v2031 = vpop.f32.mrb[0].mxu0
    %v2032 = vadd.f32 0.0, %v2031
    %v2033 = vpop.f32.mrb[0].mxu0
    %v2034 = vpop.f32.mrb[0].mxu0
    %v2035 = vadd.f32 0.0, %v2034
    %v2036 = vpop.f32.mrb[0].mxu0
    %2037 = vmatprep.mubr.bf16.mxu0 0
    %2038 = vmatmul.mubr.bf16.gmra.mrb[0].mxu0 %v109
    %v2039 = vpop.f32.mrb[0].mxu0
    %v2040 = vadd.f32 0.0, %v2039
    %v2041 = vpop.f32.mrb[0].mxu0
    %v2042 = vpop.f32.mrb[0].mxu0
    %v2043 = vadd.f32 0.0, %v2042
    %v2044 = vpop.f32.mrb[0].mxu0
    %2045 = vdwg.mxu0
    %2046 = vmatprep.subr.mxu0 0.0
    %2047 = vmatpush1.msra.mxu0 %v1940
    %2048 = vmatprep.subr.mxu0 0.0
    %2049 = vmatpush1.msra.mxu0 0.0
    %2050 = vmatprep.subr.mxu0 0.0
    %2051 = vmatpush1.msra.mxu0 0.0
    %2052 = vmatprep.subr.mxu0 0.0
    %2053 = vmatpush1.msra.mxu0 0.0
    %2054 = vmatprep.subr.mxu0 0.0
    %2055 = vmatpush1.msra.mxu0 0.0
    %2056 = vmatprep.subr.mxu0 0.0
    %2057 = vmatpush1.msra.mxu0 0.0
    %2058 = vmatprep.subr.mxu0 0.0
    %2059 = vmatpush1.msra.mxu0 0.0
    %2060 = vmatprep.subr.mxu0 0.0
    %2061 = vmatpush1.msra.mxu0 0.0
    %2062 = vmatprep.subr.mxu0 0.0
    %2063 = vmatpush1.msra.mxu0 0.0
    %2064 = vmatprep.subr.mxu0 0.0
    %2065 = vmatpush1.msra.mxu0 0.0
    %2066 = vmatprep.subr.mxu0 0.0
    %2067 = vmatpush1.msra.mxu0 0.0
    %2068 = vmatprep.subr.mxu0 0.0
    %2069 = vmatpush1.msra.mxu0 0.0
    %2070 = vmatprep.subr.mxu0 0.0
    %2071 = vmatpush1.msra.mxu0 0.0
    %2072 = vmatprep.subr.mxu0 0.0
    %2073 = vmatpush1.msra.mxu0 0.0
    %2074 = vmatprep.subr.mxu0 0.0
    %2075 = vmatpush1.msra.mxu0 0.0
    %2076 = vmatprep.subr.mxu0 0.0
    %2077 = vmatpush1.msra.mxu0 0.0
    %2078 = vmatprep.subr.mxu0 0.0
    %2079 = vmatpush1.msra.mxu0 0.0
    %2080 = vmatprep.subr.mxu0 0.0
    %2081 = vmatpush1.msra.mxu0 0.0
    %2082 = vmatprep.subr.mxu0 0.0
    %2083 = vmatpush1.msra.mxu0 0.0
    %2084 = vmatprep.subr.mxu0 0.0
    %2085 = vmatpush1.msra.mxu0 0.0
    %2086 = vmatprep.subr.mxu0 0.0
    %2087 = vmatpush1.msra.mxu0 0.0
    %2088 = vmatprep.subr.mxu0 0.0
    %2089 = vmatpush1.msra.mxu0 0.0
    %2090 = vmatprep.subr.mxu0 0.0
    %2091 = vmatpush1.msra.mxu0 0.0
    %2092 = vmatprep.subr.mxu0 0.0
    %2093 = vmatpush1.msra.mxu0 0.0
    %2094 = vmatprep.subr.mxu0 0.0
    %2095 = vmatpush1.msra.mxu0 0.0
    %2096 = vmatprep.subr.mxu0 0.0
    %2097 = vmatpush1.msra.mxu0 0.0
    %2098 = vmatprep.subr.mxu0 0.0
    %2099 = vmatpush1.msra.mxu0 0.0
    %2100 = vmatprep.subr.mxu0 0.0
    %2101 = vmatpush1.msra.mxu0 0.0
    %2102 = vmatprep.subr.mxu0 0.0
    %2103 = vmatpush1.msra.mxu0 0.0
    %2104 = vmatprep.subr.mxu0 0.0
    %2105 = vmatpush1.msra.mxu0 0.0
    %2106 = vmatprep.subr.mxu0 0.0
    %2107 = vmatpush1.msra.mxu0 0.0
    %2108 = vmatprep.subr.mxu0 0.0
    %2109 = vmatpush1.msra.mxu0 0.0
    %2110 = vmatprep.mubr.f32.mxu0 0.0
    %2111 = vmatmul.mubr.f32.gmra.mrb[0].mxu0 %v217
    %v2112 = vpop.f32.mrb[0].mxu0
    %v2113 = vadd.f32 %v1984, %v2112
    %v2114 = vpop.f32.mrb[0].mxu0
    %2115 = vmatprep.mubr.f32.mxu0 0.0
    %2116 = vmatmul.mubr.f32.gmra.mrb[0].mxu0 %v220
    %v2117 = vpop.f32.mrb[0].mxu0
    %v2118 = vadd.f32 %v1987, %v2117
    %v2119 = vpop.f32.mrb[0].mxu0
    %2120 = vmatprep.mubr.f32.mxu0 0.0
    %2121 = vmatmul.mubr.f32.gmra.mrb[0].mxu0 %v223
    %v2122 = vpop.f32.mrb[0].mxu0
    %v2123 = vadd.f32 %v1992, %v2122
    %v2124 = vpop.f32.mrb[0].mxu0
    %2125 = vmatprep.mubr.f32.mxu0 0.0
    %2126 = vmatmul.mubr.f32.gmra.mrb[0].mxu0 %v226
    %v2127 = vpop.f32.mrb[0].mxu0
    %v2128 = vadd.f32 %v1995, %v2127
    %v2129 = vpop.f32.mrb[0].mxu0
    %2130 = vmatprep.mubr.f32.mxu0 0.0
    %2131 = vmatmul.mubr.f32.gmra.mrb[0].mxu0 %v229
    %v2132 = vpop.f32.mrb[0].mxu0
    %v2133 = vadd.f32 %v2000, %v2132
    %v2134 = vpop.f32.mrb[0].mxu0
    %2135 = vmatprep.mubr.f32.mxu0 0.0
    %2136 = vmatmul.mubr.f32.gmra.mrb[0].mxu0 %v232
    %v2137 = vpop.f32.mrb[0].mxu0
    %v2138 = vadd.f32 %v2003, %v2137
    %v2139 = vpop.f32.mrb[0].mxu0
    %2140 = vmatprep.mubr.f32.mxu0 0.0
    %2141 = vmatmul.mubr.f32.gmra.mrb[0].mxu0 %v235
    %v2142 = vpop.f32.mrb[0].mxu0
    %v2143 = vadd.f32 %v2008, %v2142
    %v2144 = vpop.f32.mrb[0].mxu0
    %2145 = vmatprep.mubr.f32.mxu0 0.0
    %2146 = vmatmul.mubr.f32.gmra.mrb[0].mxu0 %v238
    %v2147 = vpop.f32.mrb[0].mxu0
    %v2148 = vadd.f32 %v2011, %v2147
    %v2149 = vpop.f32.mrb[0].mxu0
    %2150 = vmatprep.mubr.f32.mxu0 0.0
    %2151 = vmatmul.mubr.f32.gmra.mrb[0].mxu0 %v241
    %v2152 = vpop.f32.mrb[0].mxu0
    %v2153 = vadd.f32 %v2016, %v2152
    %v2154 = vpop.f32.mrb[0].mxu0
    %2155 = vmatprep.mubr.f32.mxu0 0.0
    %2156 = vmatmul.mubr.f32.gmra.mrb[0].mxu0 %v244
    %v2157 = vpop.f32.mrb[0].mxu0
    %v2158 = vadd.f32 %v2019, %v2157
    %v2159 = vpop.f32.mrb[0].mxu0
    %2160 = vmatprep.mubr.f32.mxu0 0.0
    %2161 = vmatmul.mubr.f32.gmra.mrb[0].mxu0 %v247
    %v2162 = vpop.f32.mrb[0].mxu0
    %v2163 = vadd.f32 %v2024, %v2162
    %v2164 = vpop.f32.mrb[0].mxu0
    %2165 = vmatprep.mubr.f32.mxu0 0.0
    %2166 = vmatmul.mubr.f32.gmra.mrb[0].mxu0 %v250
    %v2167 = vpop.f32.mrb[0].mxu0
    %v2168 = vadd.f32 %v2027, %v2167
    %v2169 = vpop.f32.mrb[0].mxu0
    %2170 = vmatprep.mubr.f32.mxu0 0.0
    %2171 = vmatmul.mubr.f32.gmra.mrb[0].mxu0 %v253
    %v2172 = vpop.f32.mrb[0].mxu0
    %v2173 = vadd.f32 %v2032, %v2172
    %v2174 = vpop.f32.mrb[0].mxu0
    %2175 = vmatprep.mubr.f32.mxu0 0.0
    %2176 = vmatmul.mubr.f32.gmra.mrb[0].mxu0 %v256
    %v2177 = vpop.f32.mrb[0].mxu0
    %v2178 = vadd.f32 %v2035, %v2177
    %v2179 = vpop.f32.mrb[0].mxu0
    %2180 = vmatprep.mubr.f32.mxu0 0.0
    %2181 = vmatmul.mubr.f32.gmra.mrb[0].mxu0 %v259
    %v2182 = vpop.f32.mrb[0].mxu0
    %v2183 = vadd.f32 %v2040, %v2182
    %v2184 = vpop.f32.mrb[0].mxu0
    %2185 = vmatprep.mubr.f32.mxu0 0.0
    %2186 = vmatmul.mubr.f32.gmra.mrb[0].mxu0 %v262
    %v2187 = vpop.f32.mrb[0].mxu0
    %v2188 = vadd.f32 %v2043, %v2187
    %v2189 = vpop.f32.mrb[0].mxu0
    %2190 = vdwg.mxu0
    %v2191 = vtanh.pop %v2113
    %v2192 = vtanh.pop %v2118
    %v2193 = vtanh.pop %v2123
    %v2194 = vtanh.pop %v2128
    %v2195 = vtanh.pop %v2133
    %v2196 = vtanh.pop %v2138
    %v2197 = vtanh.pop %v2143
    %v2198 = vtanh.pop %v2148
    %v2199 = vtanh.pop %v2153
    %v2200 = vtanh.pop %v2158
    %v2201 = vtanh.pop %v2163
    %v2202 = vtanh.pop %v2168
    %v2203 = vtanh.pop %v2173
    %v2204 = vtanh.pop %v2178
    %v2205 = vtanh.pop %v2183
    %v2206 = vtanh.pop %v2188
    %vm2207 = vcmp.gt.s32.totalorder %v27, 6
    %v2208 = vsel %vm2207, 1, 0
    %v2209 = vlaneseq
    %v2210 = vshrl.u32 %v2209, 7
    %v2211 = vsub.s32 0, %v2210
    %v2212 = vrot.slane %v2208, %v2211
    %vm2213 = vcmp.eq.s32.totalorder %v2212, 1
    %v2214 = vsel %vm2213, %v2191, %v1917
    %v2215 = vsel %vm2213, %v2192, %v1918
    %v2216 = vsel %vm2213, %v2193, %v1919
    %v2217 = vsel %vm2213, %v2194, %v1920
    %v2218 = vsel %vm2213, %v2195, %v1921
    %v2219 = vsel %vm2213, %v2196, %v1922
    %v2220 = vsel %vm2213, %v2197, %v1923
    %v2221 = vsel %vm2213, %v2198, %v1924
    %v2222 = vsel %vm2213, %v2199, %v1925
    %v2223 = vsel %vm2213, %v2200, %v1926
    %v2224 = vsel %vm2213, %v2201, %v1927
    %v2225 = vsel %vm2213, %v2202, %v1928
    %v2226 = vsel %vm2213, %v2203, %v1929
    %v2227 = vsel %vm2213, %v2204, %v1930
    %v2228 = vsel %vm2213, %v2205, %v1931
    %v2229 = vsel %vm2213, %v2206, %v1932
    %v2230 = vld [vmem:[%s0 + $0x7] sm:$0x1]
    %v2231 = vlaneseq
    %v2232 = vshrl.u32 %v2231, 7
    %v2233 = vsub.s32 0, %v2232
    %v2234 = vrot.slane %v2230, %v2233
    %vm2235 = vcmp.eq.s32.totalorder %v30, %v2234
    %v2236 = vsel %vm2235, 1, 0
    %v2237 = vcvt.s32.f32 %v2236
    %v2238 = vpack.c.bf16 %v2215, %v2214
    %v2239 = vpack.c.bf16 %v2217, %v2216
    %v2240 = vpack.c.bf16 %v2219, %v2218
    %v2241 = vpack.c.bf16 %v2221, %v2220
    %v2242 = vpack.c.bf16 %v2223, %v2222
    %v2243 = vpack.c.bf16 %v2225, %v2224
    %v2244 = vpack.c.bf16 %v2227, %v2226
    %v2245 = vpack.c.bf16 %v2229, %v2228
    %2246 = vmatprep.subr.bf16.mxu0 0
    %2247 = vmatpush1.bf16.msra.mxu0 %v2238
    %2248 = vmatprep.subr.bf16.mxu0 0
    %2249 = vmatpush1.bf16.msra.mxu0 %v2239
    %2250 = vmatprep.subr.bf16.mxu0 0
    %2251 = vmatpush1.bf16.msra.mxu0 %v2240
    %2252 = vmatprep.subr.bf16.mxu0 0
    %2253 = vmatpush1.bf16.msra.mxu0 %v2241
    %2254 = vmatprep.subr.bf16.mxu0 0
    %2255 = vmatpush1.bf16.msra.mxu0 %v2242
    %2256 = vmatprep.subr.bf16.mxu0 0
    %2257 = vmatpush1.bf16.msra.mxu0 %v2243
    %2258 = vmatprep.subr.bf16.mxu0 0
    %2259 = vmatpush1.bf16.msra.mxu0 %v2244
    %2260 = vmatprep.subr.bf16.mxu0 0
    %2261 = vmatpush1.bf16.msra.mxu0 %v2245
    %2262 = vmatprep.subr.bf16.mxu0 0
    %2263 = vmatpush1.bf16.msra.mxu0 0
    %2264 = vmatprep.subr.bf16.mxu0 0
    %2265 = vmatpush1.bf16.msra.mxu0 0
    %2266 = vmatprep.subr.bf16.mxu0 0
    %2267 = vmatpush1.bf16.msra.mxu0 0
    %2268 = vmatprep.subr.bf16.mxu0 0
    %2269 = vmatpush1.bf16.msra.mxu0 0
    %2270 = vmatprep.subr.bf16.mxu0 0
    %2271 = vmatpush1.bf16.msra.mxu0 0
    %2272 = vmatprep.subr.bf16.mxu0 0
    %2273 = vmatpush1.bf16.msra.mxu0 0
    %2274 = vmatprep.subr.bf16.mxu0 0
    %2275 = vmatpush1.bf16.msra.mxu0 0
    %2276 = vmatprep.subr.bf16.mxu0 0
    %2277 = vmatpush1.bf16.msra.mxu0 0
    %2278 = vmatprep.mubr.bf16.mxu0 0
    %2279 = vmatmul.mubr.bf16.gmra.mrb[0].mxu0 %v102
    %v2280 = vpop.f32.mrb[0].mxu0
    %v2281 = vadd.f32 0.0, %v2280
    %v2282 = vpop.f32.mrb[0].mxu0
    %v2283 = vpop.f32.mrb[0].mxu0
    %v2284 = vadd.f32 0.0, %v2283
    %v2285 = vpop.f32.mrb[0].mxu0
    %2286 = vmatprep.mubr.bf16.mxu0 0
    %2287 = vmatmul.mubr.bf16.gmra.mrb[0].mxu0 %v103
    %v2288 = vpop.f32.mrb[0].mxu0
    %v2289 = vadd.f32 0.0, %v2288
    %v2290 = vpop.f32.mrb[0].mxu0
    %v2291 = vpop.f32.mrb[0].mxu0
    %v2292 = vadd.f32 0.0, %v2291
    %v2293 = vpop.f32.mrb[0].mxu0
    %2294 = vmatprep.mubr.bf16.mxu0 0
    %2295 = vmatmul.mubr.bf16.gmra.mrb[0].mxu0 %v104
    %v2296 = vpop.f32.mrb[0].mxu0
    %v2297 = vadd.f32 0.0, %v2296
    %v2298 = vpop.f32.mrb[0].mxu0
    %v2299 = vpop.f32.mrb[0].mxu0
    %v2300 = vadd.f32 0.0, %v2299
    %v2301 = vpop.f32.mrb[0].mxu0
    %2302 = vmatprep.mubr.bf16.mxu0 0
    %2303 = vmatmul.mubr.bf16.gmra.mrb[0].mxu0 %v105
    %v2304 = vpop.f32.mrb[0].mxu0
    %v2305 = vadd.f32 0.0, %v2304
    %v2306 = vpop.f32.mrb[0].mxu0
    %v2307 = vpop.f32.mrb[0].mxu0
    %v2308 = vadd.f32 0.0, %v2307
    %v2309 = vpop.f32.mrb[0].mxu0
    %2310 = vmatprep.mubr.bf16.mxu0 0
    %2311 = vmatmul.mubr.bf16.gmra.mrb[0].mxu0 %v106
    %v2312 = vpop.f32.mrb[0].mxu0
    %v2313 = vadd.f32 0.0, %v2312
    %v2314 = vpop.f32.mrb[0].mxu0
    %v2315 = vpop.f32.mrb[0].mxu0
    %v2316 = vadd.f32 0.0, %v2315
    %v2317 = vpop.f32.mrb[0].mxu0
    %2318 = vmatprep.mubr.bf16.mxu0 0
    %2319 = vmatmul.mubr.bf16.gmra.mrb[0].mxu0 %v107
    %v2320 = vpop.f32.mrb[0].mxu0
    %v2321 = vadd.f32 0.0, %v2320
    %v2322 = vpop.f32.mrb[0].mxu0
    %v2323 = vpop.f32.mrb[0].mxu0
    %v2324 = vadd.f32 0.0, %v2323
    %v2325 = vpop.f32.mrb[0].mxu0
    %2326 = vmatprep.mubr.bf16.mxu0 0
    %2327 = vmatmul.mubr.bf16.gmra.mrb[0].mxu0 %v108
    %v2328 = vpop.f32.mrb[0].mxu0
    %v2329 = vadd.f32 0.0, %v2328
    %v2330 = vpop.f32.mrb[0].mxu0
    %v2331 = vpop.f32.mrb[0].mxu0
    %v2332 = vadd.f32 0.0, %v2331
    %v2333 = vpop.f32.mrb[0].mxu0
    %2334 = vmatprep.mubr.bf16.mxu0 0
    %2335 = vmatmul.mubr.bf16.gmra.mrb[0].mxu0 %v109
    %v2336 = vpop.f32.mrb[0].mxu0
    %v2337 = vadd.f32 0.0, %v2336
    %v2338 = vpop.f32.mrb[0].mxu0
    %v2339 = vpop.f32.mrb[0].mxu0
    %v2340 = vadd.f32 0.0, %v2339
    %v2341 = vpop.f32.mrb[0].mxu0
    %2342 = vdwg.mxu0
    %2343 = vmatprep.subr.mxu0 0.0
    %2344 = vmatpush1.msra.mxu0 %v2237
    %2345 = vmatprep.subr.mxu0 0.0
    %2346 = vmatpush1.msra.mxu0 0.0
    %2347 = vmatprep.subr.mxu0 0.0
    %2348 = vmatpush1.msra.mxu0 0.0
    %2349 = vmatprep.subr.mxu0 0.0
    %2350 = vmatpush1.msra.mxu0 0.0
    %2351 = vmatprep.subr.mxu0 0.0
    %2352 = vmatpush1.msra.mxu0 0.0
    %2353 = vmatprep.subr.mxu0 0.0
    %2354 = vmatpush1.msra.mxu0 0.0
    %2355 = vmatprep.subr.mxu0 0.0
    %2356 = vmatpush1.msra.mxu0 0.0
    %2357 = vmatprep.subr.mxu0 0.0
    %2358 = vmatpush1.msra.mxu0 0.0
    %2359 = vmatprep.subr.mxu0 0.0
    %2360 = vmatpush1.msra.mxu0 0.0
    %2361 = vmatprep.subr.mxu0 0.0
    %2362 = vmatpush1.msra.mxu0 0.0
    %2363 = vmatprep.subr.mxu0 0.0
    %2364 = vmatpush1.msra.mxu0 0.0
    %2365 = vmatprep.subr.mxu0 0.0
    %2366 = vmatpush1.msra.mxu0 0.0
    %2367 = vmatprep.subr.mxu0 0.0
    %2368 = vmatpush1.msra.mxu0 0.0
    %2369 = vmatprep.subr.mxu0 0.0
    %2370 = vmatpush1.msra.mxu0 0.0
    %2371 = vmatprep.subr.mxu0 0.0
    %2372 = vmatpush1.msra.mxu0 0.0
    %2373 = vmatprep.subr.mxu0 0.0
    %2374 = vmatpush1.msra.mxu0 0.0
    %2375 = vmatprep.subr.mxu0 0.0
    %2376 = vmatpush1.msra.mxu0 0.0
    %2377 = vmatprep.subr.mxu0 0.0
    %2378 = vmatpush1.msra.mxu0 0.0
    %2379 = vmatprep.subr.mxu0 0.0
    %2380 = vmatpush1.msra.mxu0 0.0
    %2381 = vmatprep.subr.mxu0 0.0
    %2382 = vmatpush1.msra.mxu0 0.0
    %2383 = vmatprep.subr.mxu0 0.0
    %2384 = vmatpush1.msra.mxu0 0.0
    %2385 = vmatprep.subr.mxu0 0.0
    %2386 = vmatpush1.msra.mxu0 0.0
    %2387 = vmatprep.subr.mxu0 0.0
    %2388 = vmatpush1.msra.mxu0 0.0
    %2389 = vmatprep.subr.mxu0 0.0
    %2390 = vmatpush1.msra.mxu0 0.0
    %2391 = vmatprep.subr.mxu0 0.0
    %2392 = vmatpush1.msra.mxu0 0.0
    %2393 = vmatprep.subr.mxu0 0.0
    %2394 = vmatpush1.msra.mxu0 0.0
    %2395 = vmatprep.subr.mxu0 0.0
    %2396 = vmatpush1.msra.mxu0 0.0
    %2397 = vmatprep.subr.mxu0 0.0
    %2398 = vmatpush1.msra.mxu0 0.0
    %2399 = vmatprep.subr.mxu0 0.0
    %2400 = vmatpush1.msra.mxu0 0.0
    %2401 = vmatprep.subr.mxu0 0.0
    %2402 = vmatpush1.msra.mxu0 0.0
    %2403 = vmatprep.subr.mxu0 0.0
    %2404 = vmatpush1.msra.mxu0 0.0
    %2405 = vmatprep.subr.mxu0 0.0
    %2406 = vmatpush1.msra.mxu0 0.0
    %2407 = vmatprep.mubr.f32.mxu0 0.0
    %2408 = vmatmul.mubr.f32.gmra.mrb[0].mxu0 %v217
    %v2409 = vpop.f32.mrb[0].mxu0
    %v2410 = vadd.f32 %v2281, %v2409
    %v2411 = vpop.f32.mrb[0].mxu0
    %2412 = vmatprep.mubr.f32.mxu0 0.0
    %2413 = vmatmul.mubr.f32.gmra.mrb[0].mxu0 %v220
    %v2414 = vpop.f32.mrb[0].mxu0
    %v2415 = vadd.f32 %v2284, %v2414
    %v2416 = vpop.f32.mrb[0].mxu0
    %2417 = vmatprep.mubr.f32.mxu0 0.0
    %2418 = vmatmul.mubr.f32.gmra.mrb[0].mxu0 %v223
    %v2419 = vpop.f32.mrb[0].mxu0
    %v2420 = vadd.f32 %v2289, %v2419
    %v2421 = vpop.f32.mrb[0].mxu0
    %2422 = vmatprep.mubr.f32.mxu0 0.0
    %2423 = vmatmul.mubr.f32.gmra.mrb[0].mxu0 %v226
    %v2424 = vpop.f32.mrb[0].mxu0
    %v2425 = vadd.f32 %v2292, %v2424
    %v2426 = vpop.f32.mrb[0].mxu0
    %2427 = vmatprep.mubr.f32.mxu0 0.0
    %2428 = vmatmul.mubr.f32.gmra.mrb[0].mxu0 %v229
    %v2429 = vpop.f32.mrb[0].mxu0
    %v2430 = vadd.f32 %v2297, %v2429
    %v2431 = vpop.f32.mrb[0].mxu0
    %2432 = vmatprep.mubr.f32.mxu0 0.0
    %2433 = vmatmul.mubr.f32.gmra.mrb[0].mxu0 %v232
    %v2434 = vpop.f32.mrb[0].mxu0
    %v2435 = vadd.f32 %v2300, %v2434
    %v2436 = vpop.f32.mrb[0].mxu0
    %2437 = vmatprep.mubr.f32.mxu0 0.0
    %2438 = vmatmul.mubr.f32.gmra.mrb[0].mxu0 %v235
    %v2439 = vpop.f32.mrb[0].mxu0
    %v2440 = vadd.f32 %v2305, %v2439
    %v2441 = vpop.f32.mrb[0].mxu0
    %2442 = vmatprep.mubr.f32.mxu0 0.0
    %2443 = vmatmul.mubr.f32.gmra.mrb[0].mxu0 %v238
    %v2444 = vpop.f32.mrb[0].mxu0
    %v2445 = vadd.f32 %v2308, %v2444
    %v2446 = vpop.f32.mrb[0].mxu0
    %2447 = vmatprep.mubr.f32.mxu0 0.0
    %2448 = vmatmul.mubr.f32.gmra.mrb[0].mxu0 %v241
    %v2449 = vpop.f32.mrb[0].mxu0
    %v2450 = vadd.f32 %v2313, %v2449
    %v2451 = vpop.f32.mrb[0].mxu0
    %2452 = vmatprep.mubr.f32.mxu0 0.0
    %2453 = vmatmul.mubr.f32.gmra.mrb[0].mxu0 %v244
    %v2454 = vpop.f32.mrb[0].mxu0
    %v2455 = vadd.f32 %v2316, %v2454
    %v2456 = vpop.f32.mrb[0].mxu0
    %2457 = vmatprep.mubr.f32.mxu0 0.0
    %2458 = vmatmul.mubr.f32.gmra.mrb[0].mxu0 %v247
    %v2459 = vpop.f32.mrb[0].mxu0
    %v2460 = vadd.f32 %v2321, %v2459
    %v2461 = vpop.f32.mrb[0].mxu0
    %2462 = vmatprep.mubr.f32.mxu0 0.0
    %2463 = vmatmul.mubr.f32.gmra.mrb[0].mxu0 %v250
    %v2464 = vpop.f32.mrb[0].mxu0
    %v2465 = vadd.f32 %v2324, %v2464
    %v2466 = vpop.f32.mrb[0].mxu0
    %2467 = vmatprep.mubr.f32.mxu0 0.0
    %2468 = vmatmul.mubr.f32.gmra.mrb[0].mxu0 %v253
    %v2469 = vpop.f32.mrb[0].mxu0
    %v2470 = vadd.f32 %v2329, %v2469
    %v2471 = vpop.f32.mrb[0].mxu0
    %2472 = vmatprep.mubr.f32.mxu0 0.0
    %2473 = vmatmul.mubr.f32.gmra.mrb[0].mxu0 %v256
    %v2474 = vpop.f32.mrb[0].mxu0
    %v2475 = vadd.f32 %v2332, %v2474
    %v2476 = vpop.f32.mrb[0].mxu0
    %2477 = vmatprep.mubr.f32.mxu0 0.0
    %2478 = vmatmul.mubr.f32.gmra.mrb[0].mxu0 %v259
    %v2479 = vpop.f32.mrb[0].mxu0
    %v2480 = vadd.f32 %v2337, %v2479
    %v2481 = vpop.f32.mrb[0].mxu0
    %2482 = vmatprep.mubr.f32.mxu0 0.0
    %2483 = vmatmul.mubr.f32.gmra.mrb[0].mxu0 %v262
    %v2484 = vpop.f32.mrb[0].mxu0
    %v2485 = vadd.f32 %v2340, %v2484
    %v2486 = vpop.f32.mrb[0].mxu0
    %2487 = vdwg.mxu0
    %v2488 = vtanh.pop %v2410
    %v2489 = vtanh.pop %v2415
    %v2490 = vtanh.pop %v2420
    %v2491 = vtanh.pop %v2425
    %v2492 = vtanh.pop %v2430
    %v2493 = vtanh.pop %v2435
    %v2494 = vtanh.pop %v2440
    %v2495 = vtanh.pop %v2445
    %v2496 = vtanh.pop %v2450
    %v2497 = vtanh.pop %v2455
    %v2498 = vtanh.pop %v2460
    %v2499 = vtanh.pop %v2465
    %v2500 = vtanh.pop %v2470
    %v2501 = vtanh.pop %v2475
    %v2502 = vtanh.pop %v2480
    %v2503 = vtanh.pop %v2485
    %vm2504 = vcmp.gt.s32.totalorder %v27, 7
    %v2505 = vsel %vm2504, 1, 0
    %v2506 = vlaneseq
    %v2507 = vshrl.u32 %v2506, 7
    %v2508 = vsub.s32 0, %v2507
    %v2509 = vrot.slane %v2505, %v2508
    %vm2510 = vcmp.eq.s32.totalorder %v2509, 1
    %v2511 = vsel %vm2510, %v2488, %v2214
    %v2512 = vsel %vm2510, %v2489, %v2215
    %v2513 = vsel %vm2510, %v2490, %v2216
    %v2514 = vsel %vm2510, %v2491, %v2217
    %v2515 = vsel %vm2510, %v2492, %v2218
    %v2516 = vsel %vm2510, %v2493, %v2219
    %v2517 = vsel %vm2510, %v2494, %v2220
    %v2518 = vsel %vm2510, %v2495, %v2221
    %v2519 = vsel %vm2510, %v2496, %v2222
    %v2520 = vsel %vm2510, %v2497, %v2223
    %v2521 = vsel %vm2510, %v2498, %v2224
    %v2522 = vsel %vm2510, %v2499, %v2225
    %v2523 = vsel %vm2510, %v2500, %v2226
    %v2524 = vsel %vm2510, %v2501, %v2227
    %v2525 = vsel %vm2510, %v2502, %v2228
    %v2526 = vsel %vm2510, %v2503, %v2229
    %v2527 = vld [vmem:[%s4] sm:$0x3]
    %v2528 = vld [vmem:[%s5] sm:$0x3]
    %2530 = vset.pattern.permute.xlu0 0
    %2531 = vperm.xlu0 %2530, %v2528
    %v2532 = vpop.permute.xlu0 %2531
    %2534 = vmatprep.subr.mxu0 0.0
    %2535 = vmatpush1.msra.mxu0 %v2511
    %2536 = vmatprep.subr.mxu0 0.0
    %2537 = vmatpush1.msra.mxu0 %v2512
    %2538 = vmatprep.subr.mxu0 0.0
    %2539 = vmatpush1.msra.mxu0 %v2513
    %2540 = vmatprep.subr.mxu0 0.0
    %2541 = vmatpush1.msra.mxu0 %v2514
    %2542 = vmatprep.subr.mxu0 0.0
    %2543 = vmatpush1.msra.mxu0 %v2515
    %2544 = vmatprep.subr.mxu0 0.0
    %2545 = vmatpush1.msra.mxu0 %v2516
    %2546 = vmatprep.subr.mxu0 0.0
    %2547 = vmatpush1.msra.mxu0 %v2517
    %2548 = vmatprep.subr.mxu0 0.0
    %2549 = vmatpush1.msra.mxu0 %v2518
    %2550 = vmatprep.subr.mxu0 0.0
    %2551 = vmatpush1.msra.mxu0 %v2519
    %2552 = vmatprep.subr.mxu0 0.0
    %2553 = vmatpush1.msra.mxu0 %v2520
    %2554 = vmatprep.subr.mxu0 0.0
    %2555 = vmatpush1.msra.mxu0 %v2521
    %2556 = vmatprep.subr.mxu0 0.0
    %2557 = vmatpush1.msra.mxu0 %v2522
    %2558 = vmatprep.subr.mxu0 0.0
    %2559 = vmatpush1.msra.mxu0 %v2523
    %2560 = vmatprep.subr.mxu0 0.0
    %2561 = vmatpush1.msra.mxu0 %v2524
    %2562 = vmatprep.subr.mxu0 0.0
    %2563 = vmatpush1.msra.mxu0 %v2525
    %2564 = vmatprep.subr.mxu0 0.0
    %2565 = vmatpush1.msra.mxu0 %v2526
    %2566 = vmatprep.subr.mxu0 0.0
    %2567 = vmatpush1.msra.mxu0 0.0
    %2568 = vmatprep.subr.mxu0 0.0
    %2569 = vmatpush1.msra.mxu0 0.0
    %2570 = vmatprep.subr.mxu0 0.0
    %2571 = vmatpush1.msra.mxu0 0.0
    %2572 = vmatprep.subr.mxu0 0.0
    %2573 = vmatpush1.msra.mxu0 0.0
    %2574 = vmatprep.subr.mxu0 0.0
    %2575 = vmatpush1.msra.mxu0 0.0
    %2576 = vmatprep.subr.mxu0 0.0
    %2577 = vmatpush1.msra.mxu0 0.0
    %2578 = vmatprep.subr.mxu0 0.0
    %2579 = vmatpush1.msra.mxu0 0.0
    %2580 = vmatprep.subr.mxu0 0.0
    %2581 = vmatpush1.msra.mxu0 0.0
    %2582 = vmatprep.subr.mxu0 0.0
    %2583 = vmatpush1.msra.mxu0 0.0
    %2584 = vmatprep.subr.mxu0 0.0
    %2585 = vmatpush1.msra.mxu0 0.0
    %2586 = vmatprep.subr.mxu0 0.0
    %2587 = vmatpush1.msra.mxu0 0.0
    %2588 = vmatprep.subr.mxu0 0.0
    %2589 = vmatpush1.msra.mxu0 0.0
    %2590 = vmatprep.subr.mxu0 0.0
    %2591 = vmatpush1.msra.mxu0 0.0
    %2592 = vmatprep.subr.mxu0 0.0
    %2593 = vmatpush1.msra.mxu0 0.0
    %2594 = vmatprep.subr.mxu0 0.0
    %2595 = vmatpush1.msra.mxu0 0.0
    %2596 = vmatprep.subr.mxu0 0.0
    %2597 = vmatpush1.msra.mxu0 0.0
    %2598 = vmatprep.mubr.f32.mxu0 0.0
    %2599 = vmatmul.mubr.f32.gmra.mrb[0].mxu0 %v2527
    %v2600 = vpop.f32.mrb[0].mxu0
    %v2601 = vadd.f32 %v2532, %v2600
    %v2602 = vpop.f32.mrb[0].mxu0
    %2603 = vdwg.mxu0
    %vm2604 = vcmask 9216
    %v2605 = vsel %vm2604, %v2601, -inf
    %v2606 = vrot.slane %v2605, 4
    %v2607 = vmax.f32 %v2605, %v2606
    %v2608 = vrot.slane %v2607, 2
    %v2609 = vmax.f32 %v2607, %v2608
    %v2610 = vrot.slane %v2609, 1
    %v2611 = vmax.f32 %v2609, %v2610
    %v2612 = vsub.f32 %v2601, %v2611
    %v2613 = vmul.f32 %v2612, 1.442695
    %v2614 = vpow.pop %v2613
    %v2615 = vsel %vm2604, %v2614, 0.0
    %v2616 = vrot.slane %v2615, 4
    %v2617 = vadd.f32 %v2615, %v2616
    %v2618 = vrot.slane %v2617, 2
    %v2619 = vadd.f32 %v2617, %v2618
    %v2620 = vrot.slane %v2619, 1
    %v2621 = vadd.f32 %v2619, %v2620
    %v2622 = vrcp.pop %v2621
    %v2623 = vmul.f32 %v2614, %v2622
    %2624 = vst.msk [vmem:[#allocation2] sm:$0x3] %vm2604, %v2623
    %vm2625 = vcmask 15360
    %2626 = vst.msk [vmem:[%s7] sm:$0xff] %vm2625, %v2511
    %2627 = vst.msk [vmem:[%s7 + $0x8] sm:$0xff] %vm2625, %v2512
    %2628 = vst.msk [vmem:[%s7 + $0x10] sm:$0xff] %vm2625, %v2513
    %2629 = vst.msk [vmem:[%s7 + $0x18] sm:$0xff] %vm2625, %v2514
    %2630 = vst.msk [vmem:[%s7 + $0x20] sm:$0xff] %vm2625, %v2515
    %2631 = vst.msk [vmem:[%s7 + $0x28] sm:$0xff] %vm2625, %v2516
    %2632 = vst.msk [vmem:[%s7 + $0x30] sm:$0xff] %vm2625, %v2517
    %2633 = vst.msk [vmem:[%s7 + $0x38] sm:$0xff] %vm2625, %v2518
    %2634 = vst.msk [vmem:[%s7 + $0x40] sm:$0xff] %vm2625, %v2519
    %2635 = vst.msk [vmem:[%s7 + $0x48] sm:$0xff] %vm2625, %v2520
    %2636 = vst.msk [vmem:[%s7 + $0x50] sm:$0xff] %vm2625, %v2521
    %2637 = vst.msk [vmem:[%s7 + $0x58] sm:$0xff] %vm2625, %v2522
    %2638 = vst.msk [vmem:[%s7 + $0x60] sm:$0xff] %vm2625, %v2523
    %2639 = vst.msk [vmem:[%s7 + $0x68] sm:$0xff] %vm2625, %v2524
    %2640 = vst.msk [vmem:[%s7 + $0x70] sm:$0xff] %vm2625, %v2525
    %2641 = vst.msk [vmem:[%s7 + $0x78] sm:$0xff] %vm2625, %v2526
    // Predicated region
    $region26: #{tpu_custom_call.1} parent=1 // pred_check
      _
    $region27: #{tpu_custom_call.1} parent=1 // pred_check_branch
      %2643 = sbr.rel (0) target = $region29
    $region28: #{tpu_custom_call.1} parent=1 // pred_region
      %s2645 = ssub.s32 32, 32
      %2646 = vsyncadd [#allocation3], %s2645
      %s2648 = sshll.u32 [#allocation2], 4
      %s2649 = int_to_ptr.vmem [resolvable:$true] %s2648
      %2651 = dma.vmem_to_hbm [thread:$0]  %s2649, 32, %s6, [#allocation3]
    $region29: #{tpu_custom_call.1} parent=1 // pred_fallthru
      _
    // Predicated region
    $region30: #{tpu_custom_call.1} parent=1 // pred_check
      _
    $region31: #{tpu_custom_call.1} parent=1 // pred_check_branch
      %2653 = sbr.rel (0) target = $region33
    $region32: #{tpu_custom_call.1} parent=1 // pred_region
      _
    $region33: #{tpu_custom_call.1} parent=1 // pred_fallthru
      _
    // Predicated region
    $region34: #{tpu_custom_call.1} parent=1 // pred_check
      _
    $region35: #{tpu_custom_call.1} parent=1 // pred_check_branch
      %2655 = sbr.rel (0) target = $region37
    $region36: #{tpu_custom_call.1} parent=1 // pred_region
      %2656 = dma.done [#allocation3], 32
    $region37: #{tpu_custom_call.1} parent=1 // pred_fallthru
      _
    // Predicated region
    $region38: #{tpu_custom_call.1} parent=1 // pred_check
      _
    $region39: #{tpu_custom_call.1} parent=1 // pred_check_branch
      %2658 = sbr.rel (0) target = $region41
    $region40: #{tpu_custom_call.1} parent=1 // pred_region
      _
    $region41: #{tpu_custom_call.1} parent=1 // pred_fallthru
      _
    %2659 = vsyncpa [#allocation3], 1

</llo_original>
